<compile_context>
chip_gen: v7x
topology: tpu7x:2x2x1
jax: 0.10.0
libtpu: 0.0.40
codegen_flags: <defaults>
</compile_context>

<pallas_src>
import jax
import jax.numpy as jnp
import numpy as np
from jax.experimental import pallas as pl
from jax.experimental.pallas import tpu as pltpu


def _char_lstm_kernel(x_ref, wih0_ref, whh0_ref, b0_ref,
                      wih1_ref, whh1_ref, b1_ref, wfc_ref, bfc_ref,
                      out_ref, hN_ref, cN_ref, xproj_sc, hs_sc):
    T, Bb, E = x_ref.shape
    H = hN_ref.shape[-1]
    G = 4 * H
    Vp = out_ref.shape[-1]
    TB = T * Bb

    # ---- Hoisted loads / broadcasts (JAX does not CSE broadcast_in_dim in loops).
    whh0 = whh0_ref[...]                                     # (H, 4H)
    wih1 = wih1_ref[...]                                     # (H, 4H)
    whh1 = whh1_ref[...]                                     # (H, 4H)
    b1 = jnp.broadcast_to(b1_ref[...], (Bb, G))
    lane = jax.lax.broadcasted_iota(jnp.int32, (Bb, G), 1)
    g_mask = (lane >= 2 * H) & (lane < 3 * H)                # tanh segment [2H, 3H)
    # sigmoid(x) = 0.5*(1 + tanh(x/2)) on i/f/o lanes, plain tanh on g lanes:
    # a = tanh(gates * pre) * pre + off  (pre = post = 0.5 / 1.0, off = 0.5 / 0.0).
    pre = jnp.where(g_mask, 1.0, 0.5).astype(jnp.float32)
    off = jnp.where(g_mask, 0.0, 0.5).astype(jnp.float32)

    # ---- Phase 1: batched layer-0 input projection for the WHOLE sequence
    # (one efficient MXU matmul off the serial critical path), bias folded in.
    x_all = x_ref[...].reshape(TB, E)                        # leading-dim merge, Bb=8
    xproj_sc[...] = (jnp.dot(x_all, wih0_ref[...],
                             preferred_element_type=jnp.float32)
                     + jnp.broadcast_to(b0_ref[...], (TB, G)))

    def gates_to_hc(gates, c):
        a = jnp.tanh(gates * pre) * pre + off                # single full-width tanh
        i = a[:, 0 * H:1 * H]
        f = a[:, 1 * H:2 * H]
        g = a[:, 2 * H:3 * H]
        o = a[:, 3 * H:4 * H]
        c_new = f * c + i * g
        h_new = o * jnp.tanh(c_new)
        return h_new, c_new

    # ---- Phase 2: serial time recurrence (only the h-dependent work remains).
    def step(t, carry):
        h0, c0, h1, c1 = carry
        row = pl.multiple_of(t * Bb, 8)                      # sublane-aligned offset
        g0 = (xproj_sc[pl.ds(row, Bb), :]
              + jnp.dot(h0, whh0, preferred_element_type=jnp.float32))
        h0, c0 = gates_to_hc(g0, c0)
        g1 = (jnp.dot(h0, wih1, preferred_element_type=jnp.float32)
              + jnp.dot(h1, whh1, preferred_element_type=jnp.float32)
              + b1)
        h1, c1 = gates_to_hc(g1, c1)
        hs_sc[pl.ds(row, Bb), :] = h1                        # stage in final FC layout
        return h0, c0, h1, c1

    zeros = jnp.zeros((Bb, H), jnp.float32)
    h0, c0, h1, c1 = jax.lax.fori_loop(
        0, T, step, (zeros, zeros, zeros, zeros), unroll=True)

    # Final (h, c) for both layers, written once.
    hN_ref[0] = h0
    hN_ref[1] = h1
    cN_ref[0] = c0
    cN_ref[1] = c1

    # ---- Phase 3: ONE batched FC over all timesteps; Vp is a 128-multiple so the
    # output store is lane-dense (no masked partial stores).
    logits = (jnp.dot(hs_sc[...], wfc_ref[...], preferred_element_type=jnp.float32)
              + jnp.broadcast_to(bfc_ref[...], (TB, Vp)))
    out_ref[...] = logits.reshape(T, Bb, Vp)


def char_lstm_forward(tokens, params, batch_block=8):
    """tokens: (B, T) int32.  Returns (logits (B,T,V), (h_n, c_n)) like PyTorch."""
    emb = jnp.take(params["embedding"], tokens, axis=0)      # (B, T, E) gather in XLA
    B, T, E = emb.shape
    H = params["whh0"].shape[0]
    V = params["wfc"].shape[1]
    G = 4 * H

    Bb = batch_block
    Bp = ((B + Bb - 1) // Bb) * Bb
    x = jnp.transpose(emb, (1, 0, 2))                        # (T, B, E), features on lanes
    if Bp != B:
        x = jnp.pad(x, ((0, 0), (0, Bp - B), (0, 0)))        # pad batch to 8 sublanes

    # Lane-dense logits: pad FC output dim to a multiple of 128, slice back after.
    Vp = ((V + 127) // 128) * 128
    wfc, bfc = params["wfc"], params["bfc"]
    if Vp != V:
        wfc = jnp.pad(wfc, ((0, 0), (0, Vp - V)))
        bfc = jnp.pad(bfc, ((0, 0), (0, Vp - V)))

    grid_spec = pltpu.PrefetchScalarGridSpec(
        num_scalar_prefetch=0,
        grid=(Bp // Bb,),                                    # batch blocks only
        in_specs=[
            pl.BlockSpec((T, Bb, E), lambda b: (0, b, 0)),   # full sequence per block
            pl.BlockSpec((E, G), lambda b: (0, 0)),          # W_ih layer0 (E, 4H)
            pl.BlockSpec((H, G), lambda b: (0, 0)),          # W_hh layer0 (H, 4H)
            pl.BlockSpec((1, G), lambda b: (0, 0)),          # fused bias layer0
            pl.BlockSpec((H, G), lambda b: (0, 0)),          # W_ih layer1
            pl.BlockSpec((H, G), lambda b: (0, 0)),          # W_hh layer1
            pl.BlockSpec((1, G), lambda b: (0, 0)),          # fused bias layer1
            pl.BlockSpec((H, Vp), lambda b: (0, 0)),         # fc weight (padded lanes)
            pl.BlockSpec((1, Vp), lambda b: (0, 0)),         # fc bias (padded lanes)
        ],
        out_specs=[
            pl.BlockSpec((T, Bb, Vp), lambda b: (0, b, 0)),  # logits (lane-dense)
            pl.BlockSpec((2, Bb, H), lambda b: (0, b, 0)),   # h_n
            pl.BlockSpec((2, Bb, H), lambda b: (0, b, 0)),   # c_n
        ],
        scratch_shapes=[
            pltpu.VMEM((T * Bb, G), jnp.float32),            # x @ W_ih0 + b0, all steps
            pltpu.VMEM((T * Bb, H), jnp.float32),            # staged h1, final-FC layout
        ],
    )

    out_t, h_n, c_n = pl.pallas_call(
        _char_lstm_kernel,
        out_shape=(jax.ShapeDtypeStruct((T, Bp, Vp), jnp.float32),
                   jax.ShapeDtypeStruct((2, Bp, H), jnp.float32),
                   jax.ShapeDtypeStruct((2, Bp, H), jnp.float32)),
        grid_spec=grid_spec,
        compiler_params=pltpu.CompilerParams(
            dimension_semantics=("parallel",)),              # batch blocks over TCs
    )(x, params["wih0"], params["whh0"], params["b0"],
      params["wih1"], params["whh1"], params["b1"], wfc, bfc)

    logits = jnp.transpose(out_t, (1, 0, 2))[:B, :, :V]      # (B, T, V)
    return logits, (h_n[:, :B], c_n[:, :B])


def make_params(key, vocab_size, embed_size, hidden_size):
    """Deterministic synthetic parameters (PyTorch-shaped, then transposed/fused)."""
    ks = jax.random.split(key, 10)
    H, E, V = hidden_size, embed_size, vocab_size
    s = 1.0 / np.sqrt(H)

    def u(k, shape):
        return jax.random.uniform(k, shape, jnp.float32, -s, s)

    # PyTorch-native shapes
    embedding = jax.random.normal(ks[0], (V, E), jnp.float32)
    w_ih0 = u(ks[1], (4 * H, E))
    w_hh0 = u(ks[2], (4 * H, H))
    b_ih0 = u(ks[3], (4 * H,))
    b_hh0 = u(ks[4], (4 * H,))
    w_ih1 = u(ks[5], (4 * H, H))
    w_hh1 = u(ks[6], (4 * H, H))
    b_ih1 = u(ks[7], (4 * H,))
    b_hh1 = u(ks[8], (4 * H,))
    fc_w = u(ks[9], (V, H))
    fc_b = jnp.zeros((V,), jnp.float32)

    # Kernel-friendly: pre-transposed (in_features, 4H), x/h weights kept SEPARATE
    # (layer-0 x-projection is hoisted out of the loop), biases fused & 2-D.
    return {
        "embedding": embedding,
        "wih0": w_ih0.T,                                     # (E, 4H)
        "whh0": w_hh0.T,                                     # (H, 4H)
        "b0": (b_ih0 + b_hh0)[None, :],
        "wih1": w_ih1.T,                                     # (H, 4H)
        "whh1": w_hh1.T,                                     # (H, 4H)
        "b1": (b_ih1 + b_hh1)[None, :],
        "wfc": fc_w.T,                                       # (H, V)
        "bfc": fc_b[None, :],
    }


def reference_forward(tokens, p):
    """Pure-JAX reference matching nn.Embedding + nn.LSTM(2 layers) + nn.Linear."""
    emb = jnp.take(p["embedding"], tokens, axis=0)
    B, T, E = emb.shape
    H = p["whh0"].shape[0]

    def cell(x, h, c, wih, whh, b):
        gates = x @ wih + h @ whh + b
        i = jax.nn.sigmoid(gates[:, :H])
        f = jax.nn.sigmoid(gates[:, H:2 * H])
        g = jnp.tanh(gates[:, 2 * H:3 * H])
        o = jax.nn.sigmoid(gates[:, 3 * H:])
        c = f * c + i * g
        h = o * jnp.tanh(c)
        return h, c

    def step(carry, x_t):
        h0, c0, h1, c1 = carry
        h0, c0 = cell(x_t, h0, c0, p["wih0"], p["whh0"], p["b0"])
        h1, c1 = cell(h0, h1, c1, p["wih1"], p["whh1"], p["b1"])
        out_t = h1 @ p["wfc"] + p["bfc"]
        return (h0, c0, h1, c1), out_t

    init = tuple(jnp.zeros((B, H), jnp.float32) for _ in range(4))
    carry, outs = jax.lax.scan(step, init, jnp.swapaxes(emb, 0, 1))
    out = jnp.swapaxes(outs, 0, 1)
    h_n = jnp.stack([carry[0], carry[2]], axis=0)
    c_n = jnp.stack([carry[1], carry[3]], axis=0)
    return out, (h_n, c_n)


if __name__ == "__main__":
    VOCAB, EMBED, HIDDEN = 32, 32, 32     # small shapes consistent with the module
    B, T = 2, 8

    key = jax.random.PRNGKey(0)
    k_tok, k_par = jax.random.split(key)
    tokens = jax.random.randint(k_tok, (B, T), 0, VOCAB, dtype=jnp.int32)
    params = make_params(k_par, VOCAB, EMBED, HIDDEN)

    out, (h_n, c_n) = char_lstm_forward(tokens, params)
    jax.block_until_ready((out, h_n, c_n))

    ref_out, (ref_h, ref_c) = reference_forward(tokens, params)
    np.testing.assert_allclose(np.asarray(out), np.asarray(ref_out),
                               rtol=1e-4, atol=1e-4)
    np.testing.assert_allclose(np.asarray(h_n), np.asarray(ref_h),
                               rtol=1e-4, atol=1e-4)
    np.testing.assert_allclose(np.asarray(c_n), np.asarray(ref_c),
                               rtol=1e-4, atol=1e-4)

    print("KERNEL_OK")
</pallas_src>

<mosaic_0001>
module attributes {stable_mosaic.version = 11 : i64} {
  func.func @_char_lstm_kernel(%arg0: i32, %arg1: memref<8x8x32xf32, #tpu.memory_space<vmem>>, %arg2: memref<32x128xf32, #tpu.memory_space<vmem>>, %arg3: memref<32x128xf32, #tpu.memory_space<vmem>>, %arg4: memref<1x128xf32, #tpu.memory_space<vmem>>, %arg5: memref<32x128xf32, #tpu.memory_space<vmem>>, %arg6: memref<32x128xf32, #tpu.memory_space<vmem>>, %arg7: memref<1x128xf32, #tpu.memory_space<vmem>>, %arg8: memref<32x128xf32, #tpu.memory_space<vmem>>, %arg9: memref<1x128xf32, #tpu.memory_space<vmem>>, %arg10: memref<8x8x128xf32, #tpu.memory_space<vmem>>, %arg11: memref<2x8x32xf32, #tpu.memory_space<vmem>>, %arg12: memref<2x8x32xf32, #tpu.memory_space<vmem>>, %arg13: memref<64x128xf32, #tpu.memory_space<vmem>>, %arg14: memref<64x32xf32, #tpu.memory_space<vmem>>) attributes {dimension_semantics = [#tpu.dimension_semantics<parallel>], iteration_bounds = array<i64: 1>, scalar_prefetch = 0 : i64, scratch_operands = 2 : i64, tpu.core_type = #tpu.core_type<tc>, window_params = [{transform_indices = @transform_0, window_bounds = array<i64: 8, 8, 32>}, {pipeline_mode = #tpu.pipeline_mode<synchronous>, transform_indices = @transform_1, window_bounds = array<i64: 32, 128>}, {pipeline_mode = #tpu.pipeline_mode<synchronous>, transform_indices = @transform_2, window_bounds = array<i64: 32, 128>}, {pipeline_mode = #tpu.pipeline_mode<synchronous>, transform_indices = @transform_3, window_bounds = array<i64: 1, 128>}, {pipeline_mode = #tpu.pipeline_mode<synchronous>, transform_indices = @transform_4, window_bounds = array<i64: 32, 128>}, {pipeline_mode = #tpu.pipeline_mode<synchronous>, transform_indices = @transform_5, window_bounds = array<i64: 32, 128>}, {pipeline_mode = #tpu.pipeline_mode<synchronous>, transform_indices = @transform_6, window_bounds = array<i64: 1, 128>}, {pipeline_mode = #tpu.pipeline_mode<synchronous>, transform_indices = @transform_7, window_bounds = array<i64: 32, 128>}, {pipeline_mode = #tpu.pipeline_mode<synchronous>, transform_indices = @transform_8, window_bounds = array<i64: 1, 128>}, {transform_indices = @transform_9, window_bounds = array<i64: 8, 8, 128>}, {transform_indices = @transform_10, window_bounds = array<i64: 2, 8, 32>}, {transform_indices = @transform_11, window_bounds = array<i64: 2, 8, 32>}]} {
    %c0 = arith.constant 0 : index
    %c0_0 = arith.constant 0 : index
    %0 = vector.load %arg3[%c0, %c0_0] : memref<32x128xf32, #tpu.memory_space<vmem>>, vector<32x128xf32>
    %c0_1 = arith.constant 0 : index
    %c0_2 = arith.constant 0 : index
    %1 = vector.load %arg5[%c0_1, %c0_2] : memref<32x128xf32, #tpu.memory_space<vmem>>, vector<32x128xf32>
    %c0_3 = arith.constant 0 : index
    %c0_4 = arith.constant 0 : index
    %2 = vector.load %arg6[%c0_3, %c0_4] : memref<32x128xf32, #tpu.memory_space<vmem>>, vector<32x128xf32>
    %c0_5 = arith.constant 0 : index
    %c0_6 = arith.constant 0 : index
    %3 = vector.load %arg7[%c0_5, %c0_6] : memref<1x128xf32, #tpu.memory_space<vmem>>, vector<1x128xf32>
    %4 = vector.shape_cast %3 : vector<1x128xf32> to vector<1x128xf32>
    %5 = vector.broadcast %4 : vector<1x128xf32> to vector<8x128xf32>
    %6 = tpu.iota {dimensions = array<i32: 1>} : vector<8x128xi32>
    %c64_i32 = arith.constant 64 : i32
    %7 = vector.broadcast %c64_i32 : i32 to vector<8x128xi32>
    %8 = arith.cmpi sge, %6, %7 : vector<8x128xi32>
    %c96_i32 = arith.constant 96 : i32
    %9 = vector.broadcast %c96_i32 : i32 to vector<8x128xi32>
    %10 = arith.cmpi slt, %6, %9 : vector<8x128xi32>
    %11 = arith.andi %8, %10 : vector<8x128xi1>
    %cst = arith.constant 1.000000e+00 : f32
    %cst_7 = arith.constant 5.000000e-01 : f32
    %12 = vector.broadcast %cst : f32 to vector<8x128xf32>
    %13 = vector.broadcast %cst_7 : f32 to vector<8x128xf32>
    %14 = arith.select %11, %12, %13 : vector<8x128xi1>, vector<8x128xf32>
    %cst_8 = arith.constant 0.000000e+00 : f32
    %cst_9 = arith.constant 5.000000e-01 : f32
    %15 = vector.broadcast %cst_8 : f32 to vector<8x128xf32>
    %16 = vector.broadcast %cst_9 : f32 to vector<8x128xf32>
    %17 = arith.select %11, %15, %16 : vector<8x128xi1>, vector<8x128xf32>
    %c0_10 = arith.constant 0 : index
    %c0_11 = arith.constant 0 : index
    %c0_12 = arith.constant 0 : index
    %18 = vector.load %arg1[%c0_10, %c0_11, %c0_12] : memref<8x8x32xf32, #tpu.memory_space<vmem>>, vector<8x8x32xf32>
    %19 = vector.shape_cast %18 : vector<8x8x32xf32> to vector<64x32xf32>
    %c0_13 = arith.constant 0 : index
    %c0_14 = arith.constant 0 : index
    %20 = vector.load %arg2[%c0_13, %c0_14] : memref<32x128xf32, #tpu.memory_space<vmem>>, vector<32x128xf32>
    %cst_15 = arith.constant dense<0.000000e+00> : vector<64x128xf32>
    %21 = tpu.matmul %19, %20, %cst_15 {dimension_numbers = #tpu.dot_dimension_numbers<[1], [0], [0], [1], [0, 0, 1, 1], [], []>} : vector<64x32xf32>, vector<32x128xf32>, vector<64x128xf32> -> vector<64x128xf32>
    %c0_16 = arith.constant 0 : index
    %c0_17 = arith.constant 0 : index
    %22 = vector.load %arg4[%c0_16, %c0_17] : memref<1x128xf32, #tpu.memory_space<vmem>>, vector<1x128xf32>
    %23 = vector.shape_cast %22 : vector<1x128xf32> to vector<1x128xf32>
    %24 = vector.broadcast %23 : vector<1x128xf32> to vector<64x128xf32>
    %25 = arith.addf %21, %24 : vector<64x128xf32>
    %c0_18 = arith.constant 0 : index
    %c0_19 = arith.constant 0 : index
    %26 = vector.load %arg13[%c0_18, %c0_19] : memref<64x128xf32, #tpu.memory_space<vmem>>, vector<64x128xf32>
    tpu.vector_store %arg13[%c0_18, %c0_19], %25 {strides = array<i32>} : memref<64x128xf32, #tpu.memory_space<vmem>>, vector<64x128xf32>,
    %cst_20 = arith.constant 0.000000e+00 : f32
    %27 = vector.broadcast %cst_20 : f32 to vector<8x32xf32>
    %c0_i32 = arith.constant 0 : i32
    %c8_i32 = arith.constant 8 : i32
    %28 = arith.muli %c0_i32, %c8_i32 : i32
    %29 = tpu.assume_multiple %28, 8 : i32
    %30 = arith.index_cast %29 : i32 to index
    %c0_21 = arith.constant 0 : index
    %31 = vector.load %arg13[%30, %c0_21] : memref<64x128xf32, #tpu.memory_space<vmem>>, vector<8x128xf32>
    %cst_22 = arith.constant dense<0.000000e+00> : vector<8x128xf32>
    %32 = tpu.matmul %27, %0, %cst_22 {dimension_numbers = #tpu.dot_dimension_numbers<[1], [0], [0], [1], [0, 0, 1, 1], [], []>} : vector<8x32xf32>, vector<32x128xf32>, vector<8x128xf32> -> vector<8x128xf32>
    %33 = arith.addf %31, %32 : vector<8x128xf32>
    %34 = arith.mulf %33, %14 : vector<8x128xf32>
    %35 = math.tanh %34 : vector<8x128xf32>
    %36 = arith.mulf %35, %14 : vector<8x128xf32>
    %37 = arith.addf %36, %17 : vector<8x128xf32>
    %38 = vector.extract_strided_slice %37 {offsets = [0, 0], sizes = [8, 32], strides = [1, 1]} : vector<8x128xf32> to vector<8x32xf32>
    %39 = vector.extract_strided_slice %37 {offsets = [0, 32], sizes = [8, 32], strides = [1, 1]} : vector<8x128xf32> to vector<8x32xf32>
    %40 = vector.extract_strided_slice %37 {offsets = [0, 64], sizes = [8, 32], strides = [1, 1]} : vector<8x128xf32> to vector<8x32xf32>
    %41 = vector.extract_strided_slice %37 {offsets = [0, 96], sizes = [8, 32], strides = [1, 1]} : vector<8x128xf32> to vector<8x32xf32>
    %42 = arith.mulf %39, %27 : vector<8x32xf32>
    %43 = arith.mulf %38, %40 : vector<8x32xf32>
    %44 = arith.addf %42, %43 : vector<8x32xf32>
    %45 = math.tanh %44 : vector<8x32xf32>
    %46 = arith.mulf %41, %45 : vector<8x32xf32>
    %cst_23 = arith.constant dense<0.000000e+00> : vector<8x128xf32>
    %47 = tpu.matmul %46, %1, %cst_23 {dimension_numbers = #tpu.dot_dimension_numbers<[1], [0], [0], [1], [0, 0, 1, 1], [], []>} : vector<8x32xf32>, vector<32x128xf32>, vector<8x128xf32> -> vector<8x128xf32>
    %cst_24 = arith.constant dense<0.000000e+00> : vector<8x128xf32>
    %48 = tpu.matmul %27, %2, %cst_24 {dimension_numbers = #tpu.dot_dimension_numbers<[1], [0], [0], [1], [0, 0, 1, 1], [], []>} : vector<8x32xf32>, vector<32x128xf32>, vector<8x128xf32> -> vector<8x128xf32>
    %49 = arith.addf %47, %48 : vector<8x128xf32>
    %50 = arith.addf %49, %5 : vector<8x128xf32>
    %51 = arith.mulf %50, %14 : vector<8x128xf32>
    %52 = math.tanh %51 : vector<8x128xf32>
    %53 = arith.mulf %52, %14 : vector<8x128xf32>
    %54 = arith.addf %53, %17 : vector<8x128xf32>
    %55 = vector.extract_strided_slice %54 {offsets = [0, 0], sizes = [8, 32], strides = [1, 1]} : vector<8x128xf32> to vector<8x32xf32>
    %56 = vector.extract_strided_slice %54 {offsets = [0, 32], sizes = [8, 32], strides = [1, 1]} : vector<8x128xf32> to vector<8x32xf32>
    %57 = vector.extract_strided_slice %54 {offsets = [0, 64], sizes = [8, 32], strides = [1, 1]} : vector<8x128xf32> to vector<8x32xf32>
    %58 = vector.extract_strided_slice %54 {offsets = [0, 96], sizes = [8, 32], strides = [1, 1]} : vector<8x128xf32> to vector<8x32xf32>
    %59 = arith.mulf %56, %27 : vector<8x32xf32>
    %60 = arith.mulf %55, %57 : vector<8x32xf32>
    %61 = arith.addf %59, %60 : vector<8x32xf32>
    %62 = math.tanh %61 : vector<8x32xf32>
    %63 = arith.mulf %58, %62 : vector<8x32xf32>
    %64 = arith.index_cast %29 : i32 to index
    %c0_25 = arith.constant 0 : index
    %65 = vector.load %arg14[%64, %c0_25] : memref<64x32xf32, #tpu.memory_space<vmem>>, vector<8x32xf32>
    tpu.vector_store %arg14[%64, %c0_25], %63 {strides = array<i32>} : memref<64x32xf32, #tpu.memory_space<vmem>>, vector<8x32xf32>,
    %c1_i32 = arith.constant 1 : i32
    %c8_i32_26 = arith.constant 8 : i32
    %66 = arith.muli %c1_i32, %c8_i32_26 : i32
    %67 = tpu.assume_multiple %66, 8 : i32
    %68 = arith.index_cast %67 : i32 to index
    %c0_27 = arith.constant 0 : index
    %69 = vector.load %arg13[%68, %c0_27] : memref<64x128xf32, #tpu.memory_space<vmem>>, vector<8x128xf32>
    %cst_28 = arith.constant dense<0.000000e+00> : vector<8x128xf32>
    %70 = tpu.matmul %46, %0, %cst_28 {dimension_numbers = #tpu.dot_dimension_numbers<[1], [0], [0], [1], [0, 0, 1, 1], [], []>} : vector<8x32xf32>, vector<32x128xf32>, vector<8x128xf32> -> vector<8x128xf32>
    %71 = arith.addf %69, %70 : vector<8x128xf32>
    %72 = arith.mulf %71, %14 : vector<8x128xf32>
    %73 = math.tanh %72 : vector<8x128xf32>
    %74 = arith.mulf %73, %14 : vector<8x128xf32>
    %75 = arith.addf %74, %17 : vector<8x128xf32>
    %76 = vector.extract_strided_slice %75 {offsets = [0, 0], sizes = [8, 32], strides = [1, 1]} : vector<8x128xf32> to vector<8x32xf32>
    %77 = vector.extract_strided_slice %75 {offsets = [0, 32], sizes = [8, 32], strides = [1, 1]} : vector<8x128xf32> to vector<8x32xf32>
    %78 = vector.extract_strided_slice %75 {offsets = [0, 64], sizes = [8, 32], strides = [1, 1]} : vector<8x128xf32> to vector<8x32xf32>
    %79 = vector.extract_strided_slice %75 {offsets = [0, 96], sizes = [8, 32], strides = [1, 1]} : vector<8x128xf32> to vector<8x32xf32>
    %80 = arith.mulf %77, %44 : vector<8x32xf32>
    %81 = arith.mulf %76, %78 : vector<8x32xf32>
    %82 = arith.addf %80, %81 : vector<8x32xf32>
    %83 = math.tanh %82 : vector<8x32xf32>
    %84 = arith.mulf %79, %83 : vector<8x32xf32>
    %cst_29 = arith.constant dense<0.000000e+00> : vector<8x128xf32>
    %85 = tpu.matmul %84, %1, %cst_29 {dimension_numbers = #tpu.dot_dimension_numbers<[1], [0], [0], [1], [0, 0, 1, 1], [], []>} : vector<8x32xf32>, vector<32x128xf32>, vector<8x128xf32> -> vector<8x128xf32>
    %cst_30 = arith.constant dense<0.000000e+00> : vector<8x128xf32>
    %86 = tpu.matmul %63, %2, %cst_30 {dimension_numbers = #tpu.dot_dimension_numbers<[1], [0], [0], [1], [0, 0, 1, 1], [], []>} : vector<8x32xf32>, vector<32x128xf32>, vector<8x128xf32> -> vector<8x128xf32>
    %87 = arith.addf %85, %86 : vector<8x128xf32>
    %88 = arith.addf %87, %5 : vector<8x128xf32>
    %89 = arith.mulf %88, %14 : vector<8x128xf32>
    %90 = math.tanh %89 : vector<8x128xf32>
    %91 = arith.mulf %90, %14 : vector<8x128xf32>
    %92 = arith.addf %91, %17 : vector<8x128xf32>
    %93 = vector.extract_strided_slice %92 {offsets = [0, 0], sizes = [8, 32], strides = [1, 1]} : vector<8x128xf32> to vector<8x32xf32>
    %94 = vector.extract_strided_slice %92 {offsets = [0, 32], sizes = [8, 32], strides = [1, 1]} : vector<8x128xf32> to vector<8x32xf32>
    %95 = vector.extract_strided_slice %92 {offsets = [0, 64], sizes = [8, 32], strides = [1, 1]} : vector<8x128xf32> to vector<8x32xf32>
    %96 = vector.extract_strided_slice %92 {offsets = [0, 96], sizes = [8, 32], strides = [1, 1]} : vector<8x128xf32> to vector<8x32xf32>
    %97 = arith.mulf %94, %61 : vector<8x32xf32>
    %98 = arith.mulf %93, %95 : vector<8x32xf32>
    %99 = arith.addf %97, %98 : vector<8x32xf32>
    %100 = math.tanh %99 : vector<8x32xf32>
    %101 = arith.mulf %96, %100 : vector<8x32xf32>
    %102 = arith.index_cast %67 : i32 to index
    %c0_31 = arith.constant 0 : index
    %103 = vector.load %arg14[%102, %c0_31] : memref<64x32xf32, #tpu.memory_space<vmem>>, vector<8x32xf32>
    tpu.vector_store %arg14[%102, %c0_31], %101 {strides = array<i32>} : memref<64x32xf32, #tpu.memory_space<vmem>>, vector<8x32xf32>,
    %c2_i32 = arith.constant 2 : i32
    %c8_i32_32 = arith.constant 8 : i32
    %104 = arith.muli %c2_i32, %c8_i32_32 : i32
    %105 = tpu.assume_multiple %104, 8 : i32
    %106 = arith.index_cast %105 : i32 to index
    %c0_33 = arith.constant 0 : index
    %107 = vector.load %arg13[%106, %c0_33] : memref<64x128xf32, #tpu.memory_space<vmem>>, vector<8x128xf32>
    %cst_34 = arith.constant dense<0.000000e+00> : vector<8x128xf32>
    %108 = tpu.matmul %84, %0, %cst_34 {dimension_numbers = #tpu.dot_dimension_numbers<[1], [0], [0], [1], [0, 0, 1, 1], [], []>} : vector<8x32xf32>, vector<32x128xf32>, vector<8x128xf32> -> vector<8x128xf32>
    %109 = arith.addf %107, %108 : vector<8x128xf32>
    %110 = arith.mulf %109, %14 : vector<8x128xf32>
    %111 = math.tanh %110 : vector<8x128xf32>
    %112 = arith.mulf %111, %14 : vector<8x128xf32>
    %113 = arith.addf %112, %17 : vector<8x128xf32>
    %114 = vector.extract_strided_slice %113 {offsets = [0, 0], sizes = [8, 32], strides = [1, 1]} : vector<8x128xf32> to vector<8x32xf32>
    %115 = vector.extract_strided_slice %113 {offsets = [0, 32], sizes = [8, 32], strides = [1, 1]} : vector<8x128xf32> to vector<8x32xf32>
    %116 = vector.extract_strided_slice %113 {offsets = [0, 64], sizes = [8, 32], strides = [1, 1]} : vector<8x128xf32> to vector<8x32xf32>
    %117 = vector.extract_strided_slice %113 {offsets = [0, 96], sizes = [8, 32], strides = [1, 1]} : vector<8x128xf32> to vector<8x32xf32>
    %118 = arith.mulf %115, %82 : vector<8x32xf32>
    %119 = arith.mulf %114, %116 : vector<8x32xf32>
    %120 = arith.addf %118, %119 : vector<8x32xf32>
    %121 = math.tanh %120 : vector<8x32xf32>
    %122 = arith.mulf %117, %121 : vector<8x32xf32>
    %cst_35 = arith.constant dense<0.000000e+00> : vector<8x128xf32>
    %123 = tpu.matmul %122, %1, %cst_35 {dimension_numbers = #tpu.dot_dimension_numbers<[1], [0], [0], [1], [0, 0, 1, 1], [], []>} : vector<8x32xf32>, vector<32x128xf32>, vector<8x128xf32> -> vector<8x128xf32>
    %cst_36 = arith.constant dense<0.000000e+00> : vector<8x128xf32>
    %124 = tpu.matmul %101, %2, %cst_36 {dimension_numbers = #tpu.dot_dimension_numbers<[1], [0], [0], [1], [0, 0, 1, 1], [], []>} : vector<8x32xf32>, vector<32x128xf32>, vector<8x128xf32> -> vector<8x128xf32>
    %125 = arith.addf %123, %124 : vector<8x128xf32>
    %126 = arith.addf %125, %5 : vector<8x128xf32>
    %127 = arith.mulf %126, %14 : vector<8x128xf32>
    %128 = math.tanh %127 : vector<8x128xf32>
    %129 = arith.mulf %128, %14 : vector<8x128xf32>
    %130 = arith.addf %129, %17 : vector<8x128xf32>
    %131 = vector.extract_strided_slice %130 {offsets = [0, 0], sizes = [8, 32], strides = [1, 1]} : vector<8x128xf32> to vector<8x32xf32>
    %132 = vector.extract_strided_slice %130 {offsets = [0, 32], sizes = [8, 32], strides = [1, 1]} : vector<8x128xf32> to vector<8x32xf32>
    %133 = vector.extract_strided_slice %130 {offsets = [0, 64], sizes = [8, 32], strides = [1, 1]} : vector<8x128xf32> to vector<8x32xf32>
    %134 = vector.extract_strided_slice %130 {offsets = [0, 96], sizes = [8, 32], strides = [1, 1]} : vector<8x128xf32> to vector<8x32xf32>
    %135 = arith.mulf %132, %99 : vector<8x32xf32>
    %136 = arith.mulf %131, %133 : vector<8x32xf32>
    %137 = arith.addf %135, %136 : vector<8x32xf32>
    %138 = math.tanh %137 : vector<8x32xf32>
    %139 = arith.mulf %134, %138 : vector<8x32xf32>
    %140 = arith.index_cast %105 : i32 to index
    %c0_37 = arith.constant 0 : index
    %141 = vector.load %arg14[%140, %c0_37] : memref<64x32xf32, #tpu.memory_space<vmem>>, vector<8x32xf32>
    tpu.vector_store %arg14[%140, %c0_37], %139 {strides = array<i32>} : memref<64x32xf32, #tpu.memory_space<vmem>>, vector<8x32xf32>,
    %c3_i32 = arith.constant 3 : i32
    %c8_i32_38 = arith.constant 8 : i32
    %142 = arith.muli %c3_i32, %c8_i32_38 : i32
    %143 = tpu.assume_multiple %142, 8 : i32
    %144 = arith.index_cast %143 : i32 to index
    %c0_39 = arith.constant 0 : index
    %145 = vector.load %arg13[%144, %c0_39] : memref<64x128xf32, #tpu.memory_space<vmem>>, vector<8x128xf32>
    %cst_40 = arith.constant dense<0.000000e+00> : vector<8x128xf32>
    %146 = tpu.matmul %122, %0, %cst_40 {dimension_numbers = #tpu.dot_dimension_numbers<[1], [0], [0], [1], [0, 0, 1, 1], [], []>} : vector<8x32xf32>, vector<32x128xf32>, vector<8x128xf32> -> vector<8x128xf32>
    %147 = arith.addf %145, %146 : vector<8x128xf32>
    %148 = arith.mulf %147, %14 : vector<8x128xf32>
    %149 = math.tanh %148 : vector<8x128xf32>
    %150 = arith.mulf %149, %14 : vector<8x128xf32>
    %151 = arith.addf %150, %17 : vector<8x128xf32>
    %152 = vector.extract_strided_slice %151 {offsets = [0, 0], sizes = [8, 32], strides = [1, 1]} : vector<8x128xf32> to vector<8x32xf32>
    %153 = vector.extract_strided_slice %151 {offsets = [0, 32], sizes = [8, 32], strides = [1, 1]} : vector<8x128xf32> to vector<8x32xf32>
    %154 = vector.extract_strided_slice %151 {offsets = [0, 64], sizes = [8, 32], strides = [1, 1]} : vector<8x128xf32> to vector<8x32xf32>
    %155 = vector.extract_strided_slice %151 {offsets = [0, 96], sizes = [8, 32], strides = [1, 1]} : vector<8x128xf32> to vector<8x32xf32>
    %156 = arith.mulf %153, %120 : vector<8x32xf32>
    %157 = arith.mulf %152, %154 : vector<8x32xf32>
    %158 = arith.addf %156, %157 : vector<8x32xf32>
    %159 = math.tanh %158 : vector<8x32xf32>
    %160 = arith.mulf %155, %159 : vector<8x32xf32>
    %cst_41 = arith.constant dense<0.000000e+00> : vector<8x128xf32>
    %161 = tpu.matmul %160, %1, %cst_41 {dimension_numbers = #tpu.dot_dimension_numbers<[1], [0], [0], [1], [0, 0, 1, 1], [], []>} : vector<8x32xf32>, vector<32x128xf32>, vector<8x128xf32> -> vector<8x128xf32>
    %cst_42 = arith.constant dense<0.000000e+00> : vector<8x128xf32>
    %162 = tpu.matmul %139, %2, %cst_42 {dimension_numbers = #tpu.dot_dimension_numbers<[1], [0], [0], [1], [0, 0, 1, 1], [], []>} : vector<8x32xf32>, vector<32x128xf32>, vector<8x128xf32> -> vector<8x128xf32>
    %163 = arith.addf %161, %162 : vector<8x128xf32>
    %164 = arith.addf %163, %5 : vector<8x128xf32>
    %165 = arith.mulf %164, %14 : vector<8x128xf32>
    %166 = math.tanh %165 : vector<8x128xf32>
    %167 = arith.mulf %166, %14 : vector<8x128xf32>
    %168 = arith.addf %167, %17 : vector<8x128xf32>
    %169 = vector.extract_strided_slice %168 {offsets = [0, 0], sizes = [8, 32], strides = [1, 1]} : vector<8x128xf32> to vector<8x32xf32>
    %170 = vector.extract_strided_slice %168 {offsets = [0, 32], sizes = [8, 32], strides = [1, 1]} : vector<8x128xf32> to vector<8x32xf32>
    %171 = vector.extract_strided_slice %168 {offsets = [0, 64], sizes = [8, 32], strides = [1, 1]} : vector<8x128xf32> to vector<8x32xf32>
    %172 = vector.extract_strided_slice %168 {offsets = [0, 96], sizes = [8, 32], strides = [1, 1]} : vector<8x128xf32> to vector<8x32xf32>
    %173 = arith.mulf %170, %137 : vector<8x32xf32>
    %174 = arith.mulf %169, %171 : vector<8x32xf32>
    %175 = arith.addf %173, %174 : vector<8x32xf32>
    %176 = math.tanh %175 : vector<8x32xf32>
    %177 = arith.mulf %172, %176 : vector<8x32xf32>
    %178 = arith.index_cast %143 : i32 to index
    %c0_43 = arith.constant 0 : index
    %179 = vector.load %arg14[%178, %c0_43] : memref<64x32xf32, #tpu.memory_space<vmem>>, vector<8x32xf32>
    tpu.vector_store %arg14[%178, %c0_43], %177 {strides = array<i32>} : memref<64x32xf32, #tpu.memory_space<vmem>>, vector<8x32xf32>,
    %c4_i32 = arith.constant 4 : i32
    %c8_i32_44 = arith.constant 8 : i32
    %180 = arith.muli %c4_i32, %c8_i32_44 : i32
    %181 = tpu.assume_multiple %180, 8 : i32
    %182 = arith.index_cast %181 : i32 to index
    %c0_45 = arith.constant 0 : index
    %183 = vector.load %arg13[%182, %c0_45] : memref<64x128xf32, #tpu.memory_space<vmem>>, vector<8x128xf32>
    %cst_46 = arith.constant dense<0.000000e+00> : vector<8x128xf32>
    %184 = tpu.matmul %160, %0, %cst_46 {dimension_numbers = #tpu.dot_dimension_numbers<[1], [0], [0], [1], [0, 0, 1, 1], [], []>} : vector<8x32xf32>, vector<32x128xf32>, vector<8x128xf32> -> vector<8x128xf32>
    %185 = arith.addf %183, %184 : vector<8x128xf32>
    %186 = arith.mulf %185, %14 : vector<8x128xf32>
    %187 = math.tanh %186 : vector<8x128xf32>
    %188 = arith.mulf %187, %14 : vector<8x128xf32>
    %189 = arith.addf %188, %17 : vector<8x128xf32>
    %190 = vector.extract_strided_slice %189 {offsets = [0, 0], sizes = [8, 32], strides = [1, 1]} : vector<8x128xf32> to vector<8x32xf32>
    %191 = vector.extract_strided_slice %189 {offsets = [0, 32], sizes = [8, 32], strides = [1, 1]} : vector<8x128xf32> to vector<8x32xf32>
    %192 = vector.extract_strided_slice %189 {offsets = [0, 64], sizes = [8, 32], strides = [1, 1]} : vector<8x128xf32> to vector<8x32xf32>
    %193 = vector.extract_strided_slice %189 {offsets = [0, 96], sizes = [8, 32], strides = [1, 1]} : vector<8x128xf32> to vector<8x32xf32>
    %194 = arith.mulf %191, %158 : vector<8x32xf32>
    %195 = arith.mulf %190, %192 : vector<8x32xf32>
    %196 = arith.addf %194, %195 : vector<8x32xf32>
    %197 = math.tanh %196 : vector<8x32xf32>
    %198 = arith.mulf %193, %197 : vector<8x32xf32>
    %cst_47 = arith.constant dense<0.000000e+00> : vector<8x128xf32>
    %199 = tpu.matmul %198, %1, %cst_47 {dimension_numbers = #tpu.dot_dimension_numbers<[1], [0], [0], [1], [0, 0, 1, 1], [], []>} : vector<8x32xf32>, vector<32x128xf32>, vector<8x128xf32> -> vector<8x128xf32>
    %cst_48 = arith.constant dense<0.000000e+00> : vector<8x128xf32>
    %200 = tpu.matmul %177, %2, %cst_48 {dimension_numbers = #tpu.dot_dimension_numbers<[1], [0], [0], [1], [0, 0, 1, 1], [], []>} : vector<8x32xf32>, vector<32x128xf32>, vector<8x128xf32> -> vector<8x128xf32>
    %201 = arith.addf %199, %200 : vector<8x128xf32>
    %202 = arith.addf %201, %5 : vector<8x128xf32>
    %203 = arith.mulf %202, %14 : vector<8x128xf32>
    %204 = math.tanh %203 : vector<8x128xf32>
    %205 = arith.mulf %204, %14 : vector<8x128xf32>
    %206 = arith.addf %205, %17 : vector<8x128xf32>
    %207 = vector.extract_strided_slice %206 {offsets = [0, 0], sizes = [8, 32], strides = [1, 1]} : vector<8x128xf32> to vector<8x32xf32>
    %208 = vector.extract_strided_slice %206 {offsets = [0, 32], sizes = [8, 32], strides = [1, 1]} : vector<8x128xf32> to vector<8x32xf32>
    %209 = vector.extract_strided_slice %206 {offsets = [0, 64], sizes = [8, 32], strides = [1, 1]} : vector<8x128xf32> to vector<8x32xf32>
    %210 = vector.extract_strided_slice %206 {offsets = [0, 96], sizes = [8, 32], strides = [1, 1]} : vector<8x128xf32> to vector<8x32xf32>
    %211 = arith.mulf %208, %175 : vector<8x32xf32>
    %212 = arith.mulf %207, %209 : vector<8x32xf32>
    %213 = arith.addf %211, %212 : vector<8x32xf32>
    %214 = math.tanh %213 : vector<8x32xf32>
    %215 = arith.mulf %210, %214 : vector<8x32xf32>
    %216 = arith.index_cast %181 : i32 to index
    %c0_49 = arith.constant 0 : index
    %217 = vector.load %arg14[%216, %c0_49] : memref<64x32xf32, #tpu.memory_space<vmem>>, vector<8x32xf32>
    tpu.vector_store %arg14[%216, %c0_49], %215 {strides = array<i32>} : memref<64x32xf32, #tpu.memory_space<vmem>>, vector<8x32xf32>,
    %c5_i32 = arith.constant 5 : i32
    %c8_i32_50 = arith.constant 8 : i32
    %218 = arith.muli %c5_i32, %c8_i32_50 : i32
    %219 = tpu.assume_multiple %218, 8 : i32
    %220 = arith.index_cast %219 : i32 to index
    %c0_51 = arith.constant 0 : index
    %221 = vector.load %arg13[%220, %c0_51] : memref<64x128xf32, #tpu.memory_space<vmem>>, vector<8x128xf32>
    %cst_52 = arith.constant dense<0.000000e+00> : vector<8x128xf32>
    %222 = tpu.matmul %198, %0, %cst_52 {dimension_numbers = #tpu.dot_dimension_numbers<[1], [0], [0], [1], [0, 0, 1, 1], [], []>} : vector<8x32xf32>, vector<32x128xf32>, vector<8x128xf32> -> vector<8x128xf32>
    %223 = arith.addf %221, %222 : vector<8x128xf32>
    %224 = arith.mulf %223, %14 : vector<8x128xf32>
    %225 = math.tanh %224 : vector<8x128xf32>
    %226 = arith.mulf %225, %14 : vector<8x128xf32>
    %227 = arith.addf %226, %17 : vector<8x128xf32>
    %228 = vector.extract_strided_slice %227 {offsets = [0, 0], sizes = [8, 32], strides = [1, 1]} : vector<8x128xf32> to vector<8x32xf32>
    %229 = vector.extract_strided_slice %227 {offsets = [0, 32], sizes = [8, 32], strides = [1, 1]} : vector<8x128xf32> to vector<8x32xf32>
    %230 = vector.extract_strided_slice %227 {offsets = [0, 64], sizes = [8, 32], strides = [1, 1]} : vector<8x128xf32> to vector<8x32xf32>
    %231 = vector.extract_strided_slice %227 {offsets = [0, 96], sizes = [8, 32], strides = [1, 1]} : vector<8x128xf32> to vector<8x32xf32>
    %232 = arith.mulf %229, %196 : vector<8x32xf32>
    %233 = arith.mulf %228, %230 : vector<8x32xf32>
    %234 = arith.addf %232, %233 : vector<8x32xf32>
    %235 = math.tanh %234 : vector<8x32xf32>
    %236 = arith.mulf %231, %235 : vector<8x32xf32>
    %cst_53 = arith.constant dense<0.000000e+00> : vector<8x128xf32>
    %237 = tpu.matmul %236, %1, %cst_53 {dimension_numbers = #tpu.dot_dimension_numbers<[1], [0], [0], [1], [0, 0, 1, 1], [], []>} : vector<8x32xf32>, vector<32x128xf32>, vector<8x128xf32> -> vector<8x128xf32>
    %cst_54 = arith.constant dense<0.000000e+00> : vector<8x128xf32>
    %238 = tpu.matmul %215, %2, %cst_54 {dimension_numbers = #tpu.dot_dimension_numbers<[1], [0], [0], [1], [0, 0, 1, 1], [], []>} : vector<8x32xf32>, vector<32x128xf32>, vector<8x128xf32> -> vector<8x128xf32>
    %239 = arith.addf %237, %238 : vector<8x128xf32>
    %240 = arith.addf %239, %5 : vector<8x128xf32>
    %241 = arith.mulf %240, %14 : vector<8x128xf32>
    %242 = math.tanh %241 : vector<8x128xf32>
    %243 = arith.mulf %242, %14 : vector<8x128xf32>
    %244 = arith.addf %243, %17 : vector<8x128xf32>
    %245 = vector.extract_strided_slice %244 {offsets = [0, 0], sizes = [8, 32], strides = [1, 1]} : vector<8x128xf32> to vector<8x32xf32>
    %246 = vector.extract_strided_slice %244 {offsets = [0, 32], sizes = [8, 32], strides = [1, 1]} : vector<8x128xf32> to vector<8x32xf32>
    %247 = vector.extract_strided_slice %244 {offsets = [0, 64], sizes = [8, 32], strides = [1, 1]} : vector<8x128xf32> to vector<8x32xf32>
    %248 = vector.extract_strided_slice %244 {offsets = [0, 96], sizes = [8, 32], strides = [1, 1]} : vector<8x128xf32> to vector<8x32xf32>
    %249 = arith.mulf %246, %213 : vector<8x32xf32>
    %250 = arith.mulf %245, %247 : vector<8x32xf32>
    %251 = arith.addf %249, %250 : vector<8x32xf32>
    %252 = math.tanh %251 : vector<8x32xf32>
    %253 = arith.mulf %248, %252 : vector<8x32xf32>
    %254 = arith.index_cast %219 : i32 to index
    %c0_55 = arith.constant 0 : index
    %255 = vector.load %arg14[%254, %c0_55] : memref<64x32xf32, #tpu.memory_space<vmem>>, vector<8x32xf32>
    tpu.vector_store %arg14[%254, %c0_55], %253 {strides = array<i32>} : memref<64x32xf32, #tpu.memory_space<vmem>>, vector<8x32xf32>,
    %c6_i32 = arith.constant 6 : i32
    %c8_i32_56 = arith.constant 8 : i32
    %256 = arith.muli %c6_i32, %c8_i32_56 : i32
    %257 = tpu.assume_multiple %256, 8 : i32
    %258 = arith.index_cast %257 : i32 to index
    %c0_57 = arith.constant 0 : index
    %259 = vector.load %arg13[%258, %c0_57] : memref<64x128xf32, #tpu.memory_space<vmem>>, vector<8x128xf32>
    %cst_58 = arith.constant dense<0.000000e+00> : vector<8x128xf32>
    %260 = tpu.matmul %236, %0, %cst_58 {dimension_numbers = #tpu.dot_dimension_numbers<[1], [0], [0], [1], [0, 0, 1, 1], [], []>} : vector<8x32xf32>, vector<32x128xf32>, vector<8x128xf32> -> vector<8x128xf32>
    %261 = arith.addf %259, %260 : vector<8x128xf32>
    %262 = arith.mulf %261, %14 : vector<8x128xf32>
    %263 = math.tanh %262 : vector<8x128xf32>
    %264 = arith.mulf %263, %14 : vector<8x128xf32>
    %265 = arith.addf %264, %17 : vector<8x128xf32>
    %266 = vector.extract_strided_slice %265 {offsets = [0, 0], sizes = [8, 32], strides = [1, 1]} : vector<8x128xf32> to vector<8x32xf32>
    %267 = vector.extract_strided_slice %265 {offsets = [0, 32], sizes = [8, 32], strides = [1, 1]} : vector<8x128xf32> to vector<8x32xf32>
    %268 = vector.extract_strided_slice %265 {offsets = [0, 64], sizes = [8, 32], strides = [1, 1]} : vector<8x128xf32> to vector<8x32xf32>
    %269 = vector.extract_strided_slice %265 {offsets = [0, 96], sizes = [8, 32], strides = [1, 1]} : vector<8x128xf32> to vector<8x32xf32>
    %270 = arith.mulf %267, %234 : vector<8x32xf32>
    %271 = arith.mulf %266, %268 : vector<8x32xf32>
    %272 = arith.addf %270, %271 : vector<8x32xf32>
    %273 = math.tanh %272 : vector<8x32xf32>
    %274 = arith.mulf %269, %273 : vector<8x32xf32>
    %cst_59 = arith.constant dense<0.000000e+00> : vector<8x128xf32>
    %275 = tpu.matmul %274, %1, %cst_59 {dimension_numbers = #tpu.dot_dimension_numbers<[1], [0], [0], [1], [0, 0, 1, 1], [], []>} : vector<8x32xf32>, vector<32x128xf32>, vector<8x128xf32> -> vector<8x128xf32>
    %cst_60 = arith.constant dense<0.000000e+00> : vector<8x128xf32>
    %276 = tpu.matmul %253, %2, %cst_60 {dimension_numbers = #tpu.dot_dimension_numbers<[1], [0], [0], [1], [0, 0, 1, 1], [], []>} : vector<8x32xf32>, vector<32x128xf32>, vector<8x128xf32> -> vector<8x128xf32>
    %277 = arith.addf %275, %276 : vector<8x128xf32>
    %278 = arith.addf %277, %5 : vector<8x128xf32>
    %279 = arith.mulf %278, %14 : vector<8x128xf32>
    %280 = math.tanh %279 : vector<8x128xf32>
    %281 = arith.mulf %280, %14 : vector<8x128xf32>
    %282 = arith.addf %281, %17 : vector<8x128xf32>
    %283 = vector.extract_strided_slice %282 {offsets = [0, 0], sizes = [8, 32], strides = [1, 1]} : vector<8x128xf32> to vector<8x32xf32>
    %284 = vector.extract_strided_slice %282 {offsets = [0, 32], sizes = [8, 32], strides = [1, 1]} : vector<8x128xf32> to vector<8x32xf32>
    %285 = vector.extract_strided_slice %282 {offsets = [0, 64], sizes = [8, 32], strides = [1, 1]} : vector<8x128xf32> to vector<8x32xf32>
    %286 = vector.extract_strided_slice %282 {offsets = [0, 96], sizes = [8, 32], strides = [1, 1]} : vector<8x128xf32> to vector<8x32xf32>
    %287 = arith.mulf %284, %251 : vector<8x32xf32>
    %288 = arith.mulf %283, %285 : vector<8x32xf32>
    %289 = arith.addf %287, %288 : vector<8x32xf32>
    %290 = math.tanh %289 : vector<8x32xf32>
    %291 = arith.mulf %286, %290 : vector<8x32xf32>
    %292 = arith.index_cast %257 : i32 to index
    %c0_61 = arith.constant 0 : index
    %293 = vector.load %arg14[%292, %c0_61] : memref<64x32xf32, #tpu.memory_space<vmem>>, vector<8x32xf32>
    tpu.vector_store %arg14[%292, %c0_61], %291 {strides = array<i32>} : memref<64x32xf32, #tpu.memory_space<vmem>>, vector<8x32xf32>,
    %c7_i32 = arith.constant 7 : i32
    %c8_i32_62 = arith.constant 8 : i32
    %294 = arith.muli %c7_i32, %c8_i32_62 : i32
    %295 = tpu.assume_multiple %294, 8 : i32
    %296 = arith.index_cast %295 : i32 to index
    %c0_63 = arith.constant 0 : index
    %297 = vector.load %arg13[%296, %c0_63] : memref<64x128xf32, #tpu.memory_space<vmem>>, vector<8x128xf32>
    %cst_64 = arith.constant dense<0.000000e+00> : vector<8x128xf32>
    %298 = tpu.matmul %274, %0, %cst_64 {dimension_numbers = #tpu.dot_dimension_numbers<[1], [0], [0], [1], [0, 0, 1, 1], [], []>} : vector<8x32xf32>, vector<32x128xf32>, vector<8x128xf32> -> vector<8x128xf32>
    %299 = arith.addf %297, %298 : vector<8x128xf32>
    %300 = arith.mulf %299, %14 : vector<8x128xf32>
    %301 = math.tanh %300 : vector<8x128xf32>
    %302 = arith.mulf %301, %14 : vector<8x128xf32>
    %303 = arith.addf %302, %17 : vector<8x128xf32>
    %304 = vector.extract_strided_slice %303 {offsets = [0, 0], sizes = [8, 32], strides = [1, 1]} : vector<8x128xf32> to vector<8x32xf32>
    %305 = vector.extract_strided_slice %303 {offsets = [0, 32], sizes = [8, 32], strides = [1, 1]} : vector<8x128xf32> to vector<8x32xf32>
    %306 = vector.extract_strided_slice %303 {offsets = [0, 64], sizes = [8, 32], strides = [1, 1]} : vector<8x128xf32> to vector<8x32xf32>
    %307 = vector.extract_strided_slice %303 {offsets = [0, 96], sizes = [8, 32], strides = [1, 1]} : vector<8x128xf32> to vector<8x32xf32>
    %308 = arith.mulf %305, %272 : vector<8x32xf32>
    %309 = arith.mulf %304, %306 : vector<8x32xf32>
    %310 = arith.addf %308, %309 : vector<8x32xf32>
    %311 = math.tanh %310 : vector<8x32xf32>
    %312 = arith.mulf %307, %311 : vector<8x32xf32>
    %cst_65 = arith.constant dense<0.000000e+00> : vector<8x128xf32>
    %313 = tpu.matmul %312, %1, %cst_65 {dimension_numbers = #tpu.dot_dimension_numbers<[1], [0], [0], [1], [0, 0, 1, 1], [], []>} : vector<8x32xf32>, vector<32x128xf32>, vector<8x128xf32> -> vector<8x128xf32>
    %cst_66 = arith.constant dense<0.000000e+00> : vector<8x128xf32>
    %314 = tpu.matmul %291, %2, %cst_66 {dimension_numbers = #tpu.dot_dimension_numbers<[1], [0], [0], [1], [0, 0, 1, 1], [], []>} : vector<8x32xf32>, vector<32x128xf32>, vector<8x128xf32> -> vector<8x128xf32>
    %315 = arith.addf %313, %314 : vector<8x128xf32>
    %316 = arith.addf %315, %5 : vector<8x128xf32>
    %317 = arith.mulf %316, %14 : vector<8x128xf32>
    %318 = math.tanh %317 : vector<8x128xf32>
    %319 = arith.mulf %318, %14 : vector<8x128xf32>
    %320 = arith.addf %319, %17 : vector<8x128xf32>
    %321 = vector.extract_strided_slice %320 {offsets = [0, 0], sizes = [8, 32], strides = [1, 1]} : vector<8x128xf32> to vector<8x32xf32>
    %322 = vector.extract_strided_slice %320 {offsets = [0, 32], sizes = [8, 32], strides = [1, 1]} : vector<8x128xf32> to vector<8x32xf32>
    %323 = vector.extract_strided_slice %320 {offsets = [0, 64], sizes = [8, 32], strides = [1, 1]} : vector<8x128xf32> to vector<8x32xf32>
    %324 = vector.extract_strided_slice %320 {offsets = [0, 96], sizes = [8, 32], strides = [1, 1]} : vector<8x128xf32> to vector<8x32xf32>
    %325 = arith.mulf %322, %289 : vector<8x32xf32>
    %326 = arith.mulf %321, %323 : vector<8x32xf32>
    %327 = arith.addf %325, %326 : vector<8x32xf32>
    %328 = math.tanh %327 : vector<8x32xf32>
    %329 = arith.mulf %324, %328 : vector<8x32xf32>
    %330 = arith.index_cast %295 : i32 to index
    %c0_67 = arith.constant 0 : index
    %331 = vector.load %arg14[%330, %c0_67] : memref<64x32xf32, #tpu.memory_space<vmem>>, vector<8x32xf32>
    tpu.vector_store %arg14[%330, %c0_67], %329 {strides = array<i32>} : memref<64x32xf32, #tpu.memory_space<vmem>>, vector<8x32xf32>,
    %c8_i32_68 = arith.constant 8 : i32
    %c0_69 = arith.constant 0 : index
    %c0_70 = arith.constant 0 : index
    %c0_71 = arith.constant 0 : index
    %332 = vector.load %arg11[%c0_69, %c0_70, %c0_71] : memref<2x8x32xf32, #tpu.memory_space<vmem>>, vector<1x8x32xf32>
    %333 = vector.shape_cast %332 : vector<1x8x32xf32> to vector<8x32xf32>
    %334 = vector.shape_cast %312 : vector<8x32xf32> to vector<1x8x32xf32>
    tpu.vector_store %arg11[%c0_69, %c0_70, %c0_71], %334 {strides = array<i32>} : memref<2x8x32xf32, #tpu.memory_space<vmem>>, vector<1x8x32xf32>,
    %c1 = arith.constant 1 : index
    %c0_72 = arith.constant 0 : index
    %c0_73 = arith.constant 0 : index
    %335 = vector.load %arg11[%c1, %c0_72, %c0_73] : memref<2x8x32xf32, #tpu.memory_space<vmem>>, vector<1x8x32xf32>
    %336 = vector.shape_cast %335 : vector<1x8x32xf32> to vector<8x32xf32>
    %337 = vector.shape_cast %329 : vector<8x32xf32> to vector<1x8x32xf32>
    tpu.vector_store %arg11[%c1, %c0_72, %c0_73], %337 {strides = array<i32>} : memref<2x8x32xf32, #tpu.memory_space<vmem>>, vector<1x8x32xf32>,
    %c0_74 = arith.constant 0 : index
    %c0_75 = arith.constant 0 : index
    %c0_76 = arith.constant 0 : index
    %338 = vector.load %arg12[%c0_74, %c0_75, %c0_76] : memref<2x8x32xf32, #tpu.memory_space<vmem>>, vector<1x8x32xf32>
    %339 = vector.shape_cast %338 : vector<1x8x32xf32> to vector<8x32xf32>
    %340 = vector.shape_cast %310 : vector<8x32xf32> to vector<1x8x32xf32>
    tpu.vector_store %arg12[%c0_74, %c0_75, %c0_76], %340 {strides = array<i32>} : memref<2x8x32xf32, #tpu.memory_space<vmem>>, vector<1x8x32xf32>,
    %c1_77 = arith.constant 1 : index
    %c0_78 = arith.constant 0 : index
    %c0_79 = arith.constant 0 : index
    %341 = vector.load %arg12[%c1_77, %c0_78, %c0_79] : memref<2x8x32xf32, #tpu.memory_space<vmem>>, vector<1x8x32xf32>
    %342 = vector.shape_cast %341 : vector<1x8x32xf32> to vector<8x32xf32>
    %343 = vector.shape_cast %327 : vector<8x32xf32> to vector<1x8x32xf32>
    tpu.vector_store %arg12[%c1_77, %c0_78, %c0_79], %343 {strides = array<i32>} : memref<2x8x32xf32, #tpu.memory_space<vmem>>, vector<1x8x32xf32>,
    %c0_80 = arith.constant 0 : index
    %c0_81 = arith.constant 0 : index
    %344 = vector.load %arg14[%c0_80, %c0_81] : memref<64x32xf32, #tpu.memory_space<vmem>>, vector<64x32xf32>
    %c0_82 = arith.constant 0 : index
    %c0_83 = arith.constant 0 : index
    %345 = vector.load %arg8[%c0_82, %c0_83] : memref<32x128xf32, #tpu.memory_space<vmem>>, vector<32x128xf32>
    %cst_84 = arith.constant dense<0.000000e+00> : vector<64x128xf32>
    %346 = tpu.matmul %344, %345, %cst_84 {dimension_numbers = #tpu.dot_dimension_numbers<[1], [0], [0], [1], [0, 0, 1, 1], [], []>} : vector<64x32xf32>, vector<32x128xf32>, vector<64x128xf32> -> vector<64x128xf32>
    %c0_85 = arith.constant 0 : index
    %c0_86 = arith.constant 0 : index
    %347 = vector.load %arg9[%c0_85, %c0_86] : memref<1x128xf32, #tpu.memory_space<vmem>>, vector<1x128xf32>
    %348 = vector.shape_cast %347 : vector<1x128xf32> to vector<1x128xf32>
    %349 = vector.broadcast %348 : vector<1x128xf32> to vector<64x128xf32>
    %350 = arith.addf %346, %349 : vector<64x128xf32>
    %351 = vector.shape_cast %350 : vector<64x128xf32> to vector<8x8x128xf32>
    %c0_87 = arith.constant 0 : index
    %c0_88 = arith.constant 0 : index
    %c0_89 = arith.constant 0 : index
    %352 = vector.load %arg10[%c0_87, %c0_88, %c0_89] : memref<8x8x128xf32, #tpu.memory_space<vmem>>, vector<8x8x128xf32>
    tpu.vector_store %arg10[%c0_87, %c0_88, %c0_89], %351 {strides = array<i32>} : memref<8x8x128xf32, #tpu.memory_space<vmem>>, vector<8x8x128xf32>,
    return
  }
  func.func @transform_0(%arg0: i32) -> (i32, i32, i32) {
    %c0_i32 = arith.constant 0 : i32
    %c0_i32_0 = arith.constant 0 : i32
    %c0_i32_1 = arith.constant 0 : i32
    return %c0_i32, %arg0, %c0_i32_0 : i32, i32, i32
  }
  func.func @transform_1(%arg0: i32) -> (i32, i32) {
    %c0_i32 = arith.constant 0 : i32
    %c0_i32_0 = arith.constant 0 : i32
    %c0_i32_1 = arith.constant 0 : i32
    return %c0_i32, %c0_i32_0 : i32, i32
  }
  func.func @transform_2(%arg0: i32) -> (i32, i32) {
    %c0_i32 = arith.constant 0 : i32
    %c0_i32_0 = arith.constant 0 : i32
    %c0_i32_1 = arith.constant 0 : i32
    return %c0_i32, %c0_i32_0 : i32, i32
  }
  func.func @transform_3(%arg0: i32) -> (i32, i32) {
    %c0_i32 = arith.constant 0 : i32
    %c0_i32_0 = arith.constant 0 : i32
    %c0_i32_1 = arith.constant 0 : i32
    return %c0_i32, %c0_i32_0 : i32, i32
  }
  func.func @transform_4(%arg0: i32) -> (i32, i32) {
    %c0_i32 = arith.constant 0 : i32
    %c0_i32_0 = arith.constant 0 : i32
    %c0_i32_1 = arith.constant 0 : i32
    return %c0_i32, %c0_i32_0 : i32, i32
  }
  func.func @transform_5(%arg0: i32) -> (i32, i32) {
    %c0_i32 = arith.constant 0 : i32
    %c0_i32_0 = arith.constant 0 : i32
    %c0_i32_1 = arith.constant 0 : i32
    return %c0_i32, %c0_i32_0 : i32, i32
  }
  func.func @transform_6(%arg0: i32) -> (i32, i32) {
    %c0_i32 = arith.constant 0 : i32
    %c0_i32_0 = arith.constant 0 : i32
    %c0_i32_1 = arith.constant 0 : i32
    return %c0_i32, %c0_i32_0 : i32, i32
  }
  func.func @transform_7(%arg0: i32) -> (i32, i32) {
    %c0_i32 = arith.constant 0 : i32
    %c0_i32_0 = arith.constant 0 : i32
    %c0_i32_1 = arith.constant 0 : i32
    return %c0_i32, %c0_i32_0 : i32, i32
  }
  func.func @transform_8(%arg0: i32) -> (i32, i32) {
    %c0_i32 = arith.constant 0 : i32
    %c0_i32_0 = arith.constant 0 : i32
    %c0_i32_1 = arith.constant 0 : i32
    return %c0_i32, %c0_i32_0 : i32, i32
  }
  func.func @transform_9(%arg0: i32) -> (i32, i32, i32) {
    %c0_i32 = arith.constant 0 : i32
    %c0_i32_0 = arith.constant 0 : i32
    %c0_i32_1 = arith.constant 0 : i32
    return %c0_i32, %arg0, %c0_i32_0 : i32, i32, i32
  }
  func.func @transform_10(%arg0: i32) -> (i32, i32, i32) {
    %c0_i32 = arith.constant 0 : i32
    %c0_i32_0 = arith.constant 0 : i32
    %c0_i32_1 = arith.constant 0 : i32
    return %c0_i32, %arg0, %c0_i32_0 : i32, i32, i32
  }
  func.func @transform_11(%arg0: i32) -> (i32, i32, i32) {
    %c0_i32 = arith.constant 0 : i32
    %c0_i32_0 = arith.constant 0 : i32
    %c0_i32_1 = arith.constant 0 : i32
    return %c0_i32, %arg0, %c0_i32_0 : i32, i32, i32
  }
}

</mosaic_0001>

<llo_original>
// kernel: tpu_custom_call.1
$region0: #{tpu_custom_call.1}
  #allocation0 [shape = 'u32[]', space=smem, size = 0x4, offset = 0x4, fixed_abs, tag = 'smem constant byte address 0x4 - core index']
  #allocation1 [shape = 'u32[144,128]{1,0:T(1,128)}', space=vmem, size = 0x12000, scoped, tag = 'internal scratch']
  #allocation2 [shape = 'f32[64,128]{1,0:T(8,128)}', space=vmem, size = 0x8000, scoped, tag = 'scratch operand']
  #allocation3 [shape = 'f32[64,32]{1,0:T(8,128)}', space=vmem, size = 0x8000, scoped, tag = 'scratch operand']
  %s0 = inlined_call_operand.hbm [shape: f32[8,8,32], index: 0, kind: input, shape index: {}]
  %s1 = inlined_call_operand.hbm [shape: f32[32,128], index: 1, kind: input, shape index: {}]
  %s2 = inlined_call_operand.hbm [shape: f32[32,128], index: 2, kind: input, shape index: {}]
  %s3 = inlined_call_operand.vmem [shape: f32[1,128], index: 3, kind: input, shape index: {}]
  %s4 = inlined_call_operand.hbm [shape: f32[32,128], index: 4, kind: input, shape index: {}]
  %s5 = inlined_call_operand.hbm [shape: f32[32,128], index: 5, kind: input, shape index: {}]
  %s6 = inlined_call_operand.vmem [shape: f32[1,128], index: 6, kind: input, shape index: {}]
  %s7 = inlined_call_operand.hbm [shape: f32[32,128], index: 7, kind: input, shape index: {}]
  %s8 = inlined_call_operand.vmem [shape: f32[1,128], index: 8, kind: input, shape index: {}]
  %s9 = inlined_call_operand.hbm [shape: f32[8,8,128], index: 9, kind: output, shape index: {0}]
  %s10 = inlined_call_operand.hbm [shape: f32[2,8,32], index: 10, kind: output, shape index: {1}]
  %s11 = inlined_call_operand.hbm [shape: f32[2,8,32], index: 11, kind: output, shape index: {2}]
  %12 = xla_tuple %s9, %s10, %s11
  %s13 = sld [smem:[#allocation0]]
  $region86: #{tpu_custom_call.1} parent=0
    _
  %s15 = ssub.s32 1, %s13
  %s16 = scalar_select 0, %s15, %s13
  $region1: #{tpu_custom_call.1} parent=0
    #allocation4 [shape = 'u8[32768]{0}', space=vmem, size = 0x8000, scoped, tag = 'input window, operand 0, single buffered']
    #allocation5 [shape = 's32[1]{0}', space=sflag, size = 0x4, scoped, tag = 'scoped memory for tpu_custom_call.1']
    #allocation6 [shape = 's32[1]{0}', space=sflag, size = 0x4, scoped, tag = 'scoped memory for tpu_custom_call.1']
    #allocation7 [shape = 'u8[16384]{0}', space=vmem, size = 0x4000, scoped, tag = 'input window, operand 1, single buffered']
    #allocation8 [shape = 's32[1]{0}', space=sflag, size = 0x4, scoped, tag = 'scoped memory for tpu_custom_call.1']
    #allocation9 [shape = 'u8[16384]{0}', space=vmem, size = 0x4000, scoped, tag = 'input window, operand 2, single buffered']
    #allocation10 [shape = 'u8[16384]{0}', space=vmem, size = 0x4000, scoped, tag = 'input window, operand 4, single buffered']
    #allocation11 [shape = 's32[1]{0}', space=sflag, size = 0x4, scoped, tag = 'scoped memory for tpu_custom_call.1']
    #allocation12 [shape = 'u8[16384]{0}', space=vmem, size = 0x4000, scoped, tag = 'input window, operand 5, single buffered']
    #allocation13 [shape = 'u8[16384]{0}', space=vmem, size = 0x4000, scoped, tag = 'input window, operand 7, single buffered']
    #allocation14 [shape = 's32[1]{0}', space=sflag, size = 0x4, scoped, tag = 'scoped memory for tpu_custom_call.1']
    #allocation15 [shape = 'u8[32768]{0}', space=vmem, size = 0x8000, scoped, tag = 'output window, operand 0, single buffered']
    #allocation16 [shape = 'u8[8192]{0}', space=vmem, size = 0x2000, scoped, tag = 'output window, operand 1, single buffered']
    #allocation17 [shape = 's32[1]{0}', space=sflag, size = 0x4, scoped, tag = 'scoped memory for tpu_custom_call.1']
    #allocation18 [shape = 'u8[8192]{0}', space=vmem, size = 0x2000, scoped, tag = 'output window, operand 2, single buffered']
    %17 = vsyncpa [#allocation5], 0
    %18 = vsyncpa [#allocation8], 0
    %19 = vsyncpa [#allocation11], 0
    %20 = vsyncpa [#allocation14], 0
    %21 = vsyncpa [#allocation6], 0
    %22 = vsyncpa [#allocation17], 0
    // Predicated region
    $region2: #{tpu_custom_call.1} parent=1 // pred_check
      _
    $region3: #{tpu_custom_call.1} parent=1 // pred_check_branch
      %24 = sbr.rel (0) target = $region5
    $region4: #{tpu_custom_call.1} parent=1 // pred_region
      %s26 = ssub.s32 1024, 1024
      %27 = vsyncadd [#allocation5], %s26
      %s28 = sshll.u32 [#allocation4], 4
      %s29 = int_to_ptr.vmem [resolvable:$true] %s28
      %34 = dma.hbm_to_vmem [thread:$0]  %s0, 1024, %s29, [#allocation5], 128, 128, 8
    $region5: #{tpu_custom_call.1} parent=1 // pred_fallthru
      _
    // Predicated region
    $region6: #{tpu_custom_call.1} parent=1 // pred_check
      _
    $region7: #{tpu_custom_call.1} parent=1 // pred_check_branch
      %36 = sbr.rel (0) target = $region9
    $region8: #{tpu_custom_call.1} parent=1 // pred_region
      %s38 = ssub.s32 512, 512
      %39 = vsyncadd [#allocation8], %s38
      %s40 = sshll.u32 [#allocation7], 4
      %s41 = int_to_ptr.vmem [resolvable:$true] %s40
      %46 = dma.hbm_to_vmem [thread:$0]  %s1, 512, %s41, [#allocation8], 128, 128, 8
    $region9: #{tpu_custom_call.1} parent=1 // pred_fallthru
      _
    // Predicated region
    $region10: #{tpu_custom_call.1} parent=1 // pred_check
      _
    $region11: #{tpu_custom_call.1} parent=1 // pred_check_branch
      %48 = sbr.rel (0) target = $region13
    $region12: #{tpu_custom_call.1} parent=1 // pred_region
      %s50 = ssub.s32 512, 512
      %51 = vsyncadd [#allocation8], %s50
      %s52 = sshll.u32 [#allocation9], 4
      %s53 = int_to_ptr.vmem [resolvable:$true] %s52
      %58 = dma.hbm_to_vmem [thread:$0]  %s2, 512, %s53, [#allocation8], 128, 128, 8
    $region13: #{tpu_custom_call.1} parent=1 // pred_fallthru
      _
    // Predicated region
    $region14: #{tpu_custom_call.1} parent=1 // pred_check
      _
    $region15: #{tpu_custom_call.1} parent=1 // pred_check_branch
      %60 = sbr.rel (0) target = $region17
    $region16: #{tpu_custom_call.1} parent=1 // pred_region
      _
    $region17: #{tpu_custom_call.1} parent=1 // pred_fallthru
      _
    // Predicated region
    $region18: #{tpu_custom_call.1} parent=1 // pred_check
      _
    $region19: #{tpu_custom_call.1} parent=1 // pred_check_branch
      %62 = sbr.rel (0) target = $region21
    $region20: #{tpu_custom_call.1} parent=1 // pred_region
      %s64 = ssub.s32 512, 512
      %65 = vsyncadd [#allocation11], %s64
      %s66 = sshll.u32 [#allocation10], 4
      %s67 = int_to_ptr.vmem [resolvable:$true] %s66
      %72 = dma.hbm_to_vmem [thread:$0]  %s4, 512, %s67, [#allocation11], 128, 128, 8
    $region21: #{tpu_custom_call.1} parent=1 // pred_fallthru
      _
    // Predicated region
    $region22: #{tpu_custom_call.1} parent=1 // pred_check
      _
    $region23: #{tpu_custom_call.1} parent=1 // pred_check_branch
      %74 = sbr.rel (0) target = $region25
    $region24: #{tpu_custom_call.1} parent=1 // pred_region
      %s76 = ssub.s32 512, 512
      %77 = vsyncadd [#allocation11], %s76
      %s78 = sshll.u32 [#allocation12], 4
      %s79 = int_to_ptr.vmem [resolvable:$true] %s78
      %84 = dma.hbm_to_vmem [thread:$0]  %s5, 512, %s79, [#allocation11], 128, 128, 8
    $region25: #{tpu_custom_call.1} parent=1 // pred_fallthru
      _
    // Predicated region
    $region26: #{tpu_custom_call.1} parent=1 // pred_check
      _
    $region27: #{tpu_custom_call.1} parent=1 // pred_check_branch
      %86 = sbr.rel (0) target = $region29
    $region28: #{tpu_custom_call.1} parent=1 // pred_region
      _
    $region29: #{tpu_custom_call.1} parent=1 // pred_fallthru
      _
    // Predicated region
    $region30: #{tpu_custom_call.1} parent=1 // pred_check
      _
    $region31: #{tpu_custom_call.1} parent=1 // pred_check_branch
      %88 = sbr.rel (0) target = $region33
    $region32: #{tpu_custom_call.1} parent=1 // pred_region
      %s90 = ssub.s32 512, 512
      %91 = vsyncadd [#allocation14], %s90
      %s92 = sshll.u32 [#allocation13], 4
      %s93 = int_to_ptr.vmem [resolvable:$true] %s92
      %98 = dma.hbm_to_vmem [thread:$0]  %s7, 512, %s93, [#allocation14], 128, 128, 8
    $region33: #{tpu_custom_call.1} parent=1 // pred_fallthru
      _
    // Predicated region
    $region34: #{tpu_custom_call.1} parent=1 // pred_check
      _
    $region35: #{tpu_custom_call.1} parent=1 // pred_check_branch
      %100 = sbr.rel (0) target = $region37
    $region36: #{tpu_custom_call.1} parent=1 // pred_region
      _
    $region37: #{tpu_custom_call.1} parent=1 // pred_fallthru
      _
    // Predicated region
    $region38: #{tpu_custom_call.1} parent=1 // pred_check
      _
    $region39: #{tpu_custom_call.1} parent=1 // pred_check_branch
      %102 = sbr.rel (0) target = $region41
    $region40: #{tpu_custom_call.1} parent=1 // pred_region
      %103 = dma.done [#allocation5], 1024
    $region41: #{tpu_custom_call.1} parent=1 // pred_fallthru
      _
    // Predicated region
    $region42: #{tpu_custom_call.1} parent=1 // pred_check
      _
    $region43: #{tpu_custom_call.1} parent=1 // pred_check_branch
      %105 = sbr.rel (0) target = $region45
    $region44: #{tpu_custom_call.1} parent=1 // pred_region
      %106 = dma.done [#allocation8], 512
    $region45: #{tpu_custom_call.1} parent=1 // pred_fallthru
      _
    // Predicated region
    $region46: #{tpu_custom_call.1} parent=1 // pred_check
      _
    $region47: #{tpu_custom_call.1} parent=1 // pred_check_branch
      %108 = sbr.rel (0) target = $region49
    $region48: #{tpu_custom_call.1} parent=1 // pred_region
      %109 = dma.done [#allocation8], 512
    $region49: #{tpu_custom_call.1} parent=1 // pred_fallthru
      _
    // Predicated region
    $region50: #{tpu_custom_call.1} parent=1 // pred_check
      _
    $region51: #{tpu_custom_call.1} parent=1 // pred_check_branch
      %111 = sbr.rel (0) target = $region53
    $region52: #{tpu_custom_call.1} parent=1 // pred_region
      %112 = dma.done [#allocation11], 512
    $region53: #{tpu_custom_call.1} parent=1 // pred_fallthru
      _
    // Predicated region
    $region54: #{tpu_custom_call.1} parent=1 // pred_check
      _
    $region55: #{tpu_custom_call.1} parent=1 // pred_check_branch
      %114 = sbr.rel (0) target = $region57
    $region56: #{tpu_custom_call.1} parent=1 // pred_region
      %115 = dma.done [#allocation11], 512
    $region57: #{tpu_custom_call.1} parent=1 // pred_fallthru
      _
    // Predicated region
    $region58: #{tpu_custom_call.1} parent=1 // pred_check
      _
    $region59: #{tpu_custom_call.1} parent=1 // pred_check_branch
      %117 = sbr.rel (0) target = $region61
    $region60: #{tpu_custom_call.1} parent=1 // pred_region
      %118 = dma.done [#allocation14], 512
    $region61: #{tpu_custom_call.1} parent=1 // pred_fallthru
      _
    %v119 = vld [vmem:[#allocation9] sm:$0xff]
    %v120 = vld [vmem:[#allocation9 + $0x8] sm:$0xff]
    %v121 = vld [vmem:[#allocation9 + $0x10] sm:$0xff]
    %v122 = vld [vmem:[#allocation9 + $0x18] sm:$0xff]
    %v123 = vld [vmem:[#allocation10] sm:$0xff]
    %v124 = vld [vmem:[#allocation10 + $0x8] sm:$0xff]
    %v125 = vld [vmem:[#allocation10 + $0x10] sm:$0xff]
    %v126 = vld [vmem:[#allocation10 + $0x18] sm:$0xff]
    %v127 = vld [vmem:[#allocation12] sm:$0xff]
    %v128 = vld [vmem:[#allocation12 + $0x8] sm:$0xff]
    %v129 = vld [vmem:[#allocation12 + $0x10] sm:$0xff]
    %v130 = vld [vmem:[#allocation12 + $0x18] sm:$0xff]
    %v131 = vld [vmem:[%s6] sm:$0x1]
    %v133 = vlaneseq
    %v134 = vshrl.u32 %v133, 7
    %v135 = vsub.s32 0, %v134
    %v136 = vrot.slane %v131, %v135
    %v138 = vlaneseq
    %v139 = vand.u32 %v138, 127
    %vm140 = vcmp.ge.s32.totalorder %v139, 64
    %vm141 = vcmp.lt.s32.totalorder %v139, 96
    %vm142 = vmand %vm140, %vm141
    %v143 = vsel %vm142, 1.0, 0.5
    %v144 = vsel %vm142, 0.0, 0.5
    %v145 = vld [vmem:[#allocation4] sm:$0xff]
    %v146 = vld [vmem:[#allocation4 + $0x8] sm:$0xff]
    %v147 = vld [vmem:[#allocation4 + $0x10] sm:$0xff]
    %v148 = vld [vmem:[#allocation4 + $0x18] sm:$0xff]
    %v149 = vld [vmem:[#allocation4 + $0x20] sm:$0xff]
    %v150 = vld [vmem:[#allocation4 + $0x28] sm:$0xff]
    %v151 = vld [vmem:[#allocation4 + $0x30] sm:$0xff]
    %v152 = vld [vmem:[#allocation4 + $0x38] sm:$0xff]
    %v153 = vld [vmem:[#allocation7] sm:$0xff]
    %v154 = vld [vmem:[#allocation7 + $0x8] sm:$0xff]
    %v155 = vld [vmem:[#allocation7 + $0x10] sm:$0xff]
    %v156 = vld [vmem:[#allocation7 + $0x18] sm:$0xff]
    %v157 = vld [vmem:[%s3] sm:$0x1]
    %v159 = vlaneseq
    %v160 = vshrl.u32 %v159, 7
    %v161 = vsub.s32 0, %v160
    %v162 = vrot.slane %v157, %v161
    %vm164 = vcmask 261120
    %v166 = vsel %vm164, %v145, 0
    %v169 = vsel %vm164, %v146, 0
    %v172 = vsel %vm164, %v147, 0
    %v175 = vsel %vm164, %v148, 0
    %v178 = vsel %vm164, %v149, 0
    %v181 = vsel %vm164, %v150, 0
    %v184 = vsel %vm164, %v151, 0
    %v187 = vsel %vm164, %v152, 0
    %189 = vmatprep.subr.mxu0 0.0
    %190 = vmatpush1.msra.mxu0 %v153
    %191 = vmatprep.subr.mxu0 0.0
    %192 = vmatpush1.msra.mxu0 %v154
    %193 = vmatprep.subr.mxu0 0.0
    %194 = vmatpush1.msra.mxu0 %v155
    %195 = vmatprep.subr.mxu0 0.0
    %196 = vmatpush1.msra.mxu0 %v156
    %197 = vmatprep.subr.mxu0 0.0
    %198 = vmatpush1.msra.mxu0 0.0
    %199 = vmatprep.subr.mxu0 0.0
    %200 = vmatpush1.msra.mxu0 0.0
    %201 = vmatprep.subr.mxu0 0.0
    %202 = vmatpush1.msra.mxu0 0.0
    %203 = vmatprep.subr.mxu0 0.0
    %204 = vmatpush1.msra.mxu0 0.0
    %205 = vmatprep.subr.mxu0 0.0
    %206 = vmatpush1.msra.mxu0 0.0
    %207 = vmatprep.subr.mxu0 0.0
    %208 = vmatpush1.msra.mxu0 0.0
    %209 = vmatprep.subr.mxu0 0.0
    %210 = vmatpush1.msra.mxu0 0.0
    %211 = vmatprep.subr.mxu0 0.0
    %212 = vmatpush1.msra.mxu0 0.0
    %213 = vmatprep.subr.mxu0 0.0
    %214 = vmatpush1.msra.mxu0 0.0
    %215 = vmatprep.subr.mxu0 0.0
    %216 = vmatpush1.msra.mxu0 0.0
    %217 = vmatprep.subr.mxu0 0.0
    %218 = vmatpush1.msra.mxu0 0.0
    %219 = vmatprep.subr.mxu0 0.0
    %220 = vmatpush1.msra.mxu0 0.0
    %221 = vmatprep.subr.mxu0 0.0
    %222 = vmatpush1.msra.mxu0 0.0
    %223 = vmatprep.subr.mxu0 0.0
    %224 = vmatpush1.msra.mxu0 0.0
    %225 = vmatprep.subr.mxu0 0.0
    %226 = vmatpush1.msra.mxu0 0.0
    %227 = vmatprep.subr.mxu0 0.0
    %228 = vmatpush1.msra.mxu0 0.0
    %229 = vmatprep.subr.mxu0 0.0
    %230 = vmatpush1.msra.mxu0 0.0
    %231 = vmatprep.subr.mxu0 0.0
    %232 = vmatpush1.msra.mxu0 0.0
    %233 = vmatprep.subr.mxu0 0.0
    %234 = vmatpush1.msra.mxu0 0.0
    %235 = vmatprep.subr.mxu0 0.0
    %236 = vmatpush1.msra.mxu0 0.0
    %237 = vmatprep.subr.mxu0 0.0
    %238 = vmatpush1.msra.mxu0 0.0
    %239 = vmatprep.subr.mxu0 0.0
    %240 = vmatpush1.msra.mxu0 0.0
    %241 = vmatprep.subr.mxu0 0.0
    %242 = vmatpush1.msra.mxu0 0.0
    %243 = vmatprep.subr.mxu0 0.0
    %244 = vmatpush1.msra.mxu0 0.0
    %245 = vmatprep.subr.mxu0 0.0
    %246 = vmatpush1.msra.mxu0 0.0
    %247 = vmatprep.subr.mxu0 0.0
    %248 = vmatpush1.msra.mxu0 0.0
    %249 = vmatprep.subr.mxu0 0.0
    %250 = vmatpush1.msra.mxu0 0.0
    %251 = vmatprep.subr.mxu0 0.0
    %252 = vmatpush1.msra.mxu0 0.0
    %253 = vmatprep.mubr.f32.mxu0 0.0
    %254 = vmatmul.mubr.f32.gmra.mrb[0].mxu0 %v166
    %v255 = vpop.f32.mrb[0].mxu0
    %v256 = vadd.f32 %v162, %v255
    %v257 = vpop.f32.mrb[0].mxu0
    %258 = vmatprep.mubr.f32.mxu0 0.0
    %259 = vmatmul.mubr.f32.gmra.mrb[0].mxu0 %v169
    %v260 = vpop.f32.mrb[0].mxu0
    %v261 = vadd.f32 %v162, %v260
    %v262 = vpop.f32.mrb[0].mxu0
    %263 = vmatprep.mubr.f32.mxu0 0.0
    %264 = vmatmul.mubr.f32.gmra.mrb[0].mxu0 %v172
    %v265 = vpop.f32.mrb[0].mxu0
    %v266 = vadd.f32 %v162, %v265
    %v267 = vpop.f32.mrb[0].mxu0
    %268 = vmatprep.mubr.f32.mxu0 0.0
    %269 = vmatmul.mubr.f32.gmra.mrb[0].mxu0 %v175
    %v270 = vpop.f32.mrb[0].mxu0
    %v271 = vadd.f32 %v162, %v270
    %v272 = vpop.f32.mrb[0].mxu0
    %273 = vmatprep.mubr.f32.mxu0 0.0
    %274 = vmatmul.mubr.f32.gmra.mrb[0].mxu0 %v178
    %v275 = vpop.f32.mrb[0].mxu0
    %v276 = vadd.f32 %v162, %v275
    %v277 = vpop.f32.mrb[0].mxu0
    %278 = vmatprep.mubr.f32.mxu0 0.0
    %279 = vmatmul.mubr.f32.gmra.mrb[0].mxu0 %v181
    %v280 = vpop.f32.mrb[0].mxu0
    %v281 = vadd.f32 %v162, %v280
    %v282 = vpop.f32.mrb[0].mxu0
    %283 = vmatprep.mubr.f32.mxu0 0.0
    %284 = vmatmul.mubr.f32.gmra.mrb[0].mxu0 %v184
    %v285 = vpop.f32.mrb[0].mxu0
    %v286 = vadd.f32 %v162, %v285
    %v287 = vpop.f32.mrb[0].mxu0
    %288 = vmatprep.mubr.f32.mxu0 0.0
    %289 = vmatmul.mubr.f32.gmra.mrb[0].mxu0 %v187
    %v290 = vpop.f32.mrb[0].mxu0
    %v291 = vadd.f32 %v162, %v290
    %v292 = vpop.f32.mrb[0].mxu0
    %293 = vdwg.mxu0
    %294 = vst [vmem:[#allocation2] sm:$0xff] %v256
    %295 = vst [vmem:[#allocation2 + $0x8] sm:$0xff] %v261
    %296 = vst [vmem:[#allocation2 + $0x10] sm:$0xff] %v266
    %297 = vst [vmem:[#allocation2 + $0x18] sm:$0xff] %v271
    %298 = vst [vmem:[#allocation2 + $0x20] sm:$0xff] %v276
    %299 = vst [vmem:[#allocation2 + $0x28] sm:$0xff] %v281
    %300 = vst [vmem:[#allocation2 + $0x30] sm:$0xff] %v286
    %301 = vst [vmem:[#allocation2 + $0x38] sm:$0xff] %v291
    %v302 = vld [vmem:[#allocation2] sm:$0xff]
    %v304 = vsel %vm164, 0.0, 0
    %306 = vmatprep.subr.mxu0 0.0
    %307 = vmatpush1.msra.mxu0 %v119
    %308 = vmatprep.subr.mxu0 0.0
    %309 = vmatpush1.msra.mxu0 %v120
    %310 = vmatprep.subr.mxu0 0.0
    %311 = vmatpush1.msra.mxu0 %v121
    %312 = vmatprep.subr.mxu0 0.0
    %313 = vmatpush1.msra.mxu0 %v122
    %314 = vmatprep.subr.mxu0 0.0
    %315 = vmatpush1.msra.mxu0 0.0
    %316 = vmatprep.subr.mxu0 0.0
    %317 = vmatpush1.msra.mxu0 0.0
    %318 = vmatprep.subr.mxu0 0.0
    %319 = vmatpush1.msra.mxu0 0.0
    %320 = vmatprep.subr.mxu0 0.0
    %321 = vmatpush1.msra.mxu0 0.0
    %322 = vmatprep.subr.mxu0 0.0
    %323 = vmatpush1.msra.mxu0 0.0
    %324 = vmatprep.subr.mxu0 0.0
    %325 = vmatpush1.msra.mxu0 0.0
    %326 = vmatprep.subr.mxu0 0.0
    %327 = vmatpush1.msra.mxu0 0.0
    %328 = vmatprep.subr.mxu0 0.0
    %329 = vmatpush1.msra.mxu0 0.0
    %330 = vmatprep.subr.mxu0 0.0
    %331 = vmatpush1.msra.mxu0 0.0
    %332 = vmatprep.subr.mxu0 0.0
    %333 = vmatpush1.msra.mxu0 0.0
    %334 = vmatprep.subr.mxu0 0.0
    %335 = vmatpush1.msra.mxu0 0.0
    %336 = vmatprep.subr.mxu0 0.0
    %337 = vmatpush1.msra.mxu0 0.0
    %338 = vmatprep.subr.mxu0 0.0
    %339 = vmatpush1.msra.mxu0 0.0
    %340 = vmatprep.subr.mxu0 0.0
    %341 = vmatpush1.msra.mxu0 0.0
    %342 = vmatprep.subr.mxu0 0.0
    %343 = vmatpush1.msra.mxu0 0.0
    %344 = vmatprep.subr.mxu0 0.0
    %345 = vmatpush1.msra.mxu0 0.0
    %346 = vmatprep.subr.mxu0 0.0
    %347 = vmatpush1.msra.mxu0 0.0
    %348 = vmatprep.subr.mxu0 0.0
    %349 = vmatpush1.msra.mxu0 0.0
    %350 = vmatprep.subr.mxu0 0.0
    %351 = vmatpush1.msra.mxu0 0.0
    %352 = vmatprep.subr.mxu0 0.0
    %353 = vmatpush1.msra.mxu0 0.0
    %354 = vmatprep.subr.mxu0 0.0
    %355 = vmatpush1.msra.mxu0 0.0
    %356 = vmatprep.subr.mxu0 0.0
    %357 = vmatpush1.msra.mxu0 0.0
    %358 = vmatprep.subr.mxu0 0.0
    %359 = vmatpush1.msra.mxu0 0.0
    %360 = vmatprep.subr.mxu0 0.0
    %361 = vmatpush1.msra.mxu0 0.0
    %362 = vmatprep.subr.mxu0 0.0
    %363 = vmatpush1.msra.mxu0 0.0
    %364 = vmatprep.subr.mxu0 0.0
    %365 = vmatpush1.msra.mxu0 0.0
    %366 = vmatprep.subr.mxu0 0.0
    %367 = vmatpush1.msra.mxu0 0.0
    %368 = vmatprep.subr.mxu0 0.0
    %369 = vmatpush1.msra.mxu0 0.0
    %370 = vmatprep.mubr.f32.mxu0 0.0
    %371 = vmatmul.mubr.f32.gmra.mrb[0].mxu0 %v304
    %v372 = vpop.f32.mrb[0].mxu0
    %v373 = vadd.f32 0.0, %v372
    %v374 = vpop.f32.mrb[0].mxu0
    %375 = vdwg.mxu0
    %v376 = vadd.f32 %v302, %v373
    %v377 = vmul.f32 %v376, %v143
    %v378 = vtanh.pop %v377
    %v379 = vmul.f32 %v378, %v143
    %v380 = vadd.f32 %v379, %v144
    %v381 = vmul.f32 %v380, 0.0
    %383 = vrot.lane.b32.xlu0 %v380, 64
    %v384 = vpop.permute.xlu0 %383
    %v386 = vmul.f32 %v380, %v384
    %388 = vrot.lane.b32.xlu0 %v386, 32
    %v389 = vpop.permute.xlu0 %388
    %v391 = vadd.f32 %v381, %v389
    %v392 = vtanh.pop %v391
    %394 = vrot.lane.b32.xlu0 %v392, 64
    %v395 = vpop.permute.xlu0 %394
    %v397 = vmul.f32 %v380, %v395
    %398 = vmatprep.subr.mxu0 0.0
    %399 = vmatpush1.msra.mxu0 %v127
    %400 = vmatprep.subr.mxu0 0.0
    %401 = vmatpush1.msra.mxu0 %v128
    %402 = vmatprep.subr.mxu0 0.0
    %403 = vmatpush1.msra.mxu0 %v129
    %404 = vmatprep.subr.mxu0 0.0
    %405 = vmatpush1.msra.mxu0 %v130
    %406 = vmatprep.subr.mxu0 0.0
    %407 = vmatpush1.msra.mxu0 0.0
    %408 = vmatprep.subr.mxu0 0.0
    %409 = vmatpush1.msra.mxu0 0.0
    %410 = vmatprep.subr.mxu0 0.0
    %411 = vmatpush1.msra.mxu0 0.0
    %412 = vmatprep.subr.mxu0 0.0
    %413 = vmatpush1.msra.mxu0 0.0
    %414 = vmatprep.subr.mxu0 0.0
    %415 = vmatpush1.msra.mxu0 0.0
    %416 = vmatprep.subr.mxu0 0.0
    %417 = vmatpush1.msra.mxu0 0.0
    %418 = vmatprep.subr.mxu0 0.0
    %419 = vmatpush1.msra.mxu0 0.0
    %420 = vmatprep.subr.mxu0 0.0
    %421 = vmatpush1.msra.mxu0 0.0
    %422 = vmatprep.subr.mxu0 0.0
    %423 = vmatpush1.msra.mxu0 0.0
    %424 = vmatprep.subr.mxu0 0.0
    %425 = vmatpush1.msra.mxu0 0.0
    %426 = vmatprep.subr.mxu0 0.0
    %427 = vmatpush1.msra.mxu0 0.0
    %428 = vmatprep.subr.mxu0 0.0
    %429 = vmatpush1.msra.mxu0 0.0
    %430 = vmatprep.subr.mxu0 0.0
    %431 = vmatpush1.msra.mxu0 0.0
    %432 = vmatprep.subr.mxu0 0.0
    %433 = vmatpush1.msra.mxu0 0.0
    %434 = vmatprep.subr.mxu0 0.0
    %435 = vmatpush1.msra.mxu0 0.0
    %436 = vmatprep.subr.mxu0 0.0
    %437 = vmatpush1.msra.mxu0 0.0
    %438 = vmatprep.subr.mxu0 0.0
    %439 = vmatpush1.msra.mxu0 0.0
    %440 = vmatprep.subr.mxu0 0.0
    %441 = vmatpush1.msra.mxu0 0.0
    %442 = vmatprep.subr.mxu0 0.0
    %443 = vmatpush1.msra.mxu0 0.0
    %444 = vmatprep.subr.mxu0 0.0
    %445 = vmatpush1.msra.mxu0 0.0
    %446 = vmatprep.subr.mxu0 0.0
    %447 = vmatpush1.msra.mxu0 0.0
    %448 = vmatprep.subr.mxu0 0.0
    %449 = vmatpush1.msra.mxu0 0.0
    %450 = vmatprep.subr.mxu0 0.0
    %451 = vmatpush1.msra.mxu0 0.0
    %452 = vmatprep.subr.mxu0 0.0
    %453 = vmatpush1.msra.mxu0 0.0
    %454 = vmatprep.subr.mxu0 0.0
    %455 = vmatpush1.msra.mxu0 0.0
    %456 = vmatprep.subr.mxu0 0.0
    %457 = vmatpush1.msra.mxu0 0.0
    %458 = vmatprep.subr.mxu0 0.0
    %459 = vmatpush1.msra.mxu0 0.0
    %460 = vmatprep.subr.mxu0 0.0
    %461 = vmatpush1.msra.mxu0 0.0
    %462 = vmatprep.mubr.f32.mxu0 0.0
    %463 = vmatmul.mubr.f32.gmra.mrb[0].mxu0 %v304
    %v464 = vpop.f32.mrb[0].mxu0
    %v465 = vadd.f32 0.0, %v464
    %v466 = vpop.f32.mrb[0].mxu0
    %467 = vdwg.mxu0
    %469 = vrot.lane.b32.xlu0 %v397, 32
    %v470 = vpop.permute.xlu0 %469
    %v471 = vsel %vm164, %v470, 0
    %473 = vmatprep.subr.mxu0 0.0
    %474 = vmatpush1.msra.mxu0 %v123
    %475 = vmatprep.subr.mxu0 0.0
    %476 = vmatpush1.msra.mxu0 %v124
    %477 = vmatprep.subr.mxu0 0.0
    %478 = vmatpush1.msra.mxu0 %v125
    %479 = vmatprep.subr.mxu0 0.0
    %480 = vmatpush1.msra.mxu0 %v126
    %481 = vmatprep.subr.mxu0 0.0
    %482 = vmatpush1.msra.mxu0 0.0
    %483 = vmatprep.subr.mxu0 0.0
    %484 = vmatpush1.msra.mxu0 0.0
    %485 = vmatprep.subr.mxu0 0.0
    %486 = vmatpush1.msra.mxu0 0.0
    %487 = vmatprep.subr.mxu0 0.0
    %488 = vmatpush1.msra.mxu0 0.0
    %489 = vmatprep.subr.mxu0 0.0
    %490 = vmatpush1.msra.mxu0 0.0
    %491 = vmatprep.subr.mxu0 0.0
    %492 = vmatpush1.msra.mxu0 0.0
    %493 = vmatprep.subr.mxu0 0.0
    %494 = vmatpush1.msra.mxu0 0.0
    %495 = vmatprep.subr.mxu0 0.0
    %496 = vmatpush1.msra.mxu0 0.0
    %497 = vmatprep.subr.mxu0 0.0
    %498 = vmatpush1.msra.mxu0 0.0
    %499 = vmatprep.subr.mxu0 0.0
    %500 = vmatpush1.msra.mxu0 0.0
    %501 = vmatprep.subr.mxu0 0.0
    %502 = vmatpush1.msra.mxu0 0.0
    %503 = vmatprep.subr.mxu0 0.0
    %504 = vmatpush1.msra.mxu0 0.0
    %505 = vmatprep.subr.mxu0 0.0
    %506 = vmatpush1.msra.mxu0 0.0
    %507 = vmatprep.subr.mxu0 0.0
    %508 = vmatpush1.msra.mxu0 0.0
    %509 = vmatprep.subr.mxu0 0.0
    %510 = vmatpush1.msra.mxu0 0.0
    %511 = vmatprep.subr.mxu0 0.0
    %512 = vmatpush1.msra.mxu0 0.0
    %513 = vmatprep.subr.mxu0 0.0
    %514 = vmatpush1.msra.mxu0 0.0
    %515 = vmatprep.subr.mxu0 0.0
    %516 = vmatpush1.msra.mxu0 0.0
    %517 = vmatprep.subr.mxu0 0.0
    %518 = vmatpush1.msra.mxu0 0.0
    %519 = vmatprep.subr.mxu0 0.0
    %520 = vmatpush1.msra.mxu0 0.0
    %521 = vmatprep.subr.mxu0 0.0
    %522 = vmatpush1.msra.mxu0 0.0
    %523 = vmatprep.subr.mxu0 0.0
    %524 = vmatpush1.msra.mxu0 0.0
    %525 = vmatprep.subr.mxu0 0.0
    %526 = vmatpush1.msra.mxu0 0.0
    %527 = vmatprep.subr.mxu0 0.0
    %528 = vmatpush1.msra.mxu0 0.0
    %529 = vmatprep.subr.mxu0 0.0
    %530 = vmatpush1.msra.mxu0 0.0
    %531 = vmatprep.subr.mxu0 0.0
    %532 = vmatpush1.msra.mxu0 0.0
    %533 = vmatprep.subr.mxu0 0.0
    %534 = vmatpush1.msra.mxu0 0.0
    %535 = vmatprep.subr.mxu0 0.0
    %536 = vmatpush1.msra.mxu0 0.0
    %537 = vmatprep.mubr.f32.mxu0 0.0
    %538 = vmatmul.mubr.f32.gmra.mrb[0].mxu0 %v471
    %v539 = vpop.f32.mrb[0].mxu0
    %v540 = vadd.f32 %v465, %v539
    %v541 = vpop.f32.mrb[0].mxu0
    %542 = vdwg.mxu0
    %v543 = vadd.f32 %v540, %v136
    %v544 = vmul.f32 %v543, %v143
    %v545 = vtanh.pop %v544
    %v546 = vmul.f32 %v545, %v143
    %v547 = vadd.f32 %v546, %v144
    %v548 = vmul.f32 %v547, 0.0
    %550 = vrot.lane.b32.xlu0 %v547, 64
    %v551 = vpop.permute.xlu0 %550
    %v553 = vmul.f32 %v547, %v551
    %555 = vrot.lane.b32.xlu0 %v553, 32
    %v556 = vpop.permute.xlu0 %555
    %v558 = vadd.f32 %v548, %v556
    %v559 = vtanh.pop %v558
    %561 = vrot.lane.b32.xlu0 %v559, 64
    %v562 = vpop.permute.xlu0 %561
    %v564 = vmul.f32 %v547, %v562
    %566 = vrot.lane.b32.xlu0 %v564, 32
    %v567 = vpop.permute.xlu0 %566
    %569 = vst.msk [vmem:[#allocation3] sm:$0xff] %vm164, %v567
    %s570 = scalar_lea.vmem [#allocation2], 8
    %v571 = vld [vmem:[%s570] sm:$0xff]
    %572 = vmatprep.subr.mxu0 0.0
    %573 = vmatpush1.msra.mxu0 %v119
    %574 = vmatprep.subr.mxu0 0.0
    %575 = vmatpush1.msra.mxu0 %v120
    %576 = vmatprep.subr.mxu0 0.0
    %577 = vmatpush1.msra.mxu0 %v121
    %578 = vmatprep.subr.mxu0 0.0
    %579 = vmatpush1.msra.mxu0 %v122
    %580 = vmatprep.subr.mxu0 0.0
    %581 = vmatpush1.msra.mxu0 0.0
    %582 = vmatprep.subr.mxu0 0.0
    %583 = vmatpush1.msra.mxu0 0.0
    %584 = vmatprep.subr.mxu0 0.0
    %585 = vmatpush1.msra.mxu0 0.0
    %586 = vmatprep.subr.mxu0 0.0
    %587 = vmatpush1.msra.mxu0 0.0
    %588 = vmatprep.subr.mxu0 0.0
    %589 = vmatpush1.msra.mxu0 0.0
    %590 = vmatprep.subr.mxu0 0.0
    %591 = vmatpush1.msra.mxu0 0.0
    %592 = vmatprep.subr.mxu0 0.0
    %593 = vmatpush1.msra.mxu0 0.0
    %594 = vmatprep.subr.mxu0 0.0
    %595 = vmatpush1.msra.mxu0 0.0
    %596 = vmatprep.subr.mxu0 0.0
    %597 = vmatpush1.msra.mxu0 0.0
    %598 = vmatprep.subr.mxu0 0.0
    %599 = vmatpush1.msra.mxu0 0.0
    %600 = vmatprep.subr.mxu0 0.0
    %601 = vmatpush1.msra.mxu0 0.0
    %602 = vmatprep.subr.mxu0 0.0
    %603 = vmatpush1.msra.mxu0 0.0
    %604 = vmatprep.subr.mxu0 0.0
    %605 = vmatpush1.msra.mxu0 0.0
    %606 = vmatprep.subr.mxu0 0.0
    %607 = vmatpush1.msra.mxu0 0.0
    %608 = vmatprep.subr.mxu0 0.0
    %609 = vmatpush1.msra.mxu0 0.0
    %610 = vmatprep.subr.mxu0 0.0
    %611 = vmatpush1.msra.mxu0 0.0
    %612 = vmatprep.subr.mxu0 0.0
    %613 = vmatpush1.msra.mxu0 0.0
    %614 = vmatprep.subr.mxu0 0.0
    %615 = vmatpush1.msra.mxu0 0.0
    %616 = vmatprep.subr.mxu0 0.0
    %617 = vmatpush1.msra.mxu0 0.0
    %618 = vmatprep.subr.mxu0 0.0
    %619 = vmatpush1.msra.mxu0 0.0
    %620 = vmatprep.subr.mxu0 0.0
    %621 = vmatpush1.msra.mxu0 0.0
    %622 = vmatprep.subr.mxu0 0.0
    %623 = vmatpush1.msra.mxu0 0.0
    %624 = vmatprep.subr.mxu0 0.0
    %625 = vmatpush1.msra.mxu0 0.0
    %626 = vmatprep.subr.mxu0 0.0
    %627 = vmatpush1.msra.mxu0 0.0
    %628 = vmatprep.subr.mxu0 0.0
    %629 = vmatpush1.msra.mxu0 0.0
    %630 = vmatprep.subr.mxu0 0.0
    %631 = vmatpush1.msra.mxu0 0.0
    %632 = vmatprep.subr.mxu0 0.0
    %633 = vmatpush1.msra.mxu0 0.0
    %634 = vmatprep.subr.mxu0 0.0
    %635 = vmatpush1.msra.mxu0 0.0
    %636 = vmatprep.mubr.f32.mxu0 0.0
    %637 = vmatmul.mubr.f32.gmra.mrb[0].mxu0 %v471
    %v638 = vpop.f32.mrb[0].mxu0
    %v639 = vadd.f32 0.0, %v638
    %v640 = vpop.f32.mrb[0].mxu0
    %641 = vdwg.mxu0
    %v642 = vadd.f32 %v571, %v639
    %v643 = vmul.f32 %v642, %v143
    %v644 = vtanh.pop %v643
    %v645 = vmul.f32 %v644, %v143
    %v646 = vadd.f32 %v645, %v144
    %v647 = vmul.f32 %v646, %v391
    %649 = vrot.lane.b32.xlu0 %v646, 64
    %v650 = vpop.permute.xlu0 %649
    %v652 = vmul.f32 %v646, %v650
    %654 = vrot.lane.b32.xlu0 %v652, 32
    %v655 = vpop.permute.xlu0 %654
    %v657 = vadd.f32 %v647, %v655
    %v658 = vtanh.pop %v657
    %660 = vrot.lane.b32.xlu0 %v658, 64
    %v661 = vpop.permute.xlu0 %660
    %v663 = vmul.f32 %v646, %v661
    %v664 = vsel %vm164, %v567, 0
    %666 = vmatprep.subr.mxu0 0.0
    %667 = vmatpush1.msra.mxu0 %v127
    %668 = vmatprep.subr.mxu0 0.0
    %669 = vmatpush1.msra.mxu0 %v128
    %670 = vmatprep.subr.mxu0 0.0
    %671 = vmatpush1.msra.mxu0 %v129
    %672 = vmatprep.subr.mxu0 0.0
    %673 = vmatpush1.msra.mxu0 %v130
    %674 = vmatprep.subr.mxu0 0.0
    %675 = vmatpush1.msra.mxu0 0.0
    %676 = vmatprep.subr.mxu0 0.0
    %677 = vmatpush1.msra.mxu0 0.0
    %678 = vmatprep.subr.mxu0 0.0
    %679 = vmatpush1.msra.mxu0 0.0
    %680 = vmatprep.subr.mxu0 0.0
    %681 = vmatpush1.msra.mxu0 0.0
    %682 = vmatprep.subr.mxu0 0.0
    %683 = vmatpush1.msra.mxu0 0.0
    %684 = vmatprep.subr.mxu0 0.0
    %685 = vmatpush1.msra.mxu0 0.0
    %686 = vmatprep.subr.mxu0 0.0
    %687 = vmatpush1.msra.mxu0 0.0
    %688 = vmatprep.subr.mxu0 0.0
    %689 = vmatpush1.msra.mxu0 0.0
    %690 = vmatprep.subr.mxu0 0.0
    %691 = vmatpush1.msra.mxu0 0.0
    %692 = vmatprep.subr.mxu0 0.0
    %693 = vmatpush1.msra.mxu0 0.0
    %694 = vmatprep.subr.mxu0 0.0
    %695 = vmatpush1.msra.mxu0 0.0
    %696 = vmatprep.subr.mxu0 0.0
    %697 = vmatpush1.msra.mxu0 0.0
    %698 = vmatprep.subr.mxu0 0.0
    %699 = vmatpush1.msra.mxu0 0.0
    %700 = vmatprep.subr.mxu0 0.0
    %701 = vmatpush1.msra.mxu0 0.0
    %702 = vmatprep.subr.mxu0 0.0
    %703 = vmatpush1.msra.mxu0 0.0
    %704 = vmatprep.subr.mxu0 0.0
    %705 = vmatpush1.msra.mxu0 0.0
    %706 = vmatprep.subr.mxu0 0.0
    %707 = vmatpush1.msra.mxu0 0.0
    %708 = vmatprep.subr.mxu0 0.0
    %709 = vmatpush1.msra.mxu0 0.0
    %710 = vmatprep.subr.mxu0 0.0
    %711 = vmatpush1.msra.mxu0 0.0
    %712 = vmatprep.subr.mxu0 0.0
    %713 = vmatpush1.msra.mxu0 0.0
    %714 = vmatprep.subr.mxu0 0.0
    %715 = vmatpush1.msra.mxu0 0.0
    %716 = vmatprep.subr.mxu0 0.0
    %717 = vmatpush1.msra.mxu0 0.0
    %718 = vmatprep.subr.mxu0 0.0
    %719 = vmatpush1.msra.mxu0 0.0
    %720 = vmatprep.subr.mxu0 0.0
    %721 = vmatpush1.msra.mxu0 0.0
    %722 = vmatprep.subr.mxu0 0.0
    %723 = vmatpush1.msra.mxu0 0.0
    %724 = vmatprep.subr.mxu0 0.0
    %725 = vmatpush1.msra.mxu0 0.0
    %726 = vmatprep.subr.mxu0 0.0
    %727 = vmatpush1.msra.mxu0 0.0
    %728 = vmatprep.subr.mxu0 0.0
    %729 = vmatpush1.msra.mxu0 0.0
    %730 = vmatprep.mubr.f32.mxu0 0.0
    %731 = vmatmul.mubr.f32.gmra.mrb[0].mxu0 %v664
    %v732 = vpop.f32.mrb[0].mxu0
    %v733 = vadd.f32 0.0, %v732
    %v734 = vpop.f32.mrb[0].mxu0
    %735 = vdwg.mxu0
    %737 = vrot.lane.b32.xlu0 %v663, 32
    %v738 = vpop.permute.xlu0 %737
    %v739 = vsel %vm164, %v738, 0
    %741 = vmatprep.subr.mxu0 0.0
    %742 = vmatpush1.msra.mxu0 %v123
    %743 = vmatprep.subr.mxu0 0.0
    %744 = vmatpush1.msra.mxu0 %v124
    %745 = vmatprep.subr.mxu0 0.0
    %746 = vmatpush1.msra.mxu0 %v125
    %747 = vmatprep.subr.mxu0 0.0
    %748 = vmatpush1.msra.mxu0 %v126
    %749 = vmatprep.subr.mxu0 0.0
    %750 = vmatpush1.msra.mxu0 0.0
    %751 = vmatprep.subr.mxu0 0.0
    %752 = vmatpush1.msra.mxu0 0.0
    %753 = vmatprep.subr.mxu0 0.0
    %754 = vmatpush1.msra.mxu0 0.0
    %755 = vmatprep.subr.mxu0 0.0
    %756 = vmatpush1.msra.mxu0 0.0
    %757 = vmatprep.subr.mxu0 0.0
    %758 = vmatpush1.msra.mxu0 0.0
    %759 = vmatprep.subr.mxu0 0.0
    %760 = vmatpush1.msra.mxu0 0.0
    %761 = vmatprep.subr.mxu0 0.0
    %762 = vmatpush1.msra.mxu0 0.0
    %763 = vmatprep.subr.mxu0 0.0
    %764 = vmatpush1.msra.mxu0 0.0
    %765 = vmatprep.subr.mxu0 0.0
    %766 = vmatpush1.msra.mxu0 0.0
    %767 = vmatprep.subr.mxu0 0.0
    %768 = vmatpush1.msra.mxu0 0.0
    %769 = vmatprep.subr.mxu0 0.0
    %770 = vmatpush1.msra.mxu0 0.0
    %771 = vmatprep.subr.mxu0 0.0
    %772 = vmatpush1.msra.mxu0 0.0
    %773 = vmatprep.subr.mxu0 0.0
    %774 = vmatpush1.msra.mxu0 0.0
    %775 = vmatprep.subr.mxu0 0.0
    %776 = vmatpush1.msra.mxu0 0.0
    %777 = vmatprep.subr.mxu0 0.0
    %778 = vmatpush1.msra.mxu0 0.0
    %779 = vmatprep.subr.mxu0 0.0
    %780 = vmatpush1.msra.mxu0 0.0
    %781 = vmatprep.subr.mxu0 0.0
    %782 = vmatpush1.msra.mxu0 0.0
    %783 = vmatprep.subr.mxu0 0.0
    %784 = vmatpush1.msra.mxu0 0.0
    %785 = vmatprep.subr.mxu0 0.0
    %786 = vmatpush1.msra.mxu0 0.0
    %787 = vmatprep.subr.mxu0 0.0
    %788 = vmatpush1.msra.mxu0 0.0
    %789 = vmatprep.subr.mxu0 0.0
    %790 = vmatpush1.msra.mxu0 0.0
    %791 = vmatprep.subr.mxu0 0.0
    %792 = vmatpush1.msra.mxu0 0.0
    %793 = vmatprep.subr.mxu0 0.0
    %794 = vmatpush1.msra.mxu0 0.0
    %795 = vmatprep.subr.mxu0 0.0
    %796 = vmatpush1.msra.mxu0 0.0
    %797 = vmatprep.subr.mxu0 0.0
    %798 = vmatpush1.msra.mxu0 0.0
    %799 = vmatprep.subr.mxu0 0.0
    %800 = vmatpush1.msra.mxu0 0.0
    %801 = vmatprep.subr.mxu0 0.0
    %802 = vmatpush1.msra.mxu0 0.0
    %803 = vmatprep.subr.mxu0 0.0
    %804 = vmatpush1.msra.mxu0 0.0
    %805 = vmatprep.mubr.f32.mxu0 0.0
    %806 = vmatmul.mubr.f32.gmra.mrb[0].mxu0 %v739
    %v807 = vpop.f32.mrb[0].mxu0
    %v808 = vadd.f32 %v733, %v807
    %v809 = vpop.f32.mrb[0].mxu0
    %810 = vdwg.mxu0
    %v811 = vadd.f32 %v808, %v136
    %v812 = vmul.f32 %v811, %v143
    %v813 = vtanh.pop %v812
    %v814 = vmul.f32 %v813, %v143
    %v815 = vadd.f32 %v814, %v144
    %v816 = vmul.f32 %v815, %v558
    %818 = vrot.lane.b32.xlu0 %v815, 64
    %v819 = vpop.permute.xlu0 %818
    %v821 = vmul.f32 %v815, %v819
    %823 = vrot.lane.b32.xlu0 %v821, 32
    %v824 = vpop.permute.xlu0 %823
    %v826 = vadd.f32 %v816, %v824
    %v827 = vtanh.pop %v826
    %829 = vrot.lane.b32.xlu0 %v827, 64
    %v830 = vpop.permute.xlu0 %829
    %v832 = vmul.f32 %v815, %v830
    %834 = vrot.lane.b32.xlu0 %v832, 32
    %v835 = vpop.permute.xlu0 %834
    %s837 = scalar_lea.vmem [#allocation3], 8
    %838 = vst.msk [vmem:[%s837] sm:$0xff] %vm164, %v835
    %s839 = scalar_lea.vmem [#allocation2], 16
    %v840 = vld [vmem:[%s839] sm:$0xff]
    %841 = vmatprep.subr.mxu0 0.0
    %842 = vmatpush1.msra.mxu0 %v119
    %843 = vmatprep.subr.mxu0 0.0
    %844 = vmatpush1.msra.mxu0 %v120
    %845 = vmatprep.subr.mxu0 0.0
    %846 = vmatpush1.msra.mxu0 %v121
    %847 = vmatprep.subr.mxu0 0.0
    %848 = vmatpush1.msra.mxu0 %v122
    %849 = vmatprep.subr.mxu0 0.0
    %850 = vmatpush1.msra.mxu0 0.0
    %851 = vmatprep.subr.mxu0 0.0
    %852 = vmatpush1.msra.mxu0 0.0
    %853 = vmatprep.subr.mxu0 0.0
    %854 = vmatpush1.msra.mxu0 0.0
    %855 = vmatprep.subr.mxu0 0.0
    %856 = vmatpush1.msra.mxu0 0.0
    %857 = vmatprep.subr.mxu0 0.0
    %858 = vmatpush1.msra.mxu0 0.0
    %859 = vmatprep.subr.mxu0 0.0
    %860 = vmatpush1.msra.mxu0 0.0
    %861 = vmatprep.subr.mxu0 0.0
    %862 = vmatpush1.msra.mxu0 0.0
    %863 = vmatprep.subr.mxu0 0.0
    %864 = vmatpush1.msra.mxu0 0.0
    %865 = vmatprep.subr.mxu0 0.0
    %866 = vmatpush1.msra.mxu0 0.0
    %867 = vmatprep.subr.mxu0 0.0
    %868 = vmatpush1.msra.mxu0 0.0
    %869 = vmatprep.subr.mxu0 0.0
    %870 = vmatpush1.msra.mxu0 0.0
    %871 = vmatprep.subr.mxu0 0.0
    %872 = vmatpush1.msra.mxu0 0.0
    %873 = vmatprep.subr.mxu0 0.0
    %874 = vmatpush1.msra.mxu0 0.0
    %875 = vmatprep.subr.mxu0 0.0
    %876 = vmatpush1.msra.mxu0 0.0
    %877 = vmatprep.subr.mxu0 0.0
    %878 = vmatpush1.msra.mxu0 0.0
    %879 = vmatprep.subr.mxu0 0.0
    %880 = vmatpush1.msra.mxu0 0.0
    %881 = vmatprep.subr.mxu0 0.0
    %882 = vmatpush1.msra.mxu0 0.0
    %883 = vmatprep.subr.mxu0 0.0
    %884 = vmatpush1.msra.mxu0 0.0
    %885 = vmatprep.subr.mxu0 0.0
    %886 = vmatpush1.msra.mxu0 0.0
    %887 = vmatprep.subr.mxu0 0.0
    %888 = vmatpush1.msra.mxu0 0.0
    %889 = vmatprep.subr.mxu0 0.0
    %890 = vmatpush1.msra.mxu0 0.0
    %891 = vmatprep.subr.mxu0 0.0
    %892 = vmatpush1.msra.mxu0 0.0
    %893 = vmatprep.subr.mxu0 0.0
    %894 = vmatpush1.msra.mxu0 0.0
    %895 = vmatprep.subr.mxu0 0.0
    %896 = vmatpush1.msra.mxu0 0.0
    %897 = vmatprep.subr.mxu0 0.0
    %898 = vmatpush1.msra.mxu0 0.0
    %899 = vmatprep.subr.mxu0 0.0
    %900 = vmatpush1.msra.mxu0 0.0
    %901 = vmatprep.subr.mxu0 0.0
    %902 = vmatpush1.msra.mxu0 0.0
    %903 = vmatprep.subr.mxu0 0.0
    %904 = vmatpush1.msra.mxu0 0.0
    %905 = vmatprep.mubr.f32.mxu0 0.0
    %906 = vmatmul.mubr.f32.gmra.mrb[0].mxu0 %v739
    %v907 = vpop.f32.mrb[0].mxu0
    %v908 = vadd.f32 0.0, %v907
    %v909 = vpop.f32.mrb[0].mxu0
    %910 = vdwg.mxu0
    %v911 = vadd.f32 %v840, %v908
    %v912 = vmul.f32 %v911, %v143
    %v913 = vtanh.pop %v912
    %v914 = vmul.f32 %v913, %v143
    %v915 = vadd.f32 %v914, %v144
    %v916 = vmul.f32 %v915, %v657
    %918 = vrot.lane.b32.xlu0 %v915, 64
    %v919 = vpop.permute.xlu0 %918
    %v921 = vmul.f32 %v915, %v919
    %923 = vrot.lane.b32.xlu0 %v921, 32
    %v924 = vpop.permute.xlu0 %923
    %v926 = vadd.f32 %v916, %v924
    %v927 = vtanh.pop %v926
    %929 = vrot.lane.b32.xlu0 %v927, 64
    %v930 = vpop.permute.xlu0 %929
    %v932 = vmul.f32 %v915, %v930
    %v933 = vsel %vm164, %v835, 0
    %935 = vmatprep.subr.mxu0 0.0
    %936 = vmatpush1.msra.mxu0 %v127
    %937 = vmatprep.subr.mxu0 0.0
    %938 = vmatpush1.msra.mxu0 %v128
    %939 = vmatprep.subr.mxu0 0.0
    %940 = vmatpush1.msra.mxu0 %v129
    %941 = vmatprep.subr.mxu0 0.0
    %942 = vmatpush1.msra.mxu0 %v130
    %943 = vmatprep.subr.mxu0 0.0
    %944 = vmatpush1.msra.mxu0 0.0
    %945 = vmatprep.subr.mxu0 0.0
    %946 = vmatpush1.msra.mxu0 0.0
    %947 = vmatprep.subr.mxu0 0.0
    %948 = vmatpush1.msra.mxu0 0.0
    %949 = vmatprep.subr.mxu0 0.0
    %950 = vmatpush1.msra.mxu0 0.0
    %951 = vmatprep.subr.mxu0 0.0
    %952 = vmatpush1.msra.mxu0 0.0
    %953 = vmatprep.subr.mxu0 0.0
    %954 = vmatpush1.msra.mxu0 0.0
    %955 = vmatprep.subr.mxu0 0.0
    %956 = vmatpush1.msra.mxu0 0.0
    %957 = vmatprep.subr.mxu0 0.0
    %958 = vmatpush1.msra.mxu0 0.0
    %959 = vmatprep.subr.mxu0 0.0
    %960 = vmatpush1.msra.mxu0 0.0
    %961 = vmatprep.subr.mxu0 0.0
    %962 = vmatpush1.msra.mxu0 0.0
    %963 = vmatprep.subr.mxu0 0.0
    %964 = vmatpush1.msra.mxu0 0.0
    %965 = vmatprep.subr.mxu0 0.0
    %966 = vmatpush1.msra.mxu0 0.0
    %967 = vmatprep.subr.mxu0 0.0
    %968 = vmatpush1.msra.mxu0 0.0
    %969 = vmatprep.subr.mxu0 0.0
    %970 = vmatpush1.msra.mxu0 0.0
    %971 = vmatprep.subr.mxu0 0.0
    %972 = vmatpush1.msra.mxu0 0.0
    %973 = vmatprep.subr.mxu0 0.0
    %974 = vmatpush1.msra.mxu0 0.0
    %975 = vmatprep.subr.mxu0 0.0
    %976 = vmatpush1.msra.mxu0 0.0
    %977 = vmatprep.subr.mxu0 0.0
    %978 = vmatpush1.msra.mxu0 0.0
    %979 = vmatprep.subr.mxu0 0.0
    %980 = vmatpush1.msra.mxu0 0.0
    %981 = vmatprep.subr.mxu0 0.0
    %982 = vmatpush1.msra.mxu0 0.0
    %983 = vmatprep.subr.mxu0 0.0
    %984 = vmatpush1.msra.mxu0 0.0
    %985 = vmatprep.subr.mxu0 0.0
    %986 = vmatpush1.msra.mxu0 0.0
    %987 = vmatprep.subr.mxu0 0.0
    %988 = vmatpush1.msra.mxu0 0.0
    %989 = vmatprep.subr.mxu0 0.0
    %990 = vmatpush1.msra.mxu0 0.0
    %991 = vmatprep.subr.mxu0 0.0
    %992 = vmatpush1.msra.mxu0 0.0
    %993 = vmatprep.subr.mxu0 0.0
    %994 = vmatpush1.msra.mxu0 0.0
    %995 = vmatprep.subr.mxu0 0.0
    %996 = vmatpush1.msra.mxu0 0.0
    %997 = vmatprep.subr.mxu0 0.0
    %998 = vmatpush1.msra.mxu0 0.0
    %999 = vmatprep.mubr.f32.mxu0 0.0
    %1000 = vmatmul.mubr.f32.gmra.mrb[0].mxu0 %v933
    %v1001 = vpop.f32.mrb[0].mxu0
    %v1002 = vadd.f32 0.0, %v1001
    %v1003 = vpop.f32.mrb[0].mxu0
    %1004 = vdwg.mxu0
    %1006 = vrot.lane.b32.xlu0 %v932, 32
    %v1007 = vpop.permute.xlu0 %1006
    %v1008 = vsel %vm164, %v1007, 0
    %1010 = vmatprep.subr.mxu0 0.0
    %1011 = vmatpush1.msra.mxu0 %v123
    %1012 = vmatprep.subr.mxu0 0.0
    %1013 = vmatpush1.msra.mxu0 %v124
    %1014 = vmatprep.subr.mxu0 0.0
    %1015 = vmatpush1.msra.mxu0 %v125
    %1016 = vmatprep.subr.mxu0 0.0
    %1017 = vmatpush1.msra.mxu0 %v126
    %1018 = vmatprep.subr.mxu0 0.0
    %1019 = vmatpush1.msra.mxu0 0.0
    %1020 = vmatprep.subr.mxu0 0.0
    %1021 = vmatpush1.msra.mxu0 0.0
    %1022 = vmatprep.subr.mxu0 0.0
    %1023 = vmatpush1.msra.mxu0 0.0
    %1024 = vmatprep.subr.mxu0 0.0
    %1025 = vmatpush1.msra.mxu0 0.0
    %1026 = vmatprep.subr.mxu0 0.0
    %1027 = vmatpush1.msra.mxu0 0.0
    %1028 = vmatprep.subr.mxu0 0.0
    %1029 = vmatpush1.msra.mxu0 0.0
    %1030 = vmatprep.subr.mxu0 0.0
    %1031 = vmatpush1.msra.mxu0 0.0
    %1032 = vmatprep.subr.mxu0 0.0
    %1033 = vmatpush1.msra.mxu0 0.0
    %1034 = vmatprep.subr.mxu0 0.0
    %1035 = vmatpush1.msra.mxu0 0.0
    %1036 = vmatprep.subr.mxu0 0.0
    %1037 = vmatpush1.msra.mxu0 0.0
    %1038 = vmatprep.subr.mxu0 0.0
    %1039 = vmatpush1.msra.mxu0 0.0
    %1040 = vmatprep.subr.mxu0 0.0
    %1041 = vmatpush1.msra.mxu0 0.0
    %1042 = vmatprep.subr.mxu0 0.0
    %1043 = vmatpush1.msra.mxu0 0.0
    %1044 = vmatprep.subr.mxu0 0.0
    %1045 = vmatpush1.msra.mxu0 0.0
    %1046 = vmatprep.subr.mxu0 0.0
    %1047 = vmatpush1.msra.mxu0 0.0
    %1048 = vmatprep.subr.mxu0 0.0
    %1049 = vmatpush1.msra.mxu0 0.0
    %1050 = vmatprep.subr.mxu0 0.0
    %1051 = vmatpush1.msra.mxu0 0.0
    %1052 = vmatprep.subr.mxu0 0.0
    %1053 = vmatpush1.msra.mxu0 0.0
    %1054 = vmatprep.subr.mxu0 0.0
    %1055 = vmatpush1.msra.mxu0 0.0
    %1056 = vmatprep.subr.mxu0 0.0
    %1057 = vmatpush1.msra.mxu0 0.0
    %1058 = vmatprep.subr.mxu0 0.0
    %1059 = vmatpush1.msra.mxu0 0.0
    %1060 = vmatprep.subr.mxu0 0.0
    %1061 = vmatpush1.msra.mxu0 0.0
    %1062 = vmatprep.subr.mxu0 0.0
    %1063 = vmatpush1.msra.mxu0 0.0
    %1064 = vmatprep.subr.mxu0 0.0
    %1065 = vmatpush1.msra.mxu0 0.0
    %1066 = vmatprep.subr.mxu0 0.0
    %1067 = vmatpush1.msra.mxu0 0.0
    %1068 = vmatprep.subr.mxu0 0.0
    %1069 = vmatpush1.msra.mxu0 0.0
    %1070 = vmatprep.subr.mxu0 0.0
    %1071 = vmatpush1.msra.mxu0 0.0
    %1072 = vmatprep.subr.mxu0 0.0
    %1073 = vmatpush1.msra.mxu0 0.0
    %1074 = vmatprep.mubr.f32.mxu0 0.0
    %1075 = vmatmul.mubr.f32.gmra.mrb[0].mxu0 %v1008
    %v1076 = vpop.f32.mrb[0].mxu0
    %v1077 = vadd.f32 %v1002, %v1076
    %v1078 = vpop.f32.mrb[0].mxu0
    %1079 = vdwg.mxu0
    %v1080 = vadd.f32 %v1077, %v136
    %v1081 = vmul.f32 %v1080, %v143
    %v1082 = vtanh.pop %v1081
    %v1083 = vmul.f32 %v1082, %v143
    %v1084 = vadd.f32 %v1083, %v144
    %v1085 = vmul.f32 %v1084, %v826
    %1087 = vrot.lane.b32.xlu0 %v1084, 64
    %v1088 = vpop.permute.xlu0 %1087
    %v1090 = vmul.f32 %v1084, %v1088
    %1092 = vrot.lane.b32.xlu0 %v1090, 32
    %v1093 = vpop.permute.xlu0 %1092
    %v1095 = vadd.f32 %v1085, %v1093
    %v1096 = vtanh.pop %v1095
    %1098 = vrot.lane.b32.xlu0 %v1096, 64
    %v1099 = vpop.permute.xlu0 %1098
    %v1101 = vmul.f32 %v1084, %v1099
    %1103 = vrot.lane.b32.xlu0 %v1101, 32
    %v1104 = vpop.permute.xlu0 %1103
    %s1106 = scalar_lea.vmem [#allocation3], 16
    %1107 = vst.msk [vmem:[%s1106] sm:$0xff] %vm164, %v1104
    %s1108 = scalar_lea.vmem [#allocation2], 24
    %v1109 = vld [vmem:[%s1108] sm:$0xff]
    %1110 = vmatprep.subr.mxu0 0.0
    %1111 = vmatpush1.msra.mxu0 %v119
    %1112 = vmatprep.subr.mxu0 0.0
    %1113 = vmatpush1.msra.mxu0 %v120
    %1114 = vmatprep.subr.mxu0 0.0
    %1115 = vmatpush1.msra.mxu0 %v121
    %1116 = vmatprep.subr.mxu0 0.0
    %1117 = vmatpush1.msra.mxu0 %v122
    %1118 = vmatprep.subr.mxu0 0.0
    %1119 = vmatpush1.msra.mxu0 0.0
    %1120 = vmatprep.subr.mxu0 0.0
    %1121 = vmatpush1.msra.mxu0 0.0
    %1122 = vmatprep.subr.mxu0 0.0
    %1123 = vmatpush1.msra.mxu0 0.0
    %1124 = vmatprep.subr.mxu0 0.0
    %1125 = vmatpush1.msra.mxu0 0.0
    %1126 = vmatprep.subr.mxu0 0.0
    %1127 = vmatpush1.msra.mxu0 0.0
    %1128 = vmatprep.subr.mxu0 0.0
    %1129 = vmatpush1.msra.mxu0 0.0
    %1130 = vmatprep.subr.mxu0 0.0
    %1131 = vmatpush1.msra.mxu0 0.0
    %1132 = vmatprep.subr.mxu0 0.0
    %1133 = vmatpush1.msra.mxu0 0.0
    %1134 = vmatprep.subr.mxu0 0.0
    %1135 = vmatpush1.msra.mxu0 0.0
    %1136 = vmatprep.subr.mxu0 0.0
    %1137 = vmatpush1.msra.mxu0 0.0
    %1138 = vmatprep.subr.mxu0 0.0
    %1139 = vmatpush1.msra.mxu0 0.0
    %1140 = vmatprep.subr.mxu0 0.0
    %1141 = vmatpush1.msra.mxu0 0.0
    %1142 = vmatprep.subr.mxu0 0.0
    %1143 = vmatpush1.msra.mxu0 0.0
    %1144 = vmatprep.subr.mxu0 0.0
    %1145 = vmatpush1.msra.mxu0 0.0
    %1146 = vmatprep.subr.mxu0 0.0
    %1147 = vmatpush1.msra.mxu0 0.0
    %1148 = vmatprep.subr.mxu0 0.0
    %1149 = vmatpush1.msra.mxu0 0.0
    %1150 = vmatprep.subr.mxu0 0.0
    %1151 = vmatpush1.msra.mxu0 0.0
    %1152 = vmatprep.subr.mxu0 0.0
    %1153 = vmatpush1.msra.mxu0 0.0
    %1154 = vmatprep.subr.mxu0 0.0
    %1155 = vmatpush1.msra.mxu0 0.0
    %1156 = vmatprep.subr.mxu0 0.0
    %1157 = vmatpush1.msra.mxu0 0.0
    %1158 = vmatprep.subr.mxu0 0.0
    %1159 = vmatpush1.msra.mxu0 0.0
    %1160 = vmatprep.subr.mxu0 0.0
    %1161 = vmatpush1.msra.mxu0 0.0
    %1162 = vmatprep.subr.mxu0 0.0
    %1163 = vmatpush1.msra.mxu0 0.0
    %1164 = vmatprep.subr.mxu0 0.0
    %1165 = vmatpush1.msra.mxu0 0.0
    %1166 = vmatprep.subr.mxu0 0.0
    %1167 = vmatpush1.msra.mxu0 0.0
    %1168 = vmatprep.subr.mxu0 0.0
    %1169 = vmatpush1.msra.mxu0 0.0
    %1170 = vmatprep.subr.mxu0 0.0
    %1171 = vmatpush1.msra.mxu0 0.0
    %1172 = vmatprep.subr.mxu0 0.0
    %1173 = vmatpush1.msra.mxu0 0.0
    %1174 = vmatprep.mubr.f32.mxu0 0.0
    %1175 = vmatmul.mubr.f32.gmra.mrb[0].mxu0 %v1008
    %v1176 = vpop.f32.mrb[0].mxu0
    %v1177 = vadd.f32 0.0, %v1176
    %v1178 = vpop.f32.mrb[0].mxu0
    %1179 = vdwg.mxu0
    %v1180 = vadd.f32 %v1109, %v1177
    %v1181 = vmul.f32 %v1180, %v143
    %v1182 = vtanh.pop %v1181
    %v1183 = vmul.f32 %v1182, %v143
    %v1184 = vadd.f32 %v1183, %v144
    %v1185 = vmul.f32 %v1184, %v926
    %1187 = vrot.lane.b32.xlu0 %v1184, 64
    %v1188 = vpop.permute.xlu0 %1187
    %v1190 = vmul.f32 %v1184, %v1188
    %1192 = vrot.lane.b32.xlu0 %v1190, 32
    %v1193 = vpop.permute.xlu0 %1192
    %v1195 = vadd.f32 %v1185, %v1193
    %v1196 = vtanh.pop %v1195
    %1198 = vrot.lane.b32.xlu0 %v1196, 64
    %v1199 = vpop.permute.xlu0 %1198
    %v1201 = vmul.f32 %v1184, %v1199
    %v1202 = vsel %vm164, %v1104, 0
    %1204 = vmatprep.subr.mxu0 0.0
    %1205 = vmatpush1.msra.mxu0 %v127
    %1206 = vmatprep.subr.mxu0 0.0
    %1207 = vmatpush1.msra.mxu0 %v128
    %1208 = vmatprep.subr.mxu0 0.0
    %1209 = vmatpush1.msra.mxu0 %v129
    %1210 = vmatprep.subr.mxu0 0.0
    %1211 = vmatpush1.msra.mxu0 %v130
    %1212 = vmatprep.subr.mxu0 0.0
    %1213 = vmatpush1.msra.mxu0 0.0
    %1214 = vmatprep.subr.mxu0 0.0
    %1215 = vmatpush1.msra.mxu0 0.0
    %1216 = vmatprep.subr.mxu0 0.0
    %1217 = vmatpush1.msra.mxu0 0.0
    %1218 = vmatprep.subr.mxu0 0.0
    %1219 = vmatpush1.msra.mxu0 0.0
    %1220 = vmatprep.subr.mxu0 0.0
    %1221 = vmatpush1.msra.mxu0 0.0
    %1222 = vmatprep.subr.mxu0 0.0
    %1223 = vmatpush1.msra.mxu0 0.0
    %1224 = vmatprep.subr.mxu0 0.0
    %1225 = vmatpush1.msra.mxu0 0.0
    %1226 = vmatprep.subr.mxu0 0.0
    %1227 = vmatpush1.msra.mxu0 0.0
    %1228 = vmatprep.subr.mxu0 0.0
    %1229 = vmatpush1.msra.mxu0 0.0
    %1230 = vmatprep.subr.mxu0 0.0
    %1231 = vmatpush1.msra.mxu0 0.0
    %1232 = vmatprep.subr.mxu0 0.0
    %1233 = vmatpush1.msra.mxu0 0.0
    %1234 = vmatprep.subr.mxu0 0.0
    %1235 = vmatpush1.msra.mxu0 0.0
    %1236 = vmatprep.subr.mxu0 0.0
    %1237 = vmatpush1.msra.mxu0 0.0
    %1238 = vmatprep.subr.mxu0 0.0
    %1239 = vmatpush1.msra.mxu0 0.0
    %1240 = vmatprep.subr.mxu0 0.0
    %1241 = vmatpush1.msra.mxu0 0.0
    %1242 = vmatprep.subr.mxu0 0.0
    %1243 = vmatpush1.msra.mxu0 0.0
    %1244 = vmatprep.subr.mxu0 0.0
    %1245 = vmatpush1.msra.mxu0 0.0
    %1246 = vmatprep.subr.mxu0 0.0
    %1247 = vmatpush1.msra.mxu0 0.0
    %1248 = vmatprep.subr.mxu0 0.0
    %1249 = vmatpush1.msra.mxu0 0.0
    %1250 = vmatprep.subr.mxu0 0.0
    %1251 = vmatpush1.msra.mxu0 0.0
    %1252 = vmatprep.subr.mxu0 0.0
    %1253 = vmatpush1.msra.mxu0 0.0
    %1254 = vmatprep.subr.mxu0 0.0
    %1255 = vmatpush1.msra.mxu0 0.0
    %1256 = vmatprep.subr.mxu0 0.0
    %1257 = vmatpush1.msra.mxu0 0.0
    %1258 = vmatprep.subr.mxu0 0.0
    %1259 = vmatpush1.msra.mxu0 0.0
    %1260 = vmatprep.subr.mxu0 0.0
    %1261 = vmatpush1.msra.mxu0 0.0
    %1262 = vmatprep.subr.mxu0 0.0
    %1263 = vmatpush1.msra.mxu0 0.0
    %1264 = vmatprep.subr.mxu0 0.0
    %1265 = vmatpush1.msra.mxu0 0.0
    %1266 = vmatprep.subr.mxu0 0.0
    %1267 = vmatpush1.msra.mxu0 0.0
    %1268 = vmatprep.mubr.f32.mxu0 0.0
    %1269 = vmatmul.mubr.f32.gmra.mrb[0].mxu0 %v1202
    %v1270 = vpop.f32.mrb[0].mxu0
    %v1271 = vadd.f32 0.0, %v1270
    %v1272 = vpop.f32.mrb[0].mxu0
    %1273 = vdwg.mxu0
    %1275 = vrot.lane.b32.xlu0 %v1201, 32
    %v1276 = vpop.permute.xlu0 %1275
    %v1277 = vsel %vm164, %v1276, 0
    %1279 = vmatprep.subr.mxu0 0.0
    %1280 = vmatpush1.msra.mxu0 %v123
    %1281 = vmatprep.subr.mxu0 0.0
    %1282 = vmatpush1.msra.mxu0 %v124
    %1283 = vmatprep.subr.mxu0 0.0
    %1284 = vmatpush1.msra.mxu0 %v125
    %1285 = vmatprep.subr.mxu0 0.0
    %1286 = vmatpush1.msra.mxu0 %v126
    %1287 = vmatprep.subr.mxu0 0.0
    %1288 = vmatpush1.msra.mxu0 0.0
    %1289 = vmatprep.subr.mxu0 0.0
    %1290 = vmatpush1.msra.mxu0 0.0
    %1291 = vmatprep.subr.mxu0 0.0
    %1292 = vmatpush1.msra.mxu0 0.0
    %1293 = vmatprep.subr.mxu0 0.0
    %1294 = vmatpush1.msra.mxu0 0.0
    %1295 = vmatprep.subr.mxu0 0.0
    %1296 = vmatpush1.msra.mxu0 0.0
    %1297 = vmatprep.subr.mxu0 0.0
    %1298 = vmatpush1.msra.mxu0 0.0
    %1299 = vmatprep.subr.mxu0 0.0
    %1300 = vmatpush1.msra.mxu0 0.0
    %1301 = vmatprep.subr.mxu0 0.0
    %1302 = vmatpush1.msra.mxu0 0.0
    %1303 = vmatprep.subr.mxu0 0.0
    %1304 = vmatpush1.msra.mxu0 0.0
    %1305 = vmatprep.subr.mxu0 0.0
    %1306 = vmatpush1.msra.mxu0 0.0
    %1307 = vmatprep.subr.mxu0 0.0
    %1308 = vmatpush1.msra.mxu0 0.0
    %1309 = vmatprep.subr.mxu0 0.0
    %1310 = vmatpush1.msra.mxu0 0.0
    %1311 = vmatprep.subr.mxu0 0.0
    %1312 = vmatpush1.msra.mxu0 0.0
    %1313 = vmatprep.subr.mxu0 0.0
    %1314 = vmatpush1.msra.mxu0 0.0
    %1315 = vmatprep.subr.mxu0 0.0
    %1316 = vmatpush1.msra.mxu0 0.0
    %1317 = vmatprep.subr.mxu0 0.0
    %1318 = vmatpush1.msra.mxu0 0.0
    %1319 = vmatprep.subr.mxu0 0.0
    %1320 = vmatpush1.msra.mxu0 0.0
    %1321 = vmatprep.subr.mxu0 0.0
    %1322 = vmatpush1.msra.mxu0 0.0
    %1323 = vmatprep.subr.mxu0 0.0
    %1324 = vmatpush1.msra.mxu0 0.0
    %1325 = vmatprep.subr.mxu0 0.0
    %1326 = vmatpush1.msra.mxu0 0.0
    %1327 = vmatprep.subr.mxu0 0.0
    %1328 = vmatpush1.msra.mxu0 0.0
    %1329 = vmatprep.subr.mxu0 0.0
    %1330 = vmatpush1.msra.mxu0 0.0
    %1331 = vmatprep.subr.mxu0 0.0
    %1332 = vmatpush1.msra.mxu0 0.0
    %1333 = vmatprep.subr.mxu0 0.0
    %1334 = vmatpush1.msra.mxu0 0.0
    %1335 = vmatprep.subr.mxu0 0.0
    %1336 = vmatpush1.msra.mxu0 0.0
    %1337 = vmatprep.subr.mxu0 0.0
    %1338 = vmatpush1.msra.mxu0 0.0
    %1339 = vmatprep.subr.mxu0 0.0
    %1340 = vmatpush1.msra.mxu0 0.0
    %1341 = vmatprep.subr.mxu0 0.0
    %1342 = vmatpush1.msra.mxu0 0.0
    %1343 = vmatprep.mubr.f32.mxu0 0.0
    %1344 = vmatmul.mubr.f32.gmra.mrb[0].mxu0 %v1277
    %v1345 = vpop.f32.mrb[0].mxu0
    %v1346 = vadd.f32 %v1271, %v1345
    %v1347 = vpop.f32.mrb[0].mxu0
    %1348 = vdwg.mxu0
    %v1349 = vadd.f32 %v1346, %v136
    %v1350 = vmul.f32 %v1349, %v143
    %v1351 = vtanh.pop %v1350
    %v1352 = vmul.f32 %v1351, %v143
    %v1353 = vadd.f32 %v1352, %v144
    %v1354 = vmul.f32 %v1353, %v1095
    %1356 = vrot.lane.b32.xlu0 %v1353, 64
    %v1357 = vpop.permute.xlu0 %1356
    %v1359 = vmul.f32 %v1353, %v1357
    %1361 = vrot.lane.b32.xlu0 %v1359, 32
    %v1362 = vpop.permute.xlu0 %1361
    %v1364 = vadd.f32 %v1354, %v1362
    %v1365 = vtanh.pop %v1364
    %1367 = vrot.lane.b32.xlu0 %v1365, 64
    %v1368 = vpop.permute.xlu0 %1367
    %v1370 = vmul.f32 %v1353, %v1368
    %1372 = vrot.lane.b32.xlu0 %v1370, 32
    %v1373 = vpop.permute.xlu0 %1372
    %s1375 = scalar_lea.vmem [#allocation3], 24
    %1376 = vst.msk [vmem:[%s1375] sm:$0xff] %vm164, %v1373
    %s1377 = scalar_lea.vmem [#allocation2], 32
    %v1378 = vld [vmem:[%s1377] sm:$0xff]
    %1379 = vmatprep.subr.mxu0 0.0
    %1380 = vmatpush1.msra.mxu0 %v119
    %1381 = vmatprep.subr.mxu0 0.0
    %1382 = vmatpush1.msra.mxu0 %v120
    %1383 = vmatprep.subr.mxu0 0.0
    %1384 = vmatpush1.msra.mxu0 %v121
    %1385 = vmatprep.subr.mxu0 0.0
    %1386 = vmatpush1.msra.mxu0 %v122
    %1387 = vmatprep.subr.mxu0 0.0
    %1388 = vmatpush1.msra.mxu0 0.0
    %1389 = vmatprep.subr.mxu0 0.0
    %1390 = vmatpush1.msra.mxu0 0.0
    %1391 = vmatprep.subr.mxu0 0.0
    %1392 = vmatpush1.msra.mxu0 0.0
    %1393 = vmatprep.subr.mxu0 0.0
    %1394 = vmatpush1.msra.mxu0 0.0
    %1395 = vmatprep.subr.mxu0 0.0
    %1396 = vmatpush1.msra.mxu0 0.0
    %1397 = vmatprep.subr.mxu0 0.0
    %1398 = vmatpush1.msra.mxu0 0.0
    %1399 = vmatprep.subr.mxu0 0.0
    %1400 = vmatpush1.msra.mxu0 0.0
    %1401 = vmatprep.subr.mxu0 0.0
    %1402 = vmatpush1.msra.mxu0 0.0
    %1403 = vmatprep.subr.mxu0 0.0
    %1404 = vmatpush1.msra.mxu0 0.0
    %1405 = vmatprep.subr.mxu0 0.0
    %1406 = vmatpush1.msra.mxu0 0.0
    %1407 = vmatprep.subr.mxu0 0.0
    %1408 = vmatpush1.msra.mxu0 0.0
    %1409 = vmatprep.subr.mxu0 0.0
    %1410 = vmatpush1.msra.mxu0 0.0
    %1411 = vmatprep.subr.mxu0 0.0
    %1412 = vmatpush1.msra.mxu0 0.0
    %1413 = vmatprep.subr.mxu0 0.0
    %1414 = vmatpush1.msra.mxu0 0.0
    %1415 = vmatprep.subr.mxu0 0.0
    %1416 = vmatpush1.msra.mxu0 0.0
    %1417 = vmatprep.subr.mxu0 0.0
    %1418 = vmatpush1.msra.mxu0 0.0
    %1419 = vmatprep.subr.mxu0 0.0
    %1420 = vmatpush1.msra.mxu0 0.0
    %1421 = vmatprep.subr.mxu0 0.0
    %1422 = vmatpush1.msra.mxu0 0.0
    %1423 = vmatprep.subr.mxu0 0.0
    %1424 = vmatpush1.msra.mxu0 0.0
    %1425 = vmatprep.subr.mxu0 0.0
    %1426 = vmatpush1.msra.mxu0 0.0
    %1427 = vmatprep.subr.mxu0 0.0
    %1428 = vmatpush1.msra.mxu0 0.0
    %1429 = vmatprep.subr.mxu0 0.0
    %1430 = vmatpush1.msra.mxu0 0.0
    %1431 = vmatprep.subr.mxu0 0.0
    %1432 = vmatpush1.msra.mxu0 0.0
    %1433 = vmatprep.subr.mxu0 0.0
    %1434 = vmatpush1.msra.mxu0 0.0
    %1435 = vmatprep.subr.mxu0 0.0
    %1436 = vmatpush1.msra.mxu0 0.0
    %1437 = vmatprep.subr.mxu0 0.0
    %1438 = vmatpush1.msra.mxu0 0.0
    %1439 = vmatprep.subr.mxu0 0.0
    %1440 = vmatpush1.msra.mxu0 0.0
    %1441 = vmatprep.subr.mxu0 0.0
    %1442 = vmatpush1.msra.mxu0 0.0
    %1443 = vmatprep.mubr.f32.mxu0 0.0
    %1444 = vmatmul.mubr.f32.gmra.mrb[0].mxu0 %v1277
    %v1445 = vpop.f32.mrb[0].mxu0
    %v1446 = vadd.f32 0.0, %v1445
    %v1447 = vpop.f32.mrb[0].mxu0
    %1448 = vdwg.mxu0
    %v1449 = vadd.f32 %v1378, %v1446
    %v1450 = vmul.f32 %v1449, %v143
    %v1451 = vtanh.pop %v1450
    %v1452 = vmul.f32 %v1451, %v143
    %v1453 = vadd.f32 %v1452, %v144
    %v1454 = vmul.f32 %v1453, %v1195
    %1456 = vrot.lane.b32.xlu0 %v1453, 64
    %v1457 = vpop.permute.xlu0 %1456
    %v1459 = vmul.f32 %v1453, %v1457
    %1461 = vrot.lane.b32.xlu0 %v1459, 32
    %v1462 = vpop.permute.xlu0 %1461
    %v1464 = vadd.f32 %v1454, %v1462
    %v1465 = vtanh.pop %v1464
    %1467 = vrot.lane.b32.xlu0 %v1465, 64
    %v1468 = vpop.permute.xlu0 %1467
    %v1470 = vmul.f32 %v1453, %v1468
    %v1471 = vsel %vm164, %v1373, 0
    %1473 = vmatprep.subr.mxu0 0.0
    %1474 = vmatpush1.msra.mxu0 %v127
    %1475 = vmatprep.subr.mxu0 0.0
    %1476 = vmatpush1.msra.mxu0 %v128
    %1477 = vmatprep.subr.mxu0 0.0
    %1478 = vmatpush1.msra.mxu0 %v129
    %1479 = vmatprep.subr.mxu0 0.0
    %1480 = vmatpush1.msra.mxu0 %v130
    %1481 = vmatprep.subr.mxu0 0.0
    %1482 = vmatpush1.msra.mxu0 0.0
    %1483 = vmatprep.subr.mxu0 0.0
    %1484 = vmatpush1.msra.mxu0 0.0
    %1485 = vmatprep.subr.mxu0 0.0
    %1486 = vmatpush1.msra.mxu0 0.0
    %1487 = vmatprep.subr.mxu0 0.0
    %1488 = vmatpush1.msra.mxu0 0.0
    %1489 = vmatprep.subr.mxu0 0.0
    %1490 = vmatpush1.msra.mxu0 0.0
    %1491 = vmatprep.subr.mxu0 0.0
    %1492 = vmatpush1.msra.mxu0 0.0
    %1493 = vmatprep.subr.mxu0 0.0
    %1494 = vmatpush1.msra.mxu0 0.0
    %1495 = vmatprep.subr.mxu0 0.0
    %1496 = vmatpush1.msra.mxu0 0.0
    %1497 = vmatprep.subr.mxu0 0.0
    %1498 = vmatpush1.msra.mxu0 0.0
    %1499 = vmatprep.subr.mxu0 0.0
    %1500 = vmatpush1.msra.mxu0 0.0
    %1501 = vmatprep.subr.mxu0 0.0
    %1502 = vmatpush1.msra.mxu0 0.0
    %1503 = vmatprep.subr.mxu0 0.0
    %1504 = vmatpush1.msra.mxu0 0.0
    %1505 = vmatprep.subr.mxu0 0.0
    %1506 = vmatpush1.msra.mxu0 0.0
    %1507 = vmatprep.subr.mxu0 0.0
    %1508 = vmatpush1.msra.mxu0 0.0
    %1509 = vmatprep.subr.mxu0 0.0
    %1510 = vmatpush1.msra.mxu0 0.0
    %1511 = vmatprep.subr.mxu0 0.0
    %1512 = vmatpush1.msra.mxu0 0.0
    %1513 = vmatprep.subr.mxu0 0.0
    %1514 = vmatpush1.msra.mxu0 0.0
    %1515 = vmatprep.subr.mxu0 0.0
    %1516 = vmatpush1.msra.mxu0 0.0
    %1517 = vmatprep.subr.mxu0 0.0
    %1518 = vmatpush1.msra.mxu0 0.0
    %1519 = vmatprep.subr.mxu0 0.0
    %1520 = vmatpush1.msra.mxu0 0.0
    %1521 = vmatprep.subr.mxu0 0.0
    %1522 = vmatpush1.msra.mxu0 0.0
    %1523 = vmatprep.subr.mxu0 0.0
    %1524 = vmatpush1.msra.mxu0 0.0
    %1525 = vmatprep.subr.mxu0 0.0
    %1526 = vmatpush1.msra.mxu0 0.0
    %1527 = vmatprep.subr.mxu0 0.0
    %1528 = vmatpush1.msra.mxu0 0.0
    %1529 = vmatprep.subr.mxu0 0.0
    %1530 = vmatpush1.msra.mxu0 0.0
    %1531 = vmatprep.subr.mxu0 0.0
    %1532 = vmatpush1.msra.mxu0 0.0
    %1533 = vmatprep.subr.mxu0 0.0
    %1534 = vmatpush1.msra.mxu0 0.0
    %1535 = vmatprep.subr.mxu0 0.0
    %1536 = vmatpush1.msra.mxu0 0.0
    %1537 = vmatprep.mubr.f32.mxu0 0.0
    %1538 = vmatmul.mubr.f32.gmra.mrb[0].mxu0 %v1471
    %v1539 = vpop.f32.mrb[0].mxu0
    %v1540 = vadd.f32 0.0, %v1539
    %v1541 = vpop.f32.mrb[0].mxu0
    %1542 = vdwg.mxu0
    %1544 = vrot.lane.b32.xlu0 %v1470, 32
    %v1545 = vpop.permute.xlu0 %1544
    %v1546 = vsel %vm164, %v1545, 0
    %1548 = vmatprep.subr.mxu0 0.0
    %1549 = vmatpush1.msra.mxu0 %v123
    %1550 = vmatprep.subr.mxu0 0.0
    %1551 = vmatpush1.msra.mxu0 %v124
    %1552 = vmatprep.subr.mxu0 0.0
    %1553 = vmatpush1.msra.mxu0 %v125
    %1554 = vmatprep.subr.mxu0 0.0
    %1555 = vmatpush1.msra.mxu0 %v126
    %1556 = vmatprep.subr.mxu0 0.0
    %1557 = vmatpush1.msra.mxu0 0.0
    %1558 = vmatprep.subr.mxu0 0.0
    %1559 = vmatpush1.msra.mxu0 0.0
    %1560 = vmatprep.subr.mxu0 0.0
    %1561 = vmatpush1.msra.mxu0 0.0
    %1562 = vmatprep.subr.mxu0 0.0
    %1563 = vmatpush1.msra.mxu0 0.0
    %1564 = vmatprep.subr.mxu0 0.0
    %1565 = vmatpush1.msra.mxu0 0.0
    %1566 = vmatprep.subr.mxu0 0.0
    %1567 = vmatpush1.msra.mxu0 0.0
    %1568 = vmatprep.subr.mxu0 0.0
    %1569 = vmatpush1.msra.mxu0 0.0
    %1570 = vmatprep.subr.mxu0 0.0
    %1571 = vmatpush1.msra.mxu0 0.0
    %1572 = vmatprep.subr.mxu0 0.0
    %1573 = vmatpush1.msra.mxu0 0.0
    %1574 = vmatprep.subr.mxu0 0.0
    %1575 = vmatpush1.msra.mxu0 0.0
    %1576 = vmatprep.subr.mxu0 0.0
    %1577 = vmatpush1.msra.mxu0 0.0
    %1578 = vmatprep.subr.mxu0 0.0
    %1579 = vmatpush1.msra.mxu0 0.0
    %1580 = vmatprep.subr.mxu0 0.0
    %1581 = vmatpush1.msra.mxu0 0.0
    %1582 = vmatprep.subr.mxu0 0.0
    %1583 = vmatpush1.msra.mxu0 0.0
    %1584 = vmatprep.subr.mxu0 0.0
    %1585 = vmatpush1.msra.mxu0 0.0
    %1586 = vmatprep.subr.mxu0 0.0
    %1587 = vmatpush1.msra.mxu0 0.0
    %1588 = vmatprep.subr.mxu0 0.0
    %1589 = vmatpush1.msra.mxu0 0.0
    %1590 = vmatprep.subr.mxu0 0.0
    %1591 = vmatpush1.msra.mxu0 0.0
    %1592 = vmatprep.subr.mxu0 0.0
    %1593 = vmatpush1.msra.mxu0 0.0
    %1594 = vmatprep.subr.mxu0 0.0
    %1595 = vmatpush1.msra.mxu0 0.0
    %1596 = vmatprep.subr.mxu0 0.0
    %1597 = vmatpush1.msra.mxu0 0.0
    %1598 = vmatprep.subr.mxu0 0.0
    %1599 = vmatpush1.msra.mxu0 0.0
    %1600 = vmatprep.subr.mxu0 0.0
    %1601 = vmatpush1.msra.mxu0 0.0
    %1602 = vmatprep.subr.mxu0 0.0
    %1603 = vmatpush1.msra.mxu0 0.0
    %1604 = vmatprep.subr.mxu0 0.0
    %1605 = vmatpush1.msra.mxu0 0.0
    %1606 = vmatprep.subr.mxu0 0.0
    %1607 = vmatpush1.msra.mxu0 0.0
    %1608 = vmatprep.subr.mxu0 0.0
    %1609 = vmatpush1.msra.mxu0 0.0
    %1610 = vmatprep.subr.mxu0 0.0
    %1611 = vmatpush1.msra.mxu0 0.0
    %1612 = vmatprep.mubr.f32.mxu0 0.0
    %1613 = vmatmul.mubr.f32.gmra.mrb[0].mxu0 %v1546
    %v1614 = vpop.f32.mrb[0].mxu0
    %v1615 = vadd.f32 %v1540, %v1614
    %v1616 = vpop.f32.mrb[0].mxu0
    %1617 = vdwg.mxu0
    %v1618 = vadd.f32 %v1615, %v136
    %v1619 = vmul.f32 %v1618, %v143
    %v1620 = vtanh.pop %v1619
    %v1621 = vmul.f32 %v1620, %v143
    %v1622 = vadd.f32 %v1621, %v144
    %v1623 = vmul.f32 %v1622, %v1364
    %1625 = vrot.lane.b32.xlu0 %v1622, 64
    %v1626 = vpop.permute.xlu0 %1625
    %v1628 = vmul.f32 %v1622, %v1626
    %1630 = vrot.lane.b32.xlu0 %v1628, 32
    %v1631 = vpop.permute.xlu0 %1630
    %v1633 = vadd.f32 %v1623, %v1631
    %v1634 = vtanh.pop %v1633
    %1636 = vrot.lane.b32.xlu0 %v1634, 64
    %v1637 = vpop.permute.xlu0 %1636
    %v1639 = vmul.f32 %v1622, %v1637
    %1641 = vrot.lane.b32.xlu0 %v1639, 32
    %v1642 = vpop.permute.xlu0 %1641
    %s1644 = scalar_lea.vmem [#allocation3], 32
    %1645 = vst.msk [vmem:[%s1644] sm:$0xff] %vm164, %v1642
    %s1646 = scalar_lea.vmem [#allocation2], 40
    %v1647 = vld [vmem:[%s1646] sm:$0xff]
    %1648 = vmatprep.subr.mxu0 0.0
    %1649 = vmatpush1.msra.mxu0 %v119
    %1650 = vmatprep.subr.mxu0 0.0
    %1651 = vmatpush1.msra.mxu0 %v120
    %1652 = vmatprep.subr.mxu0 0.0
    %1653 = vmatpush1.msra.mxu0 %v121
    %1654 = vmatprep.subr.mxu0 0.0
    %1655 = vmatpush1.msra.mxu0 %v122
    %1656 = vmatprep.subr.mxu0 0.0
    %1657 = vmatpush1.msra.mxu0 0.0
    %1658 = vmatprep.subr.mxu0 0.0
    %1659 = vmatpush1.msra.mxu0 0.0
    %1660 = vmatprep.subr.mxu0 0.0
    %1661 = vmatpush1.msra.mxu0 0.0
    %1662 = vmatprep.subr.mxu0 0.0
    %1663 = vmatpush1.msra.mxu0 0.0
    %1664 = vmatprep.subr.mxu0 0.0
    %1665 = vmatpush1.msra.mxu0 0.0
    %1666 = vmatprep.subr.mxu0 0.0
    %1667 = vmatpush1.msra.mxu0 0.0
    %1668 = vmatprep.subr.mxu0 0.0
    %1669 = vmatpush1.msra.mxu0 0.0
    %1670 = vmatprep.subr.mxu0 0.0
    %1671 = vmatpush1.msra.mxu0 0.0
    %1672 = vmatprep.subr.mxu0 0.0
    %1673 = vmatpush1.msra.mxu0 0.0
    %1674 = vmatprep.subr.mxu0 0.0
    %1675 = vmatpush1.msra.mxu0 0.0
    %1676 = vmatprep.subr.mxu0 0.0
    %1677 = vmatpush1.msra.mxu0 0.0
    %1678 = vmatprep.subr.mxu0 0.0
    %1679 = vmatpush1.msra.mxu0 0.0
    %1680 = vmatprep.subr.mxu0 0.0
    %1681 = vmatpush1.msra.mxu0 0.0
    %1682 = vmatprep.subr.mxu0 0.0
    %1683 = vmatpush1.msra.mxu0 0.0
    %1684 = vmatprep.subr.mxu0 0.0
    %1685 = vmatpush1.msra.mxu0 0.0
    %1686 = vmatprep.subr.mxu0 0.0
    %1687 = vmatpush1.msra.mxu0 0.0
    %1688 = vmatprep.subr.mxu0 0.0
    %1689 = vmatpush1.msra.mxu0 0.0
    %1690 = vmatprep.subr.mxu0 0.0
    %1691 = vmatpush1.msra.mxu0 0.0
    %1692 = vmatprep.subr.mxu0 0.0
    %1693 = vmatpush1.msra.mxu0 0.0
    %1694 = vmatprep.subr.mxu0 0.0
    %1695 = vmatpush1.msra.mxu0 0.0
    %1696 = vmatprep.subr.mxu0 0.0
    %1697 = vmatpush1.msra.mxu0 0.0
    %1698 = vmatprep.subr.mxu0 0.0
    %1699 = vmatpush1.msra.mxu0 0.0
    %1700 = vmatprep.subr.mxu0 0.0
    %1701 = vmatpush1.msra.mxu0 0.0
    %1702 = vmatprep.subr.mxu0 0.0
    %1703 = vmatpush1.msra.mxu0 0.0
    %1704 = vmatprep.subr.mxu0 0.0
    %1705 = vmatpush1.msra.mxu0 0.0
    %1706 = vmatprep.subr.mxu0 0.0
    %1707 = vmatpush1.msra.mxu0 0.0
    %1708 = vmatprep.subr.mxu0 0.0
    %1709 = vmatpush1.msra.mxu0 0.0
    %1710 = vmatprep.subr.mxu0 0.0
    %1711 = vmatpush1.msra.mxu0 0.0
    %1712 = vmatprep.mubr.f32.mxu0 0.0
    %1713 = vmatmul.mubr.f32.gmra.mrb[0].mxu0 %v1546
    %v1714 = vpop.f32.mrb[0].mxu0
    %v1715 = vadd.f32 0.0, %v1714
    %v1716 = vpop.f32.mrb[0].mxu0
    %1717 = vdwg.mxu0
    %v1718 = vadd.f32 %v1647, %v1715
    %v1719 = vmul.f32 %v1718, %v143
    %v1720 = vtanh.pop %v1719
    %v1721 = vmul.f32 %v1720, %v143
    %v1722 = vadd.f32 %v1721, %v144
    %v1723 = vmul.f32 %v1722, %v1464
    %1725 = vrot.lane.b32.xlu0 %v1722, 64
    %v1726 = vpop.permute.xlu0 %1725
    %v1728 = vmul.f32 %v1722, %v1726
    %1730 = vrot.lane.b32.xlu0 %v1728, 32
    %v1731 = vpop.permute.xlu0 %1730
    %v1733 = vadd.f32 %v1723, %v1731
    %v1734 = vtanh.pop %v1733
    %1736 = vrot.lane.b32.xlu0 %v1734, 64
    %v1737 = vpop.permute.xlu0 %1736
    %v1739 = vmul.f32 %v1722, %v1737
    %v1740 = vsel %vm164, %v1642, 0
    %1742 = vmatprep.subr.mxu0 0.0
    %1743 = vmatpush1.msra.mxu0 %v127
    %1744 = vmatprep.subr.mxu0 0.0
    %1745 = vmatpush1.msra.mxu0 %v128
    %1746 = vmatprep.subr.mxu0 0.0
    %1747 = vmatpush1.msra.mxu0 %v129
    %1748 = vmatprep.subr.mxu0 0.0
    %1749 = vmatpush1.msra.mxu0 %v130
    %1750 = vmatprep.subr.mxu0 0.0
    %1751 = vmatpush1.msra.mxu0 0.0
    %1752 = vmatprep.subr.mxu0 0.0
    %1753 = vmatpush1.msra.mxu0 0.0
    %1754 = vmatprep.subr.mxu0 0.0
    %1755 = vmatpush1.msra.mxu0 0.0
    %1756 = vmatprep.subr.mxu0 0.0
    %1757 = vmatpush1.msra.mxu0 0.0
    %1758 = vmatprep.subr.mxu0 0.0
    %1759 = vmatpush1.msra.mxu0 0.0
    %1760 = vmatprep.subr.mxu0 0.0
    %1761 = vmatpush1.msra.mxu0 0.0
    %1762 = vmatprep.subr.mxu0 0.0
    %1763 = vmatpush1.msra.mxu0 0.0
    %1764 = vmatprep.subr.mxu0 0.0
    %1765 = vmatpush1.msra.mxu0 0.0
    %1766 = vmatprep.subr.mxu0 0.0
    %1767 = vmatpush1.msra.mxu0 0.0
    %1768 = vmatprep.subr.mxu0 0.0
    %1769 = vmatpush1.msra.mxu0 0.0
    %1770 = vmatprep.subr.mxu0 0.0
    %1771 = vmatpush1.msra.mxu0 0.0
    %1772 = vmatprep.subr.mxu0 0.0
    %1773 = vmatpush1.msra.mxu0 0.0
    %1774 = vmatprep.subr.mxu0 0.0
    %1775 = vmatpush1.msra.mxu0 0.0
    %1776 = vmatprep.subr.mxu0 0.0
    %1777 = vmatpush1.msra.mxu0 0.0
    %1778 = vmatprep.subr.mxu0 0.0
    %1779 = vmatpush1.msra.mxu0 0.0
    %1780 = vmatprep.subr.mxu0 0.0
    %1781 = vmatpush1.msra.mxu0 0.0
    %1782 = vmatprep.subr.mxu0 0.0
    %1783 = vmatpush1.msra.mxu0 0.0
    %1784 = vmatprep.subr.mxu0 0.0
    %1785 = vmatpush1.msra.mxu0 0.0
    %1786 = vmatprep.subr.mxu0 0.0
    %1787 = vmatpush1.msra.mxu0 0.0
    %1788 = vmatprep.subr.mxu0 0.0
    %1789 = vmatpush1.msra.mxu0 0.0
    %1790 = vmatprep.subr.mxu0 0.0
    %1791 = vmatpush1.msra.mxu0 0.0
    %1792 = vmatprep.subr.mxu0 0.0
    %1793 = vmatpush1.msra.mxu0 0.0
    %1794 = vmatprep.subr.mxu0 0.0
    %1795 = vmatpush1.msra.mxu0 0.0
    %1796 = vmatprep.subr.mxu0 0.0
    %1797 = vmatpush1.msra.mxu0 0.0
    %1798 = vmatprep.subr.mxu0 0.0
    %1799 = vmatpush1.msra.mxu0 0.0
    %1800 = vmatprep.subr.mxu0 0.0
    %1801 = vmatpush1.msra.mxu0 0.0
    %1802 = vmatprep.subr.mxu0 0.0
    %1803 = vmatpush1.msra.mxu0 0.0
    %1804 = vmatprep.subr.mxu0 0.0
    %1805 = vmatpush1.msra.mxu0 0.0
    %1806 = vmatprep.mubr.f32.mxu0 0.0
    %1807 = vmatmul.mubr.f32.gmra.mrb[0].mxu0 %v1740
    %v1808 = vpop.f32.mrb[0].mxu0
    %v1809 = vadd.f32 0.0, %v1808
    %v1810 = vpop.f32.mrb[0].mxu0
    %1811 = vdwg.mxu0
    %1813 = vrot.lane.b32.xlu0 %v1739, 32
    %v1814 = vpop.permute.xlu0 %1813
    %v1815 = vsel %vm164, %v1814, 0
    %1817 = vmatprep.subr.mxu0 0.0
    %1818 = vmatpush1.msra.mxu0 %v123
    %1819 = vmatprep.subr.mxu0 0.0
    %1820 = vmatpush1.msra.mxu0 %v124
    %1821 = vmatprep.subr.mxu0 0.0
    %1822 = vmatpush1.msra.mxu0 %v125
    %1823 = vmatprep.subr.mxu0 0.0
    %1824 = vmatpush1.msra.mxu0 %v126
    %1825 = vmatprep.subr.mxu0 0.0
    %1826 = vmatpush1.msra.mxu0 0.0
    %1827 = vmatprep.subr.mxu0 0.0
    %1828 = vmatpush1.msra.mxu0 0.0
    %1829 = vmatprep.subr.mxu0 0.0
    %1830 = vmatpush1.msra.mxu0 0.0
    %1831 = vmatprep.subr.mxu0 0.0
    %1832 = vmatpush1.msra.mxu0 0.0
    %1833 = vmatprep.subr.mxu0 0.0
    %1834 = vmatpush1.msra.mxu0 0.0
    %1835 = vmatprep.subr.mxu0 0.0
    %1836 = vmatpush1.msra.mxu0 0.0
    %1837 = vmatprep.subr.mxu0 0.0
    %1838 = vmatpush1.msra.mxu0 0.0
    %1839 = vmatprep.subr.mxu0 0.0
    %1840 = vmatpush1.msra.mxu0 0.0
    %1841 = vmatprep.subr.mxu0 0.0
    %1842 = vmatpush1.msra.mxu0 0.0
    %1843 = vmatprep.subr.mxu0 0.0
    %1844 = vmatpush1.msra.mxu0 0.0
    %1845 = vmatprep.subr.mxu0 0.0
    %1846 = vmatpush1.msra.mxu0 0.0
    %1847 = vmatprep.subr.mxu0 0.0
    %1848 = vmatpush1.msra.mxu0 0.0
    %1849 = vmatprep.subr.mxu0 0.0
    %1850 = vmatpush1.msra.mxu0 0.0
    %1851 = vmatprep.subr.mxu0 0.0
    %1852 = vmatpush1.msra.mxu0 0.0
    %1853 = vmatprep.subr.mxu0 0.0
    %1854 = vmatpush1.msra.mxu0 0.0
    %1855 = vmatprep.subr.mxu0 0.0
    %1856 = vmatpush1.msra.mxu0 0.0
    %1857 = vmatprep.subr.mxu0 0.0
    %1858 = vmatpush1.msra.mxu0 0.0
    %1859 = vmatprep.subr.mxu0 0.0
    %1860 = vmatpush1.msra.mxu0 0.0
    %1861 = vmatprep.subr.mxu0 0.0
    %1862 = vmatpush1.msra.mxu0 0.0
    %1863 = vmatprep.subr.mxu0 0.0
    %1864 = vmatpush1.msra.mxu0 0.0
    %1865 = vmatprep.subr.mxu0 0.0
    %1866 = vmatpush1.msra.mxu0 0.0
    %1867 = vmatprep.subr.mxu0 0.0
    %1868 = vmatpush1.msra.mxu0 0.0
    %1869 = vmatprep.subr.mxu0 0.0
    %1870 = vmatpush1.msra.mxu0 0.0
    %1871 = vmatprep.subr.mxu0 0.0
    %1872 = vmatpush1.msra.mxu0 0.0
    %1873 = vmatprep.subr.mxu0 0.0
    %1874 = vmatpush1.msra.mxu0 0.0
    %1875 = vmatprep.subr.mxu0 0.0
    %1876 = vmatpush1.msra.mxu0 0.0
    %1877 = vmatprep.subr.mxu0 0.0
    %1878 = vmatpush1.msra.mxu0 0.0
    %1879 = vmatprep.subr.mxu0 0.0
    %1880 = vmatpush1.msra.mxu0 0.0
    %1881 = vmatprep.mubr.f32.mxu0 0.0
    %1882 = vmatmul.mubr.f32.gmra.mrb[0].mxu0 %v1815
    %v1883 = vpop.f32.mrb[0].mxu0
    %v1884 = vadd.f32 %v1809, %v1883
    %v1885 = vpop.f32.mrb[0].mxu0
    %1886 = vdwg.mxu0
    %v1887 = vadd.f32 %v1884, %v136
    %v1888 = vmul.f32 %v1887, %v143
    %v1889 = vtanh.pop %v1888
    %v1890 = vmul.f32 %v1889, %v143
    %v1891 = vadd.f32 %v1890, %v144
    %v1892 = vmul.f32 %v1891, %v1633
    %1894 = vrot.lane.b32.xlu0 %v1891, 64
    %v1895 = vpop.permute.xlu0 %1894
    %v1897 = vmul.f32 %v1891, %v1895
    %1899 = vrot.lane.b32.xlu0 %v1897, 32
    %v1900 = vpop.permute.xlu0 %1899
    %v1902 = vadd.f32 %v1892, %v1900
    %v1903 = vtanh.pop %v1902
    %1905 = vrot.lane.b32.xlu0 %v1903, 64
    %v1906 = vpop.permute.xlu0 %1905
    %v1908 = vmul.f32 %v1891, %v1906
    %1910 = vrot.lane.b32.xlu0 %v1908, 32
    %v1911 = vpop.permute.xlu0 %1910
    %s1913 = scalar_lea.vmem [#allocation3], 40
    %1914 = vst.msk [vmem:[%s1913] sm:$0xff] %vm164, %v1911
    %s1915 = scalar_lea.vmem [#allocation2], 48
    %v1916 = vld [vmem:[%s1915] sm:$0xff]
    %1917 = vmatprep.subr.mxu0 0.0
    %1918 = vmatpush1.msra.mxu0 %v119
    %1919 = vmatprep.subr.mxu0 0.0
    %1920 = vmatpush1.msra.mxu0 %v120
    %1921 = vmatprep.subr.mxu0 0.0
    %1922 = vmatpush1.msra.mxu0 %v121
    %1923 = vmatprep.subr.mxu0 0.0
    %1924 = vmatpush1.msra.mxu0 %v122
    %1925 = vmatprep.subr.mxu0 0.0
    %1926 = vmatpush1.msra.mxu0 0.0
    %1927 = vmatprep.subr.mxu0 0.0
    %1928 = vmatpush1.msra.mxu0 0.0
    %1929 = vmatprep.subr.mxu0 0.0
    %1930 = vmatpush1.msra.mxu0 0.0
    %1931 = vmatprep.subr.mxu0 0.0
    %1932 = vmatpush1.msra.mxu0 0.0
    %1933 = vmatprep.subr.mxu0 0.0
    %1934 = vmatpush1.msra.mxu0 0.0
    %1935 = vmatprep.subr.mxu0 0.0
    %1936 = vmatpush1.msra.mxu0 0.0
    %1937 = vmatprep.subr.mxu0 0.0
    %1938 = vmatpush1.msra.mxu0 0.0
    %1939 = vmatprep.subr.mxu0 0.0
    %1940 = vmatpush1.msra.mxu0 0.0
    %1941 = vmatprep.subr.mxu0 0.0
    %1942 = vmatpush1.msra.mxu0 0.0
    %1943 = vmatprep.subr.mxu0 0.0
    %1944 = vmatpush1.msra.mxu0 0.0
    %1945 = vmatprep.subr.mxu0 0.0
    %1946 = vmatpush1.msra.mxu0 0.0
    %1947 = vmatprep.subr.mxu0 0.0
    %1948 = vmatpush1.msra.mxu0 0.0
    %1949 = vmatprep.subr.mxu0 0.0
    %1950 = vmatpush1.msra.mxu0 0.0
    %1951 = vmatprep.subr.mxu0 0.0
    %1952 = vmatpush1.msra.mxu0 0.0
    %1953 = vmatprep.subr.mxu0 0.0
    %1954 = vmatpush1.msra.mxu0 0.0
    %1955 = vmatprep.subr.mxu0 0.0
    %1956 = vmatpush1.msra.mxu0 0.0
    %1957 = vmatprep.subr.mxu0 0.0
    %1958 = vmatpush1.msra.mxu0 0.0
    %1959 = vmatprep.subr.mxu0 0.0
    %1960 = vmatpush1.msra.mxu0 0.0
    %1961 = vmatprep.subr.mxu0 0.0
    %1962 = vmatpush1.msra.mxu0 0.0
    %1963 = vmatprep.subr.mxu0 0.0
    %1964 = vmatpush1.msra.mxu0 0.0
    %1965 = vmatprep.subr.mxu0 0.0
    %1966 = vmatpush1.msra.mxu0 0.0
    %1967 = vmatprep.subr.mxu0 0.0
    %1968 = vmatpush1.msra.mxu0 0.0
    %1969 = vmatprep.subr.mxu0 0.0
    %1970 = vmatpush1.msra.mxu0 0.0
    %1971 = vmatprep.subr.mxu0 0.0
    %1972 = vmatpush1.msra.mxu0 0.0
    %1973 = vmatprep.subr.mxu0 0.0
    %1974 = vmatpush1.msra.mxu0 0.0
    %1975 = vmatprep.subr.mxu0 0.0
    %1976 = vmatpush1.msra.mxu0 0.0
    %1977 = vmatprep.subr.mxu0 0.0
    %1978 = vmatpush1.msra.mxu0 0.0
    %1979 = vmatprep.subr.mxu0 0.0
    %1980 = vmatpush1.msra.mxu0 0.0
    %1981 = vmatprep.mubr.f32.mxu0 0.0
    %1982 = vmatmul.mubr.f32.gmra.mrb[0].mxu0 %v1815
    %v1983 = vpop.f32.mrb[0].mxu0
    %v1984 = vadd.f32 0.0, %v1983
    %v1985 = vpop.f32.mrb[0].mxu0
    %1986 = vdwg.mxu0
    %v1987 = vadd.f32 %v1916, %v1984
    %v1988 = vmul.f32 %v1987, %v143
    %v1989 = vtanh.pop %v1988
    %v1990 = vmul.f32 %v1989, %v143
    %v1991 = vadd.f32 %v1990, %v144
    %v1992 = vmul.f32 %v1991, %v1733
    %1994 = vrot.lane.b32.xlu0 %v1991, 64
    %v1995 = vpop.permute.xlu0 %1994
    %v1997 = vmul.f32 %v1991, %v1995
    %1999 = vrot.lane.b32.xlu0 %v1997, 32
    %v2000 = vpop.permute.xlu0 %1999
    %v2002 = vadd.f32 %v1992, %v2000
    %v2003 = vtanh.pop %v2002
    %2005 = vrot.lane.b32.xlu0 %v2003, 64
    %v2006 = vpop.permute.xlu0 %2005
    %v2008 = vmul.f32 %v1991, %v2006
    %v2009 = vsel %vm164, %v1911, 0
    %2011 = vmatprep.subr.mxu0 0.0
    %2012 = vmatpush1.msra.mxu0 %v127
    %2013 = vmatprep.subr.mxu0 0.0
    %2014 = vmatpush1.msra.mxu0 %v128
    %2015 = vmatprep.subr.mxu0 0.0
    %2016 = vmatpush1.msra.mxu0 %v129
    %2017 = vmatprep.subr.mxu0 0.0
    %2018 = vmatpush1.msra.mxu0 %v130
    %2019 = vmatprep.subr.mxu0 0.0
    %2020 = vmatpush1.msra.mxu0 0.0
    %2021 = vmatprep.subr.mxu0 0.0
    %2022 = vmatpush1.msra.mxu0 0.0
    %2023 = vmatprep.subr.mxu0 0.0
    %2024 = vmatpush1.msra.mxu0 0.0
    %2025 = vmatprep.subr.mxu0 0.0
    %2026 = vmatpush1.msra.mxu0 0.0
    %2027 = vmatprep.subr.mxu0 0.0
    %2028 = vmatpush1.msra.mxu0 0.0
    %2029 = vmatprep.subr.mxu0 0.0
    %2030 = vmatpush1.msra.mxu0 0.0
    %2031 = vmatprep.subr.mxu0 0.0
    %2032 = vmatpush1.msra.mxu0 0.0
    %2033 = vmatprep.subr.mxu0 0.0
    %2034 = vmatpush1.msra.mxu0 0.0
    %2035 = vmatprep.subr.mxu0 0.0
    %2036 = vmatpush1.msra.mxu0 0.0
    %2037 = vmatprep.subr.mxu0 0.0
    %2038 = vmatpush1.msra.mxu0 0.0
    %2039 = vmatprep.subr.mxu0 0.0
    %2040 = vmatpush1.msra.mxu0 0.0
    %2041 = vmatprep.subr.mxu0 0.0
    %2042 = vmatpush1.msra.mxu0 0.0
    %2043 = vmatprep.subr.mxu0 0.0
    %2044 = vmatpush1.msra.mxu0 0.0
    %2045 = vmatprep.subr.mxu0 0.0
    %2046 = vmatpush1.msra.mxu0 0.0
    %2047 = vmatprep.subr.mxu0 0.0
    %2048 = vmatpush1.msra.mxu0 0.0
    %2049 = vmatprep.subr.mxu0 0.0
    %2050 = vmatpush1.msra.mxu0 0.0
    %2051 = vmatprep.subr.mxu0 0.0
    %2052 = vmatpush1.msra.mxu0 0.0
    %2053 = vmatprep.subr.mxu0 0.0
    %2054 = vmatpush1.msra.mxu0 0.0
    %2055 = vmatprep.subr.mxu0 0.0
    %2056 = vmatpush1.msra.mxu0 0.0
    %2057 = vmatprep.subr.mxu0 0.0
    %2058 = vmatpush1.msra.mxu0 0.0
    %2059 = vmatprep.subr.mxu0 0.0
    %2060 = vmatpush1.msra.mxu0 0.0
    %2061 = vmatprep.subr.mxu0 0.0
    %2062 = vmatpush1.msra.mxu0 0.0
    %2063 = vmatprep.subr.mxu0 0.0
    %2064 = vmatpush1.msra.mxu0 0.0
    %2065 = vmatprep.subr.mxu0 0.0
    %2066 = vmatpush1.msra.mxu0 0.0
    %2067 = vmatprep.subr.mxu0 0.0
    %2068 = vmatpush1.msra.mxu0 0.0
    %2069 = vmatprep.subr.mxu0 0.0
    %2070 = vmatpush1.msra.mxu0 0.0
    %2071 = vmatprep.subr.mxu0 0.0
    %2072 = vmatpush1.msra.mxu0 0.0
    %2073 = vmatprep.subr.mxu0 0.0
    %2074 = vmatpush1.msra.mxu0 0.0
    %2075 = vmatprep.mubr.f32.mxu0 0.0
    %2076 = vmatmul.mubr.f32.gmra.mrb[0].mxu0 %v2009
    %v2077 = vpop.f32.mrb[0].mxu0
    %v2078 = vadd.f32 0.0, %v2077
    %v2079 = vpop.f32.mrb[0].mxu0
    %2080 = vdwg.mxu0
    %2082 = vrot.lane.b32.xlu0 %v2008, 32
    %v2083 = vpop.permute.xlu0 %2082
    %v2084 = vsel %vm164, %v2083, 0
    %2086 = vmatprep.subr.mxu0 0.0
    %2087 = vmatpush1.msra.mxu0 %v123
    %2088 = vmatprep.subr.mxu0 0.0
    %2089 = vmatpush1.msra.mxu0 %v124
    %2090 = vmatprep.subr.mxu0 0.0
    %2091 = vmatpush1.msra.mxu0 %v125
    %2092 = vmatprep.subr.mxu0 0.0
    %2093 = vmatpush1.msra.mxu0 %v126
    %2094 = vmatprep.subr.mxu0 0.0
    %2095 = vmatpush1.msra.mxu0 0.0
    %2096 = vmatprep.subr.mxu0 0.0
    %2097 = vmatpush1.msra.mxu0 0.0
    %2098 = vmatprep.subr.mxu0 0.0
    %2099 = vmatpush1.msra.mxu0 0.0
    %2100 = vmatprep.subr.mxu0 0.0
    %2101 = vmatpush1.msra.mxu0 0.0
    %2102 = vmatprep.subr.mxu0 0.0
    %2103 = vmatpush1.msra.mxu0 0.0
    %2104 = vmatprep.subr.mxu0 0.0
    %2105 = vmatpush1.msra.mxu0 0.0
    %2106 = vmatprep.subr.mxu0 0.0
    %2107 = vmatpush1.msra.mxu0 0.0
    %2108 = vmatprep.subr.mxu0 0.0
    %2109 = vmatpush1.msra.mxu0 0.0
    %2110 = vmatprep.subr.mxu0 0.0
    %2111 = vmatpush1.msra.mxu0 0.0
    %2112 = vmatprep.subr.mxu0 0.0
    %2113 = vmatpush1.msra.mxu0 0.0
    %2114 = vmatprep.subr.mxu0 0.0
    %2115 = vmatpush1.msra.mxu0 0.0
    %2116 = vmatprep.subr.mxu0 0.0
    %2117 = vmatpush1.msra.mxu0 0.0
    %2118 = vmatprep.subr.mxu0 0.0
    %2119 = vmatpush1.msra.mxu0 0.0
    %2120 = vmatprep.subr.mxu0 0.0
    %2121 = vmatpush1.msra.mxu0 0.0
    %2122 = vmatprep.subr.mxu0 0.0
    %2123 = vmatpush1.msra.mxu0 0.0
    %2124 = vmatprep.subr.mxu0 0.0
    %2125 = vmatpush1.msra.mxu0 0.0
    %2126 = vmatprep.subr.mxu0 0.0
    %2127 = vmatpush1.msra.mxu0 0.0
    %2128 = vmatprep.subr.mxu0 0.0
    %2129 = vmatpush1.msra.mxu0 0.0
    %2130 = vmatprep.subr.mxu0 0.0
    %2131 = vmatpush1.msra.mxu0 0.0
    %2132 = vmatprep.subr.mxu0 0.0
    %2133 = vmatpush1.msra.mxu0 0.0
    %2134 = vmatprep.subr.mxu0 0.0
    %2135 = vmatpush1.msra.mxu0 0.0
    %2136 = vmatprep.subr.mxu0 0.0
    %2137 = vmatpush1.msra.mxu0 0.0
    %2138 = vmatprep.subr.mxu0 0.0
    %2139 = vmatpush1.msra.mxu0 0.0
    %2140 = vmatprep.subr.mxu0 0.0
    %2141 = vmatpush1.msra.mxu0 0.0
    %2142 = vmatprep.subr.mxu0 0.0
    %2143 = vmatpush1.msra.mxu0 0.0
    %2144 = vmatprep.subr.mxu0 0.0
    %2145 = vmatpush1.msra.mxu0 0.0
    %2146 = vmatprep.subr.mxu0 0.0
    %2147 = vmatpush1.msra.mxu0 0.0
    %2148 = vmatprep.subr.mxu0 0.0
    %2149 = vmatpush1.msra.mxu0 0.0
    %2150 = vmatprep.mubr.f32.mxu0 0.0
    %2151 = vmatmul.mubr.f32.gmra.mrb[0].mxu0 %v2084
    %v2152 = vpop.f32.mrb[0].mxu0
    %v2153 = vadd.f32 %v2078, %v2152
    %v2154 = vpop.f32.mrb[0].mxu0
    %2155 = vdwg.mxu0
    %v2156 = vadd.f32 %v2153, %v136
    %v2157 = vmul.f32 %v2156, %v143
    %v2158 = vtanh.pop %v2157
    %v2159 = vmul.f32 %v2158, %v143
    %v2160 = vadd.f32 %v2159, %v144
    %v2161 = vmul.f32 %v2160, %v1902
    %2163 = vrot.lane.b32.xlu0 %v2160, 64
    %v2164 = vpop.permute.xlu0 %2163
    %v2166 = vmul.f32 %v2160, %v2164
    %2168 = vrot.lane.b32.xlu0 %v2166, 32
    %v2169 = vpop.permute.xlu0 %2168
    %v2171 = vadd.f32 %v2161, %v2169
    %v2172 = vtanh.pop %v2171
    %2174 = vrot.lane.b32.xlu0 %v2172, 64
    %v2175 = vpop.permute.xlu0 %2174
    %v2177 = vmul.f32 %v2160, %v2175
    %2179 = vrot.lane.b32.xlu0 %v2177, 32
    %v2180 = vpop.permute.xlu0 %2179
    %s2182 = scalar_lea.vmem [#allocation3], 48
    %2183 = vst.msk [vmem:[%s2182] sm:$0xff] %vm164, %v2180
    %s2184 = scalar_lea.vmem [#allocation2], 56
    %v2185 = vld [vmem:[%s2184] sm:$0xff]
    %2186 = vmatprep.subr.mxu0 0.0
    %2187 = vmatpush1.msra.mxu0 %v119
    %2188 = vmatprep.subr.mxu0 0.0
    %2189 = vmatpush1.msra.mxu0 %v120
    %2190 = vmatprep.subr.mxu0 0.0
    %2191 = vmatpush1.msra.mxu0 %v121
    %2192 = vmatprep.subr.mxu0 0.0
    %2193 = vmatpush1.msra.mxu0 %v122
    %2194 = vmatprep.subr.mxu0 0.0
    %2195 = vmatpush1.msra.mxu0 0.0
    %2196 = vmatprep.subr.mxu0 0.0
    %2197 = vmatpush1.msra.mxu0 0.0
    %2198 = vmatprep.subr.mxu0 0.0
    %2199 = vmatpush1.msra.mxu0 0.0
    %2200 = vmatprep.subr.mxu0 0.0
    %2201 = vmatpush1.msra.mxu0 0.0
    %2202 = vmatprep.subr.mxu0 0.0
    %2203 = vmatpush1.msra.mxu0 0.0
    %2204 = vmatprep.subr.mxu0 0.0
    %2205 = vmatpush1.msra.mxu0 0.0
    %2206 = vmatprep.subr.mxu0 0.0
    %2207 = vmatpush1.msra.mxu0 0.0
    %2208 = vmatprep.subr.mxu0 0.0
    %2209 = vmatpush1.msra.mxu0 0.0
    %2210 = vmatprep.subr.mxu0 0.0
    %2211 = vmatpush1.msra.mxu0 0.0
    %2212 = vmatprep.subr.mxu0 0.0
    %2213 = vmatpush1.msra.mxu0 0.0
    %2214 = vmatprep.subr.mxu0 0.0
    %2215 = vmatpush1.msra.mxu0 0.0
    %2216 = vmatprep.subr.mxu0 0.0
    %2217 = vmatpush1.msra.mxu0 0.0
    %2218 = vmatprep.subr.mxu0 0.0
    %2219 = vmatpush1.msra.mxu0 0.0
    %2220 = vmatprep.subr.mxu0 0.0
    %2221 = vmatpush1.msra.mxu0 0.0
    %2222 = vmatprep.subr.mxu0 0.0
    %2223 = vmatpush1.msra.mxu0 0.0
    %2224 = vmatprep.subr.mxu0 0.0
    %2225 = vmatpush1.msra.mxu0 0.0
    %2226 = vmatprep.subr.mxu0 0.0
    %2227 = vmatpush1.msra.mxu0 0.0
    %2228 = vmatprep.subr.mxu0 0.0
    %2229 = vmatpush1.msra.mxu0 0.0
    %2230 = vmatprep.subr.mxu0 0.0
    %2231 = vmatpush1.msra.mxu0 0.0
    %2232 = vmatprep.subr.mxu0 0.0
    %2233 = vmatpush1.msra.mxu0 0.0
    %2234 = vmatprep.subr.mxu0 0.0
    %2235 = vmatpush1.msra.mxu0 0.0
    %2236 = vmatprep.subr.mxu0 0.0
    %2237 = vmatpush1.msra.mxu0 0.0
    %2238 = vmatprep.subr.mxu0 0.0
    %2239 = vmatpush1.msra.mxu0 0.0
    %2240 = vmatprep.subr.mxu0 0.0
    %2241 = vmatpush1.msra.mxu0 0.0
    %2242 = vmatprep.subr.mxu0 0.0
    %2243 = vmatpush1.msra.mxu0 0.0
    %2244 = vmatprep.subr.mxu0 0.0
    %2245 = vmatpush1.msra.mxu0 0.0
    %2246 = vmatprep.subr.mxu0 0.0
    %2247 = vmatpush1.msra.mxu0 0.0
    %2248 = vmatprep.subr.mxu0 0.0
    %2249 = vmatpush1.msra.mxu0 0.0
    %2250 = vmatprep.mubr.f32.mxu0 0.0
    %2251 = vmatmul.mubr.f32.gmra.mrb[0].mxu0 %v2084
    %v2252 = vpop.f32.mrb[0].mxu0
    %v2253 = vadd.f32 0.0, %v2252
    %v2254 = vpop.f32.mrb[0].mxu0
    %2255 = vdwg.mxu0
    %v2256 = vadd.f32 %v2185, %v2253
    %v2257 = vmul.f32 %v2256, %v143
    %v2258 = vtanh.pop %v2257
    %v2259 = vmul.f32 %v2258, %v143
    %v2260 = vadd.f32 %v2259, %v144
    %v2261 = vmul.f32 %v2260, %v2002
    %2263 = vrot.lane.b32.xlu0 %v2260, 64
    %v2264 = vpop.permute.xlu0 %2263
    %v2266 = vmul.f32 %v2260, %v2264
    %2268 = vrot.lane.b32.xlu0 %v2266, 32
    %v2269 = vpop.permute.xlu0 %2268
    %v2271 = vadd.f32 %v2261, %v2269
    %v2272 = vtanh.pop %v2271
    %2274 = vrot.lane.b32.xlu0 %v2272, 64
    %v2275 = vpop.permute.xlu0 %2274
    %v2277 = vmul.f32 %v2260, %v2275
    %v2278 = vsel %vm164, %v2180, 0
    %2280 = vmatprep.subr.mxu0 0.0
    %2281 = vmatpush1.msra.mxu0 %v127
    %2282 = vmatprep.subr.mxu0 0.0
    %2283 = vmatpush1.msra.mxu0 %v128
    %2284 = vmatprep.subr.mxu0 0.0
    %2285 = vmatpush1.msra.mxu0 %v129
    %2286 = vmatprep.subr.mxu0 0.0
    %2287 = vmatpush1.msra.mxu0 %v130
    %2288 = vmatprep.subr.mxu0 0.0
    %2289 = vmatpush1.msra.mxu0 0.0
    %2290 = vmatprep.subr.mxu0 0.0
    %2291 = vmatpush1.msra.mxu0 0.0
    %2292 = vmatprep.subr.mxu0 0.0
    %2293 = vmatpush1.msra.mxu0 0.0
    %2294 = vmatprep.subr.mxu0 0.0
    %2295 = vmatpush1.msra.mxu0 0.0
    %2296 = vmatprep.subr.mxu0 0.0
    %2297 = vmatpush1.msra.mxu0 0.0
    %2298 = vmatprep.subr.mxu0 0.0
    %2299 = vmatpush1.msra.mxu0 0.0
    %2300 = vmatprep.subr.mxu0 0.0
    %2301 = vmatpush1.msra.mxu0 0.0
    %2302 = vmatprep.subr.mxu0 0.0
    %2303 = vmatpush1.msra.mxu0 0.0
    %2304 = vmatprep.subr.mxu0 0.0
    %2305 = vmatpush1.msra.mxu0 0.0
    %2306 = vmatprep.subr.mxu0 0.0
    %2307 = vmatpush1.msra.mxu0 0.0
    %2308 = vmatprep.subr.mxu0 0.0
    %2309 = vmatpush1.msra.mxu0 0.0
    %2310 = vmatprep.subr.mxu0 0.0
    %2311 = vmatpush1.msra.mxu0 0.0
    %2312 = vmatprep.subr.mxu0 0.0
    %2313 = vmatpush1.msra.mxu0 0.0
    %2314 = vmatprep.subr.mxu0 0.0
    %2315 = vmatpush1.msra.mxu0 0.0
    %2316 = vmatprep.subr.mxu0 0.0
    %2317 = vmatpush1.msra.mxu0 0.0
    %2318 = vmatprep.subr.mxu0 0.0
    %2319 = vmatpush1.msra.mxu0 0.0
    %2320 = vmatprep.subr.mxu0 0.0
    %2321 = vmatpush1.msra.mxu0 0.0
    %2322 = vmatprep.subr.mxu0 0.0
    %2323 = vmatpush1.msra.mxu0 0.0
    %2324 = vmatprep.subr.mxu0 0.0
    %2325 = vmatpush1.msra.mxu0 0.0
    %2326 = vmatprep.subr.mxu0 0.0
    %2327 = vmatpush1.msra.mxu0 0.0
    %2328 = vmatprep.subr.mxu0 0.0
    %2329 = vmatpush1.msra.mxu0 0.0
    %2330 = vmatprep.subr.mxu0 0.0
    %2331 = vmatpush1.msra.mxu0 0.0
    %2332 = vmatprep.subr.mxu0 0.0
    %2333 = vmatpush1.msra.mxu0 0.0
    %2334 = vmatprep.subr.mxu0 0.0
    %2335 = vmatpush1.msra.mxu0 0.0
    %2336 = vmatprep.subr.mxu0 0.0
    %2337 = vmatpush1.msra.mxu0 0.0
    %2338 = vmatprep.subr.mxu0 0.0
    %2339 = vmatpush1.msra.mxu0 0.0
    %2340 = vmatprep.subr.mxu0 0.0
    %2341 = vmatpush1.msra.mxu0 0.0
    %2342 = vmatprep.subr.mxu0 0.0
    %2343 = vmatpush1.msra.mxu0 0.0
    %2344 = vmatprep.mubr.f32.mxu0 0.0
    %2345 = vmatmul.mubr.f32.gmra.mrb[0].mxu0 %v2278
    %v2346 = vpop.f32.mrb[0].mxu0
    %v2347 = vadd.f32 0.0, %v2346
    %v2348 = vpop.f32.mrb[0].mxu0
    %2349 = vdwg.mxu0
    %2351 = vrot.lane.b32.xlu0 %v2277, 32
    %v2352 = vpop.permute.xlu0 %2351
    %v2353 = vsel %vm164, %v2352, 0
    %2355 = vmatprep.subr.mxu0 0.0
    %2356 = vmatpush1.msra.mxu0 %v123
    %2357 = vmatprep.subr.mxu0 0.0
    %2358 = vmatpush1.msra.mxu0 %v124
    %2359 = vmatprep.subr.mxu0 0.0
    %2360 = vmatpush1.msra.mxu0 %v125
    %2361 = vmatprep.subr.mxu0 0.0
    %2362 = vmatpush1.msra.mxu0 %v126
    %2363 = vmatprep.subr.mxu0 0.0
    %2364 = vmatpush1.msra.mxu0 0.0
    %2365 = vmatprep.subr.mxu0 0.0
    %2366 = vmatpush1.msra.mxu0 0.0
    %2367 = vmatprep.subr.mxu0 0.0
    %2368 = vmatpush1.msra.mxu0 0.0
    %2369 = vmatprep.subr.mxu0 0.0
    %2370 = vmatpush1.msra.mxu0 0.0
    %2371 = vmatprep.subr.mxu0 0.0
    %2372 = vmatpush1.msra.mxu0 0.0
    %2373 = vmatprep.subr.mxu0 0.0
    %2374 = vmatpush1.msra.mxu0 0.0
    %2375 = vmatprep.subr.mxu0 0.0
    %2376 = vmatpush1.msra.mxu0 0.0
    %2377 = vmatprep.subr.mxu0 0.0
    %2378 = vmatpush1.msra.mxu0 0.0
    %2379 = vmatprep.subr.mxu0 0.0
    %2380 = vmatpush1.msra.mxu0 0.0
    %2381 = vmatprep.subr.mxu0 0.0
    %2382 = vmatpush1.msra.mxu0 0.0
    %2383 = vmatprep.subr.mxu0 0.0
    %2384 = vmatpush1.msra.mxu0 0.0
    %2385 = vmatprep.subr.mxu0 0.0
    %2386 = vmatpush1.msra.mxu0 0.0
    %2387 = vmatprep.subr.mxu0 0.0
    %2388 = vmatpush1.msra.mxu0 0.0
    %2389 = vmatprep.subr.mxu0 0.0
    %2390 = vmatpush1.msra.mxu0 0.0
    %2391 = vmatprep.subr.mxu0 0.0
    %2392 = vmatpush1.msra.mxu0 0.0
    %2393 = vmatprep.subr.mxu0 0.0
    %2394 = vmatpush1.msra.mxu0 0.0
    %2395 = vmatprep.subr.mxu0 0.0
    %2396 = vmatpush1.msra.mxu0 0.0
    %2397 = vmatprep.subr.mxu0 0.0
    %2398 = vmatpush1.msra.mxu0 0.0
    %2399 = vmatprep.subr.mxu0 0.0
    %2400 = vmatpush1.msra.mxu0 0.0
    %2401 = vmatprep.subr.mxu0 0.0
    %2402 = vmatpush1.msra.mxu0 0.0
    %2403 = vmatprep.subr.mxu0 0.0
    %2404 = vmatpush1.msra.mxu0 0.0
    %2405 = vmatprep.subr.mxu0 0.0
    %2406 = vmatpush1.msra.mxu0 0.0
    %2407 = vmatprep.subr.mxu0 0.0
    %2408 = vmatpush1.msra.mxu0 0.0
    %2409 = vmatprep.subr.mxu0 0.0
    %2410 = vmatpush1.msra.mxu0 0.0
    %2411 = vmatprep.subr.mxu0 0.0
    %2412 = vmatpush1.msra.mxu0 0.0
    %2413 = vmatprep.subr.mxu0 0.0
    %2414 = vmatpush1.msra.mxu0 0.0
    %2415 = vmatprep.subr.mxu0 0.0
    %2416 = vmatpush1.msra.mxu0 0.0
    %2417 = vmatprep.subr.mxu0 0.0
    %2418 = vmatpush1.msra.mxu0 0.0
    %2419 = vmatprep.mubr.f32.mxu0 0.0
    %2420 = vmatmul.mubr.f32.gmra.mrb[0].mxu0 %v2353
    %v2421 = vpop.f32.mrb[0].mxu0
    %v2422 = vadd.f32 %v2347, %v2421
    %v2423 = vpop.f32.mrb[0].mxu0
    %2424 = vdwg.mxu0
    %v2425 = vadd.f32 %v2422, %v136
    %v2426 = vmul.f32 %v2425, %v143
    %v2427 = vtanh.pop %v2426
    %v2428 = vmul.f32 %v2427, %v143
    %v2429 = vadd.f32 %v2428, %v144
    %v2430 = vmul.f32 %v2429, %v2171
    %2432 = vrot.lane.b32.xlu0 %v2429, 64
    %v2433 = vpop.permute.xlu0 %2432
    %v2435 = vmul.f32 %v2429, %v2433
    %2437 = vrot.lane.b32.xlu0 %v2435, 32
    %v2438 = vpop.permute.xlu0 %2437
    %v2440 = vadd.f32 %v2430, %v2438
    %v2441 = vtanh.pop %v2440
    %2443 = vrot.lane.b32.xlu0 %v2441, 64
    %v2444 = vpop.permute.xlu0 %2443
    %v2446 = vmul.f32 %v2429, %v2444
    %2448 = vrot.lane.b32.xlu0 %v2446, 32
    %v2449 = vpop.permute.xlu0 %2448
    %s2451 = scalar_lea.vmem [#allocation3], 56
    %2452 = vst.msk [vmem:[%s2451] sm:$0xff] %vm164, %v2449
    %2454 = vst.msk [vmem:[#allocation16] sm:$0xff] %vm164, %v2352
    %s2455 = scalar_lea.vmem [#allocation16], 8
    %2456 = vst.msk [vmem:[%s2455] sm:$0xff] %vm164, %v2449
    %2458 = vrot.lane.b32.xlu0 %v2271, 96
    %v2459 = vpop.permute.xlu0 %2458
    %2461 = vst.msk [vmem:[#allocation18] sm:$0xff] %vm164, %v2459
    %2463 = vrot.lane.b32.xlu0 %v2440, 96
    %v2464 = vpop.permute.xlu0 %2463
    %s2466 = scalar_lea.vmem [#allocation18], 8
    %2467 = vst.msk [vmem:[%s2466] sm:$0xff] %vm164, %v2464
    %v2468 = vld [vmem:[#allocation3] sm:$0xff]
    %v2469 = vld [vmem:[#allocation3 + $0x8] sm:$0xff]
    %v2470 = vld [vmem:[#allocation3 + $0x10] sm:$0xff]
    %v2471 = vld [vmem:[#allocation3 + $0x18] sm:$0xff]
    %v2472 = vld [vmem:[#allocation3 + $0x20] sm:$0xff]
    %v2473 = vld [vmem:[#allocation3 + $0x28] sm:$0xff]
    %v2474 = vld [vmem:[#allocation3 + $0x30] sm:$0xff]
    %v2475 = vld [vmem:[#allocation3 + $0x38] sm:$0xff]
    %v2476 = vld [vmem:[#allocation13] sm:$0xff]
    %v2477 = vld [vmem:[#allocation13 + $0x8] sm:$0xff]
    %v2478 = vld [vmem:[#allocation13 + $0x10] sm:$0xff]
    %v2479 = vld [vmem:[#allocation13 + $0x18] sm:$0xff]
    %v2480 = vld [vmem:[%s8] sm:$0x1]
    %v2482 = vlaneseq
    %v2483 = vshrl.u32 %v2482, 7
    %v2484 = vsub.s32 0, %v2483
    %v2485 = vrot.slane %v2480, %v2484
    %v2488 = vsel %vm164, %v2468, 0
    %v2491 = vsel %vm164, %v2469, 0
    %v2494 = vsel %vm164, %v2470, 0
    %v2497 = vsel %vm164, %v2471, 0
    %v2500 = vsel %vm164, %v2472, 0
    %v2503 = vsel %vm164, %v2473, 0
    %v2506 = vsel %vm164, %v2474, 0
    %v2509 = vsel %vm164, %v2475, 0
    %2511 = vmatprep.subr.mxu0 0.0
    %2512 = vmatpush1.msra.mxu0 %v2476
    %2513 = vmatprep.subr.mxu0 0.0
    %2514 = vmatpush1.msra.mxu0 %v2477
    %2515 = vmatprep.subr.mxu0 0.0
    %2516 = vmatpush1.msra.mxu0 %v2478
    %2517 = vmatprep.subr.mxu0 0.0
    %2518 = vmatpush1.msra.mxu0 %v2479
    %2519 = vmatprep.subr.mxu0 0.0
    %2520 = vmatpush1.msra.mxu0 0.0
    %2521 = vmatprep.subr.mxu0 0.0
    %2522 = vmatpush1.msra.mxu0 0.0
    %2523 = vmatprep.subr.mxu0 0.0
    %2524 = vmatpush1.msra.mxu0 0.0
    %2525 = vmatprep.subr.mxu0 0.0
    %2526 = vmatpush1.msra.mxu0 0.0
    %2527 = vmatprep.subr.mxu0 0.0
    %2528 = vmatpush1.msra.mxu0 0.0
    %2529 = vmatprep.subr.mxu0 0.0
    %2530 = vmatpush1.msra.mxu0 0.0
    %2531 = vmatprep.subr.mxu0 0.0
    %2532 = vmatpush1.msra.mxu0 0.0
    %2533 = vmatprep.subr.mxu0 0.0
    %2534 = vmatpush1.msra.mxu0 0.0
    %2535 = vmatprep.subr.mxu0 0.0
    %2536 = vmatpush1.msra.mxu0 0.0
    %2537 = vmatprep.subr.mxu0 0.0
    %2538 = vmatpush1.msra.mxu0 0.0
    %2539 = vmatprep.subr.mxu0 0.0
    %2540 = vmatpush1.msra.mxu0 0.0
    %2541 = vmatprep.subr.mxu0 0.0
    %2542 = vmatpush1.msra.mxu0 0.0
    %2543 = vmatprep.subr.mxu0 0.0
    %2544 = vmatpush1.msra.mxu0 0.0
    %2545 = vmatprep.subr.mxu0 0.0
    %2546 = vmatpush1.msra.mxu0 0.0
    %2547 = vmatprep.subr.mxu0 0.0
    %2548 = vmatpush1.msra.mxu0 0.0
    %2549 = vmatprep.subr.mxu0 0.0
    %2550 = vmatpush1.msra.mxu0 0.0
    %2551 = vmatprep.subr.mxu0 0.0
    %2552 = vmatpush1.msra.mxu0 0.0
    %2553 = vmatprep.subr.mxu0 0.0
    %2554 = vmatpush1.msra.mxu0 0.0
    %2555 = vmatprep.subr.mxu0 0.0
    %2556 = vmatpush1.msra.mxu0 0.0
    %2557 = vmatprep.subr.mxu0 0.0
    %2558 = vmatpush1.msra.mxu0 0.0
    %2559 = vmatprep.subr.mxu0 0.0
    %2560 = vmatpush1.msra.mxu0 0.0
    %2561 = vmatprep.subr.mxu0 0.0
    %2562 = vmatpush1.msra.mxu0 0.0
    %2563 = vmatprep.subr.mxu0 0.0
    %2564 = vmatpush1.msra.mxu0 0.0
    %2565 = vmatprep.subr.mxu0 0.0
    %2566 = vmatpush1.msra.mxu0 0.0
    %2567 = vmatprep.subr.mxu0 0.0
    %2568 = vmatpush1.msra.mxu0 0.0
    %2569 = vmatprep.subr.mxu0 0.0
    %2570 = vmatpush1.msra.mxu0 0.0
    %2571 = vmatprep.subr.mxu0 0.0
    %2572 = vmatpush1.msra.mxu0 0.0
    %2573 = vmatprep.subr.mxu0 0.0
    %2574 = vmatpush1.msra.mxu0 0.0
    %2575 = vmatprep.mubr.f32.mxu0 0.0
    %2576 = vmatmul.mubr.f32.gmra.mrb[0].mxu0 %v2488
    %v2577 = vpop.f32.mrb[0].mxu0
    %v2578 = vadd.f32 %v2485, %v2577
    %v2579 = vpop.f32.mrb[0].mxu0
    %2580 = vmatprep.mubr.f32.mxu0 0.0
    %2581 = vmatmul.mubr.f32.gmra.mrb[0].mxu0 %v2491
    %v2582 = vpop.f32.mrb[0].mxu0
    %v2583 = vadd.f32 %v2485, %v2582
    %v2584 = vpop.f32.mrb[0].mxu0
    %2585 = vmatprep.mubr.f32.mxu0 0.0
    %2586 = vmatmul.mubr.f32.gmra.mrb[0].mxu0 %v2494
    %v2587 = vpop.f32.mrb[0].mxu0
    %v2588 = vadd.f32 %v2485, %v2587
    %v2589 = vpop.f32.mrb[0].mxu0
    %2590 = vmatprep.mubr.f32.mxu0 0.0
    %2591 = vmatmul.mubr.f32.gmra.mrb[0].mxu0 %v2497
    %v2592 = vpop.f32.mrb[0].mxu0
    %v2593 = vadd.f32 %v2485, %v2592
    %v2594 = vpop.f32.mrb[0].mxu0
    %2595 = vmatprep.mubr.f32.mxu0 0.0
    %2596 = vmatmul.mubr.f32.gmra.mrb[0].mxu0 %v2500
    %v2597 = vpop.f32.mrb[0].mxu0
    %v2598 = vadd.f32 %v2485, %v2597
    %v2599 = vpop.f32.mrb[0].mxu0
    %2600 = vmatprep.mubr.f32.mxu0 0.0
    %2601 = vmatmul.mubr.f32.gmra.mrb[0].mxu0 %v2503
    %v2602 = vpop.f32.mrb[0].mxu0
    %v2603 = vadd.f32 %v2485, %v2602
    %v2604 = vpop.f32.mrb[0].mxu0
    %2605 = vmatprep.mubr.f32.mxu0 0.0
    %2606 = vmatmul.mubr.f32.gmra.mrb[0].mxu0 %v2506
    %v2607 = vpop.f32.mrb[0].mxu0
    %v2608 = vadd.f32 %v2485, %v2607
    %v2609 = vpop.f32.mrb[0].mxu0
    %2610 = vmatprep.mubr.f32.mxu0 0.0
    %2611 = vmatmul.mubr.f32.gmra.mrb[0].mxu0 %v2509
    %v2612 = vpop.f32.mrb[0].mxu0
    %v2613 = vadd.f32 %v2485, %v2612
    %v2614 = vpop.f32.mrb[0].mxu0
    %2615 = vdwg.mxu0
    %2616 = vst [vmem:[#allocation15] sm:$0xff] %v2578
    %2617 = vst [vmem:[#allocation15 + $0x8] sm:$0xff] %v2583
    %2618 = vst [vmem:[#allocation15 + $0x10] sm:$0xff] %v2588
    %2619 = vst [vmem:[#allocation15 + $0x18] sm:$0xff] %v2593
    %2620 = vst [vmem:[#allocation15 + $0x20] sm:$0xff] %v2598
    %2621 = vst [vmem:[#allocation15 + $0x28] sm:$0xff] %v2603
    %2622 = vst [vmem:[#allocation15 + $0x30] sm:$0xff] %v2608
    %2623 = vst [vmem:[#allocation15 + $0x38] sm:$0xff] %v2613
    // Predicated region
    $region62: #{tpu_custom_call.1} parent=1 // pred_check
      _
    $region63: #{tpu_custom_call.1} parent=1 // pred_check_branch
      %2625 = sbr.rel (0) target = $region65
    $region64: #{tpu_custom_call.1} parent=1 // pred_region
      %s2627 = ssub.s32 1024, 1024
      %2628 = vsyncadd [#allocation6], %s2627
      %s2629 = sshll.u32 [#allocation15], 4
      %s2630 = int_to_ptr.vmem [resolvable:$true] %s2629
      %2635 = dma.vmem_to_hbm [thread:$0]  %s2630, 1024, %s9, [#allocation6], 128, 128, 8
    $region65: #{tpu_custom_call.1} parent=1 // pred_fallthru
      _
    // Predicated region
    $region66: #{tpu_custom_call.1} parent=1 // pred_check
      _
    $region67: #{tpu_custom_call.1} parent=1 // pred_check_branch
      %2637 = sbr.rel (0) target = $region69
    $region68: #{tpu_custom_call.1} parent=1 // pred_region
      %s2639 = ssub.s32 256, 256
      %2640 = vsyncadd [#allocation17], %s2639
      %s2641 = sshll.u32 [#allocation16], 4
      %s2642 = int_to_ptr.vmem [resolvable:$true] %s2641
      %2647 = dma.vmem_to_hbm [thread:$0]  %s2642, 256, %s10, [#allocation17], 128, 128, 8
    $region69: #{tpu_custom_call.1} parent=1 // pred_fallthru
      _
    // Predicated region
    $region70: #{tpu_custom_call.1} parent=1 // pred_check
      _
    $region71: #{tpu_custom_call.1} parent=1 // pred_check_branch
      %2649 = sbr.rel (0) target = $region73
    $region72: #{tpu_custom_call.1} parent=1 // pred_region
      %s2651 = ssub.s32 256, 256
      %2652 = vsyncadd [#allocation17], %s2651
      %s2653 = sshll.u32 [#allocation18], 4
      %s2654 = int_to_ptr.vmem [resolvable:$true] %s2653
      %2659 = dma.vmem_to_hbm [thread:$0]  %s2654, 256, %s11, [#allocation17], 128, 128, 8
    $region73: #{tpu_custom_call.1} parent=1 // pred_fallthru
      _
    // Predicated region
    $region74: #{tpu_custom_call.1} parent=1 // pred_check
      _
    $region75: #{tpu_custom_call.1} parent=1 // pred_check_branch
      %2661 = sbr.rel (0) target = $region77
    $region76: #{tpu_custom_call.1} parent=1 // pred_region
      %2662 = dma.done [#allocation6], 1024
    $region77: #{tpu_custom_call.1} parent=1 // pred_fallthru
      _
    // Predicated region
    $region78: #{tpu_custom_call.1} parent=1 // pred_check
      _
    $region79: #{tpu_custom_call.1} parent=1 // pred_check_branch
      %2664 = sbr.rel (0) target = $region81
    $region80: #{tpu_custom_call.1} parent=1 // pred_region
      %2665 = dma.done [#allocation17], 256
    $region81: #{tpu_custom_call.1} parent=1 // pred_fallthru
      _
    // Predicated region
    $region82: #{tpu_custom_call.1} parent=1 // pred_check
      _
    $region83: #{tpu_custom_call.1} parent=1 // pred_check_branch
      %2667 = sbr.rel (0) target = $region85
    $region84: #{tpu_custom_call.1} parent=1 // pred_region
      %2668 = dma.done [#allocation17], 256
    $region85: #{tpu_custom_call.1} parent=1 // pred_fallthru
      _
    %2669 = vsyncpa [#allocation5], 1
    %2670 = vsyncpa [#allocation8], 1
    %2671 = vsyncpa [#allocation11], 1
    %2672 = vsyncpa [#allocation14], 1
    %2673 = vsyncpa [#allocation6], 1
    %2674 = vsyncpa [#allocation17], 1

</llo_original>
